<compile_context>
chip_gen: v7x
topology: tpu7x:2x2x1
jax: 0.10.0
libtpu: 0.0.40
codegen_flags: <defaults>
</compile_context>

<pallas_src>
import functools

import jax
import jax.numpy as jnp
import numpy as np
from jax import lax
from jax.experimental import pallas as pl
from jax.experimental.pallas import tpu as pltpu


def _round_up(x, m):
    return (x + m - 1) // m * m


# ----------------------------------------------------------------------------
# Kernel
# ----------------------------------------------------------------------------
def lstm_kernel(
    x_ref,      # (T*Bp, Hp)    time-major, batch/feature zero-padded input
    wih_ref,    # (3, Hp, 4*Hp) stacked input-hidden weights (padded, zeroed)
    whh_ref,    # (3, Hp, 4*Hp) stacked hidden-hidden weights (padded, zeroed)
    b_ref,      # (3, 1, 4*Hp)  combined biases b_ih + b_hh (padded, zeroed)
    wfc_ref,    # (Hp, Op)      final Linear weight (padded rows/cols zeroed)
    bfc_ref,    # (1, Op)
    out_ref,    # (Bp, Op)      lane-dense output block
    *,
    T, Bp,
):
    Hp = whh_ref.shape[1]

    def cell(gates, c):
        # One sigmoid pass over the whole (Bp, 4*Hp) tile; tanh only on g.
        # PyTorch gate order: i, f, g, o (32-lane aligned slices).
        sig = jax.nn.sigmoid(gates)
        i = sig[:, 0 * Hp:1 * Hp]
        f = sig[:, 1 * Hp:2 * Hp]
        o = sig[:, 3 * Hp:4 * Hp]
        g = jnp.tanh(gates[:, 2 * Hp:3 * Hp])
        c = f * c + i * g
        h = o * jnp.tanh(c)
        return h, c

    zeros = jnp.zeros((Bp, Hp), jnp.float32)

    # ---- Layer 1: hoisted, time-batched input projection (bias folded in):
    # a single (T*Bp, Hp) @ (Hp, 4Hp) matmul, depends only on the input.
    gx1 = (
        jnp.dot(x_ref[...], wih_ref[0], preferred_element_type=jnp.float32)
        + b_ref[0]
    )
    whh1 = whh_ref[0]
    h, c = zeros, zeros
    seq = []
    for t in range(T):
        gates = gx1[t * Bp:(t + 1) * Bp, :] + jnp.dot(
            h, whh1, preferred_element_type=jnp.float32)
        h, c = cell(gates, c)
        seq.append(h)
    h_last = h

    # ---- Layers 2 and 3: per-step input projections (no hoist), so the three
    # recurrences form independent dependency chains in one unrolled basic
    # block that the scheduler can interleave.  Everything stays in vregs.
    for layer in (1, 2):
        wih = wih_ref[layer]
        whh = whh_ref[layer]
        bias = jnp.broadcast_to(b_ref[layer], (Bp, 4 * Hp))  # hoisted broadcast
        h, c = zeros, zeros
        nxt = []
        for t in range(T):
            gates = (
                jnp.dot(seq[t], wih, preferred_element_type=jnp.float32)
                + jnp.dot(h, whh, preferred_element_type=jnp.float32)
                + bias
            )
            h, c = cell(gates, c)
            nxt.append(h)
        seq = nxt
        h_last = h

    # Dropout is identity (eval mode); final Linear on last-timestep hidden.
    # Lane-dense (Op = 128) output block -> unmasked vector store.
    out_ref[...] = (
        jnp.dot(h_last, wfc_ref[...], preferred_element_type=jnp.float32)
        + bfc_ref[...]
    )


# ----------------------------------------------------------------------------
# Parameter padding / stacking (padding is exact zeros -> no lane leakage)
# ----------------------------------------------------------------------------
def _pad_gate_cols(w, H, Hp):
    """Pad each of the 4 PyTorch gate blocks (i,f,g,o) from H to Hp columns."""
    parts = []
    for k in range(4):
        blk = w[..., k * H:(k + 1) * H]
        pad = [(0, 0)] * (w.ndim - 1) + [(0, Hp - H)]
        parts.append(jnp.pad(blk, pad))
    return jnp.concatenate(parts, axis=-1)


def pad_and_stack_params(params, D, H, Hp, Op):
    O = params["wfc"].shape[1]
    wih, whh, bs = [], [], []
    for layer, d_in in zip((1, 2, 3), (D, H, H)):
        w = _pad_gate_cols(params[f"wih{layer}"], H, Hp)        # (d_in, 4Hp)
        wih.append(jnp.pad(w, ((0, Hp - d_in), (0, 0))))        # (Hp, 4Hp)
        w = _pad_gate_cols(params[f"whh{layer}"], H, Hp)        # (H, 4Hp)
        whh.append(jnp.pad(w, ((0, Hp - H), (0, 0))))           # (Hp, 4Hp)
        bs.append(_pad_gate_cols(params[f"b{layer}"], H, Hp))   # (1, 4Hp)
    return {
        "wih": jnp.stack(wih),                                  # (3, Hp, 4Hp)
        "whh": jnp.stack(whh),                                  # (3, Hp, 4Hp)
        "b": jnp.stack(bs),                                     # (3, 1, 4Hp)
        "wfc": jnp.pad(params["wfc"], ((0, Hp - H), (0, Op - O))),  # (Hp, Op)
        "bfc": jnp.pad(params["bfc"], ((0, 0), (0, Op - O))),       # (1, Op)
    }


# ----------------------------------------------------------------------------
# Wrapper
# ----------------------------------------------------------------------------
def lstm_forward(x_btd, params):
    """x_btd: (B, T, D) float32, batch_first like the PyTorch module."""
    B, T, D = x_btd.shape
    H = params["whh1"].shape[0]
    O = params["wfc"].shape[1]

    Hp = _round_up(max(H, D), 32)   # lane-aligned hidden dim (4*Hp mult of 128)
    Bp = _round_up(B, 8)            # sublane-aligned batch
    Op = _round_up(O, 128)          # lane-dense output block

    padded = pad_and_stack_params(params, D, H, Hp, Op)

    # time-major, batch/feature zero-padded, flattened to (T*Bp, Hp)
    x = jnp.transpose(x_btd, (1, 0, 2))                     # (T, B, D)
    x = jnp.pad(x, ((0, 0), (0, Bp - B), (0, Hp - D)))      # (T, Bp, Hp)
    x = x.reshape(T * Bp, Hp)

    vmem = functools.partial(pl.BlockSpec, memory_space=pltpu.MemorySpace.VMEM)

    out = pl.pallas_call(
        functools.partial(lstm_kernel, T=T, Bp=Bp),
        out_shape=jax.ShapeDtypeStruct((Bp, Op), jnp.float32),
        in_specs=[vmem()] * 6,
        out_specs=vmem(),
    )(x, padded["wih"], padded["whh"], padded["b"],
      padded["wfc"], padded["bfc"])

    return out[:B, :O]


# ----------------------------------------------------------------------------
# Init + pure-JAX reference (unpadded, PyTorch-equivalent)
# ----------------------------------------------------------------------------
def init_params(key, input_dim, hidden_dim, output_dim):
    """PyTorch-style uniform(-1/sqrt(H), 1/sqrt(H)) init.

    Weights stored pre-transposed: W_ih as (D_in, 4H), W_hh as (H, 4H),
    combined bias b = b_ih + b_hh as (1, 4H). Gate order: i, f, g, o.
    """
    bound = 1.0 / np.sqrt(hidden_dim)
    keys = jax.random.split(key, 14)
    u = lambda k, shape: jax.random.uniform(
        k, shape, jnp.float32, minval=-bound, maxval=bound)

    params = {}
    dims_in = [input_dim, hidden_dim, hidden_dim]
    ki = 0
    for layer, d_in in enumerate(dims_in, start=1):
        params[f"wih{layer}"] = u(keys[ki], (d_in, 4 * hidden_dim)); ki += 1
        params[f"whh{layer}"] = u(keys[ki], (hidden_dim, 4 * hidden_dim)); ki += 1
        b_ih = u(keys[ki], (4 * hidden_dim,)); ki += 1
        b_hh = u(keys[ki], (4 * hidden_dim,)); ki += 1
        params[f"b{layer}"] = (b_ih + b_hh).reshape(1, 4 * hidden_dim)
    params["wfc"] = u(keys[ki], (hidden_dim, output_dim)); ki += 1
    params["bfc"] = u(keys[ki], (output_dim,)).reshape(1, output_dim)
    return params


def lstm_forward_ref(x_btd, params):
    """Pure-JAX reference (lax.scan) with identical semantics, for checking."""
    B, T, D = x_btd.shape
    H = params["whh1"].shape[0]

    def layer(x_seq, wih, whh, b):
        def step(carry, x_t):
            h, c = carry
            gates = x_t @ wih + h @ whh + b
            i = jax.nn.sigmoid(gates[:, 0 * H:1 * H])
            f = jax.nn.sigmoid(gates[:, 1 * H:2 * H])
            g = jnp.tanh(gates[:, 2 * H:3 * H])
            o = jax.nn.sigmoid(gates[:, 3 * H:4 * H])
            c = f * c + i * g
            h = o * jnp.tanh(c)
            return (h, c), h

        init = (jnp.zeros((B, H), jnp.float32), jnp.zeros((B, H), jnp.float32))
        _, hs = lax.scan(step, init, jnp.transpose(x_seq, (1, 0, 2)))
        return jnp.transpose(hs, (1, 0, 2))

    h = layer(x_btd, params["wih1"], params["whh1"], params["b1"])
    h = layer(h, params["wih2"], params["whh2"], params["b2"])
    h = layer(h, params["wih3"], params["whh3"], params["b3"])
    last = h[:, -1, :]  # dropout == identity in eval mode
    return last @ params["wfc"] + params["bfc"]


if __name__ == "__main__":
    B, T, input_dim = 2, 8, 8
    hidden_dim, output_dim = 30, 1

    key = jax.random.PRNGKey(0)
    k_x, k_p = jax.random.split(key)
    x = jax.random.normal(k_x, (B, T, input_dim), jnp.float32)
    params = init_params(k_p, input_dim, hidden_dim, output_dim)

    out = jax.jit(lstm_forward)(x, params)
    out = jax.block_until_ready(out)

    ref = lstm_forward_ref(x, params)
    np.testing.assert_allclose(np.asarray(out), np.asarray(ref),
                               rtol=1e-4, atol=1e-5)
    assert out.shape == (B, output_dim)
    print("KERNEL_OK")
</pallas_src>

<mosaic_0001>
module attributes {stable_mosaic.version = 11 : i64} {
  func.func @lstm_kernel(%arg0: memref<64x32xf32, #tpu.memory_space<vmem>>, %arg1: memref<3x32x128xf32, #tpu.memory_space<vmem>>, %arg2: memref<3x32x128xf32, #tpu.memory_space<vmem>>, %arg3: memref<3x1x128xf32, #tpu.memory_space<vmem>>, %arg4: memref<32x128xf32, #tpu.memory_space<vmem>>, %arg5: memref<1x128xf32, #tpu.memory_space<vmem>>, %arg6: memref<8x128xf32, #tpu.memory_space<vmem>>) attributes {dimension_semantics = [], scalar_prefetch = 0 : i64, scratch_operands = 0 : i64, tpu.core_type = #tpu.core_type<tc>} {
    %cst = arith.constant 0.000000e+00 : f32
    %0 = vector.broadcast %cst : f32 to vector<8x32xf32>
    %c0 = arith.constant 0 : index
    %c0_0 = arith.constant 0 : index
    %1 = vector.load %arg0[%c0, %c0_0] : memref<64x32xf32, #tpu.memory_space<vmem>>, vector<64x32xf32>
    %c0_1 = arith.constant 0 : index
    %c0_2 = arith.constant 0 : index
    %c0_3 = arith.constant 0 : index
    %2 = vector.load %arg1[%c0_1, %c0_2, %c0_3] : memref<3x32x128xf32, #tpu.memory_space<vmem>>, vector<1x32x128xf32>
    %3 = vector.shape_cast %2 : vector<1x32x128xf32> to vector<32x128xf32>
    %cst_4 = arith.constant dense<0.000000e+00> : vector<64x128xf32>
    %4 = tpu.matmul %1, %3, %cst_4 {dimension_numbers = #tpu.dot_dimension_numbers<[1], [0], [0], [1], [0, 0, 1, 1], [], []>} : vector<64x32xf32>, vector<32x128xf32>, vector<64x128xf32> -> vector<64x128xf32>
    %c0_5 = arith.constant 0 : index
    %c0_6 = arith.constant 0 : index
    %c0_7 = arith.constant 0 : index
    %5 = vector.load %arg3[%c0_5, %c0_6, %c0_7] : memref<3x1x128xf32, #tpu.memory_space<vmem>>, vector<1x1x128xf32>
    %6 = vector.shape_cast %5 : vector<1x1x128xf32> to vector<1x128xf32>
    %7 = vector.broadcast %6 : vector<1x128xf32> to vector<64x128xf32>
    %8 = arith.addf %4, %7 : vector<64x128xf32>
    %c0_8 = arith.constant 0 : index
    %c0_9 = arith.constant 0 : index
    %c0_10 = arith.constant 0 : index
    %9 = vector.load %arg2[%c0_8, %c0_9, %c0_10] : memref<3x32x128xf32, #tpu.memory_space<vmem>>, vector<1x32x128xf32>
    %10 = vector.shape_cast %9 : vector<1x32x128xf32> to vector<32x128xf32>
    %11 = vector.extract_strided_slice %8 {offsets = [0, 0], sizes = [8, 128], strides = [1, 1]} : vector<64x128xf32> to vector<8x128xf32>
    %cst_11 = arith.constant dense<0.000000e+00> : vector<8x128xf32>
    %12 = tpu.matmul %0, %10, %cst_11 {dimension_numbers = #tpu.dot_dimension_numbers<[1], [0], [0], [1], [0, 0, 1, 1], [], []>} : vector<8x32xf32>, vector<32x128xf32>, vector<8x128xf32> -> vector<8x128xf32>
    %13 = arith.addf %11, %12 : vector<8x128xf32>
    %14 = arith.negf %13 : vector<8x128xf32>
    %15 = math.exp %14 : vector<8x128xf32>
    %cst_12 = arith.constant 1.000000e+00 : f32
    %16 = vector.broadcast %cst_12 : f32 to vector<8x128xf32>
    %17 = arith.addf %16, %15 : vector<8x128xf32>
    %18 = arith.divf %16, %17 : vector<8x128xf32>
    %19 = vector.extract_strided_slice %18 {offsets = [0, 0], sizes = [8, 32], strides = [1, 1]} : vector<8x128xf32> to vector<8x32xf32>
    %20 = vector.extract_strided_slice %18 {offsets = [0, 32], sizes = [8, 32], strides = [1, 1]} : vector<8x128xf32> to vector<8x32xf32>
    %21 = vector.extract_strided_slice %18 {offsets = [0, 96], sizes = [8, 32], strides = [1, 1]} : vector<8x128xf32> to vector<8x32xf32>
    %22 = vector.extract_strided_slice %13 {offsets = [0, 64], sizes = [8, 32], strides = [1, 1]} : vector<8x128xf32> to vector<8x32xf32>
    %23 = math.tanh %22 : vector<8x32xf32>
    %24 = arith.mulf %20, %0 : vector<8x32xf32>
    %25 = arith.mulf %19, %23 : vector<8x32xf32>
    %26 = arith.addf %24, %25 : vector<8x32xf32>
    %27 = math.tanh %26 : vector<8x32xf32>
    %28 = arith.mulf %21, %27 : vector<8x32xf32>
    %29 = vector.extract_strided_slice %8 {offsets = [8, 0], sizes = [8, 128], strides = [1, 1]} : vector<64x128xf32> to vector<8x128xf32>
    %cst_13 = arith.constant dense<0.000000e+00> : vector<8x128xf32>
    %30 = tpu.matmul %28, %10, %cst_13 {dimension_numbers = #tpu.dot_dimension_numbers<[1], [0], [0], [1], [0, 0, 1, 1], [], []>} : vector<8x32xf32>, vector<32x128xf32>, vector<8x128xf32> -> vector<8x128xf32>
    %31 = arith.addf %29, %30 : vector<8x128xf32>
    %32 = arith.negf %31 : vector<8x128xf32>
    %33 = math.exp %32 : vector<8x128xf32>
    %cst_14 = arith.constant 1.000000e+00 : f32
    %34 = vector.broadcast %cst_14 : f32 to vector<8x128xf32>
    %35 = arith.addf %34, %33 : vector<8x128xf32>
    %36 = arith.divf %34, %35 : vector<8x128xf32>
    %37 = vector.extract_strided_slice %36 {offsets = [0, 0], sizes = [8, 32], strides = [1, 1]} : vector<8x128xf32> to vector<8x32xf32>
    %38 = vector.extract_strided_slice %36 {offsets = [0, 32], sizes = [8, 32], strides = [1, 1]} : vector<8x128xf32> to vector<8x32xf32>
    %39 = vector.extract_strided_slice %36 {offsets = [0, 96], sizes = [8, 32], strides = [1, 1]} : vector<8x128xf32> to vector<8x32xf32>
    %40 = vector.extract_strided_slice %31 {offsets = [0, 64], sizes = [8, 32], strides = [1, 1]} : vector<8x128xf32> to vector<8x32xf32>
    %41 = math.tanh %40 : vector<8x32xf32>
    %42 = arith.mulf %38, %26 : vector<8x32xf32>
    %43 = arith.mulf %37, %41 : vector<8x32xf32>
    %44 = arith.addf %42, %43 : vector<8x32xf32>
    %45 = math.tanh %44 : vector<8x32xf32>
    %46 = arith.mulf %39, %45 : vector<8x32xf32>
    %47 = vector.extract_strided_slice %8 {offsets = [16, 0], sizes = [8, 128], strides = [1, 1]} : vector<64x128xf32> to vector<8x128xf32>
    %cst_15 = arith.constant dense<0.000000e+00> : vector<8x128xf32>
    %48 = tpu.matmul %46, %10, %cst_15 {dimension_numbers = #tpu.dot_dimension_numbers<[1], [0], [0], [1], [0, 0, 1, 1], [], []>} : vector<8x32xf32>, vector<32x128xf32>, vector<8x128xf32> -> vector<8x128xf32>
    %49 = arith.addf %47, %48 : vector<8x128xf32>
    %50 = arith.negf %49 : vector<8x128xf32>
    %51 = math.exp %50 : vector<8x128xf32>
    %cst_16 = arith.constant 1.000000e+00 : f32
    %52 = vector.broadcast %cst_16 : f32 to vector<8x128xf32>
    %53 = arith.addf %52, %51 : vector<8x128xf32>
    %54 = arith.divf %52, %53 : vector<8x128xf32>
    %55 = vector.extract_strided_slice %54 {offsets = [0, 0], sizes = [8, 32], strides = [1, 1]} : vector<8x128xf32> to vector<8x32xf32>
    %56 = vector.extract_strided_slice %54 {offsets = [0, 32], sizes = [8, 32], strides = [1, 1]} : vector<8x128xf32> to vector<8x32xf32>
    %57 = vector.extract_strided_slice %54 {offsets = [0, 96], sizes = [8, 32], strides = [1, 1]} : vector<8x128xf32> to vector<8x32xf32>
    %58 = vector.extract_strided_slice %49 {offsets = [0, 64], sizes = [8, 32], strides = [1, 1]} : vector<8x128xf32> to vector<8x32xf32>
    %59 = math.tanh %58 : vector<8x32xf32>
    %60 = arith.mulf %56, %44 : vector<8x32xf32>
    %61 = arith.mulf %55, %59 : vector<8x32xf32>
    %62 = arith.addf %60, %61 : vector<8x32xf32>
    %63 = math.tanh %62 : vector<8x32xf32>
    %64 = arith.mulf %57, %63 : vector<8x32xf32>
    %65 = vector.extract_strided_slice %8 {offsets = [24, 0], sizes = [8, 128], strides = [1, 1]} : vector<64x128xf32> to vector<8x128xf32>
    %cst_17 = arith.constant dense<0.000000e+00> : vector<8x128xf32>
    %66 = tpu.matmul %64, %10, %cst_17 {dimension_numbers = #tpu.dot_dimension_numbers<[1], [0], [0], [1], [0, 0, 1, 1], [], []>} : vector<8x32xf32>, vector<32x128xf32>, vector<8x128xf32> -> vector<8x128xf32>
    %67 = arith.addf %65, %66 : vector<8x128xf32>
    %68 = arith.negf %67 : vector<8x128xf32>
    %69 = math.exp %68 : vector<8x128xf32>
    %cst_18 = arith.constant 1.000000e+00 : f32
    %70 = vector.broadcast %cst_18 : f32 to vector<8x128xf32>
    %71 = arith.addf %70, %69 : vector<8x128xf32>
    %72 = arith.divf %70, %71 : vector<8x128xf32>
    %73 = vector.extract_strided_slice %72 {offsets = [0, 0], sizes = [8, 32], strides = [1, 1]} : vector<8x128xf32> to vector<8x32xf32>
    %74 = vector.extract_strided_slice %72 {offsets = [0, 32], sizes = [8, 32], strides = [1, 1]} : vector<8x128xf32> to vector<8x32xf32>
    %75 = vector.extract_strided_slice %72 {offsets = [0, 96], sizes = [8, 32], strides = [1, 1]} : vector<8x128xf32> to vector<8x32xf32>
    %76 = vector.extract_strided_slice %67 {offsets = [0, 64], sizes = [8, 32], strides = [1, 1]} : vector<8x128xf32> to vector<8x32xf32>
    %77 = math.tanh %76 : vector<8x32xf32>
    %78 = arith.mulf %74, %62 : vector<8x32xf32>
    %79 = arith.mulf %73, %77 : vector<8x32xf32>
    %80 = arith.addf %78, %79 : vector<8x32xf32>
    %81 = math.tanh %80 : vector<8x32xf32>
    %82 = arith.mulf %75, %81 : vector<8x32xf32>
    %83 = vector.extract_strided_slice %8 {offsets = [32, 0], sizes = [8, 128], strides = [1, 1]} : vector<64x128xf32> to vector<8x128xf32>
    %cst_19 = arith.constant dense<0.000000e+00> : vector<8x128xf32>
    %84 = tpu.matmul %82, %10, %cst_19 {dimension_numbers = #tpu.dot_dimension_numbers<[1], [0], [0], [1], [0, 0, 1, 1], [], []>} : vector<8x32xf32>, vector<32x128xf32>, vector<8x128xf32> -> vector<8x128xf32>
    %85 = arith.addf %83, %84 : vector<8x128xf32>
    %86 = arith.negf %85 : vector<8x128xf32>
    %87 = math.exp %86 : vector<8x128xf32>
    %cst_20 = arith.constant 1.000000e+00 : f32
    %88 = vector.broadcast %cst_20 : f32 to vector<8x128xf32>
    %89 = arith.addf %88, %87 : vector<8x128xf32>
    %90 = arith.divf %88, %89 : vector<8x128xf32>
    %91 = vector.extract_strided_slice %90 {offsets = [0, 0], sizes = [8, 32], strides = [1, 1]} : vector<8x128xf32> to vector<8x32xf32>
    %92 = vector.extract_strided_slice %90 {offsets = [0, 32], sizes = [8, 32], strides = [1, 1]} : vector<8x128xf32> to vector<8x32xf32>
    %93 = vector.extract_strided_slice %90 {offsets = [0, 96], sizes = [8, 32], strides = [1, 1]} : vector<8x128xf32> to vector<8x32xf32>
    %94 = vector.extract_strided_slice %85 {offsets = [0, 64], sizes = [8, 32], strides = [1, 1]} : vector<8x128xf32> to vector<8x32xf32>
    %95 = math.tanh %94 : vector<8x32xf32>
    %96 = arith.mulf %92, %80 : vector<8x32xf32>
    %97 = arith.mulf %91, %95 : vector<8x32xf32>
    %98 = arith.addf %96, %97 : vector<8x32xf32>
    %99 = math.tanh %98 : vector<8x32xf32>
    %100 = arith.mulf %93, %99 : vector<8x32xf32>
    %101 = vector.extract_strided_slice %8 {offsets = [40, 0], sizes = [8, 128], strides = [1, 1]} : vector<64x128xf32> to vector<8x128xf32>
    %cst_21 = arith.constant dense<0.000000e+00> : vector<8x128xf32>
    %102 = tpu.matmul %100, %10, %cst_21 {dimension_numbers = #tpu.dot_dimension_numbers<[1], [0], [0], [1], [0, 0, 1, 1], [], []>} : vector<8x32xf32>, vector<32x128xf32>, vector<8x128xf32> -> vector<8x128xf32>
    %103 = arith.addf %101, %102 : vector<8x128xf32>
    %104 = arith.negf %103 : vector<8x128xf32>
    %105 = math.exp %104 : vector<8x128xf32>
    %cst_22 = arith.constant 1.000000e+00 : f32
    %106 = vector.broadcast %cst_22 : f32 to vector<8x128xf32>
    %107 = arith.addf %106, %105 : vector<8x128xf32>
    %108 = arith.divf %106, %107 : vector<8x128xf32>
    %109 = vector.extract_strided_slice %108 {offsets = [0, 0], sizes = [8, 32], strides = [1, 1]} : vector<8x128xf32> to vector<8x32xf32>
    %110 = vector.extract_strided_slice %108 {offsets = [0, 32], sizes = [8, 32], strides = [1, 1]} : vector<8x128xf32> to vector<8x32xf32>
    %111 = vector.extract_strided_slice %108 {offsets = [0, 96], sizes = [8, 32], strides = [1, 1]} : vector<8x128xf32> to vector<8x32xf32>
    %112 = vector.extract_strided_slice %103 {offsets = [0, 64], sizes = [8, 32], strides = [1, 1]} : vector<8x128xf32> to vector<8x32xf32>
    %113 = math.tanh %112 : vector<8x32xf32>
    %114 = arith.mulf %110, %98 : vector<8x32xf32>
    %115 = arith.mulf %109, %113 : vector<8x32xf32>
    %116 = arith.addf %114, %115 : vector<8x32xf32>
    %117 = math.tanh %116 : vector<8x32xf32>
    %118 = arith.mulf %111, %117 : vector<8x32xf32>
    %119 = vector.extract_strided_slice %8 {offsets = [48, 0], sizes = [8, 128], strides = [1, 1]} : vector<64x128xf32> to vector<8x128xf32>
    %cst_23 = arith.constant dense<0.000000e+00> : vector<8x128xf32>
    %120 = tpu.matmul %118, %10, %cst_23 {dimension_numbers = #tpu.dot_dimension_numbers<[1], [0], [0], [1], [0, 0, 1, 1], [], []>} : vector<8x32xf32>, vector<32x128xf32>, vector<8x128xf32> -> vector<8x128xf32>
    %121 = arith.addf %119, %120 : vector<8x128xf32>
    %122 = arith.negf %121 : vector<8x128xf32>
    %123 = math.exp %122 : vector<8x128xf32>
    %cst_24 = arith.constant 1.000000e+00 : f32
    %124 = vector.broadcast %cst_24 : f32 to vector<8x128xf32>
    %125 = arith.addf %124, %123 : vector<8x128xf32>
    %126 = arith.divf %124, %125 : vector<8x128xf32>
    %127 = vector.extract_strided_slice %126 {offsets = [0, 0], sizes = [8, 32], strides = [1, 1]} : vector<8x128xf32> to vector<8x32xf32>
    %128 = vector.extract_strided_slice %126 {offsets = [0, 32], sizes = [8, 32], strides = [1, 1]} : vector<8x128xf32> to vector<8x32xf32>
    %129 = vector.extract_strided_slice %126 {offsets = [0, 96], sizes = [8, 32], strides = [1, 1]} : vector<8x128xf32> to vector<8x32xf32>
    %130 = vector.extract_strided_slice %121 {offsets = [0, 64], sizes = [8, 32], strides = [1, 1]} : vector<8x128xf32> to vector<8x32xf32>
    %131 = math.tanh %130 : vector<8x32xf32>
    %132 = arith.mulf %128, %116 : vector<8x32xf32>
    %133 = arith.mulf %127, %131 : vector<8x32xf32>
    %134 = arith.addf %132, %133 : vector<8x32xf32>
    %135 = math.tanh %134 : vector<8x32xf32>
    %136 = arith.mulf %129, %135 : vector<8x32xf32>
    %137 = vector.extract_strided_slice %8 {offsets = [56, 0], sizes = [8, 128], strides = [1, 1]} : vector<64x128xf32> to vector<8x128xf32>
    %cst_25 = arith.constant dense<0.000000e+00> : vector<8x128xf32>
    %138 = tpu.matmul %136, %10, %cst_25 {dimension_numbers = #tpu.dot_dimension_numbers<[1], [0], [0], [1], [0, 0, 1, 1], [], []>} : vector<8x32xf32>, vector<32x128xf32>, vector<8x128xf32> -> vector<8x128xf32>
    %139 = arith.addf %137, %138 : vector<8x128xf32>
    %140 = arith.negf %139 : vector<8x128xf32>
    %141 = math.exp %140 : vector<8x128xf32>
    %cst_26 = arith.constant 1.000000e+00 : f32
    %142 = vector.broadcast %cst_26 : f32 to vector<8x128xf32>
    %143 = arith.addf %142, %141 : vector<8x128xf32>
    %144 = arith.divf %142, %143 : vector<8x128xf32>
    %145 = vector.extract_strided_slice %144 {offsets = [0, 0], sizes = [8, 32], strides = [1, 1]} : vector<8x128xf32> to vector<8x32xf32>
    %146 = vector.extract_strided_slice %144 {offsets = [0, 32], sizes = [8, 32], strides = [1, 1]} : vector<8x128xf32> to vector<8x32xf32>
    %147 = vector.extract_strided_slice %144 {offsets = [0, 96], sizes = [8, 32], strides = [1, 1]} : vector<8x128xf32> to vector<8x32xf32>
    %148 = vector.extract_strided_slice %139 {offsets = [0, 64], sizes = [8, 32], strides = [1, 1]} : vector<8x128xf32> to vector<8x32xf32>
    %149 = math.tanh %148 : vector<8x32xf32>
    %150 = arith.mulf %146, %134 : vector<8x32xf32>
    %151 = arith.mulf %145, %149 : vector<8x32xf32>
    %152 = arith.addf %150, %151 : vector<8x32xf32>
    %153 = math.tanh %152 : vector<8x32xf32>
    %154 = arith.mulf %147, %153 : vector<8x32xf32>
    %c1 = arith.constant 1 : index
    %c0_27 = arith.constant 0 : index
    %c0_28 = arith.constant 0 : index
    %155 = vector.load %arg1[%c1, %c0_27, %c0_28] : memref<3x32x128xf32, #tpu.memory_space<vmem>>, vector<1x32x128xf32>
    %156 = vector.shape_cast %155 : vector<1x32x128xf32> to vector<32x128xf32>
    %c1_29 = arith.constant 1 : index
    %c0_30 = arith.constant 0 : index
    %c0_31 = arith.constant 0 : index
    %157 = vector.load %arg2[%c1_29, %c0_30, %c0_31] : memref<3x32x128xf32, #tpu.memory_space<vmem>>, vector<1x32x128xf32>
    %158 = vector.shape_cast %157 : vector<1x32x128xf32> to vector<32x128xf32>
    %c1_32 = arith.constant 1 : index
    %c0_33 = arith.constant 0 : index
    %c0_34 = arith.constant 0 : index
    %159 = vector.load %arg3[%c1_32, %c0_33, %c0_34] : memref<3x1x128xf32, #tpu.memory_space<vmem>>, vector<1x1x128xf32>
    %160 = vector.shape_cast %159 : vector<1x1x128xf32> to vector<1x128xf32>
    %161 = vector.shape_cast %160 : vector<1x128xf32> to vector<1x128xf32>
    %162 = vector.broadcast %161 : vector<1x128xf32> to vector<8x128xf32>
    %cst_35 = arith.constant dense<0.000000e+00> : vector<8x128xf32>
    %163 = tpu.matmul %28, %156, %cst_35 {dimension_numbers = #tpu.dot_dimension_numbers<[1], [0], [0], [1], [0, 0, 1, 1], [], []>} : vector<8x32xf32>, vector<32x128xf32>, vector<8x128xf32> -> vector<8x128xf32>
    %cst_36 = arith.constant dense<0.000000e+00> : vector<8x128xf32>
    %164 = tpu.matmul %0, %158, %cst_36 {dimension_numbers = #tpu.dot_dimension_numbers<[1], [0], [0], [1], [0, 0, 1, 1], [], []>} : vector<8x32xf32>, vector<32x128xf32>, vector<8x128xf32> -> vector<8x128xf32>
    %165 = arith.addf %163, %164 : vector<8x128xf32>
    %166 = arith.addf %165, %162 : vector<8x128xf32>
    %167 = arith.negf %166 : vector<8x128xf32>
    %168 = math.exp %167 : vector<8x128xf32>
    %cst_37 = arith.constant 1.000000e+00 : f32
    %169 = vector.broadcast %cst_37 : f32 to vector<8x128xf32>
    %170 = arith.addf %169, %168 : vector<8x128xf32>
    %171 = arith.divf %169, %170 : vector<8x128xf32>
    %172 = vector.extract_strided_slice %171 {offsets = [0, 0], sizes = [8, 32], strides = [1, 1]} : vector<8x128xf32> to vector<8x32xf32>
    %173 = vector.extract_strided_slice %171 {offsets = [0, 32], sizes = [8, 32], strides = [1, 1]} : vector<8x128xf32> to vector<8x32xf32>
    %174 = vector.extract_strided_slice %171 {offsets = [0, 96], sizes = [8, 32], strides = [1, 1]} : vector<8x128xf32> to vector<8x32xf32>
    %175 = vector.extract_strided_slice %166 {offsets = [0, 64], sizes = [8, 32], strides = [1, 1]} : vector<8x128xf32> to vector<8x32xf32>
    %176 = math.tanh %175 : vector<8x32xf32>
    %177 = arith.mulf %173, %0 : vector<8x32xf32>
    %178 = arith.mulf %172, %176 : vector<8x32xf32>
    %179 = arith.addf %177, %178 : vector<8x32xf32>
    %180 = math.tanh %179 : vector<8x32xf32>
    %181 = arith.mulf %174, %180 : vector<8x32xf32>
    %cst_38 = arith.constant dense<0.000000e+00> : vector<8x128xf32>
    %182 = tpu.matmul %46, %156, %cst_38 {dimension_numbers = #tpu.dot_dimension_numbers<[1], [0], [0], [1], [0, 0, 1, 1], [], []>} : vector<8x32xf32>, vector<32x128xf32>, vector<8x128xf32> -> vector<8x128xf32>
    %cst_39 = arith.constant dense<0.000000e+00> : vector<8x128xf32>
    %183 = tpu.matmul %181, %158, %cst_39 {dimension_numbers = #tpu.dot_dimension_numbers<[1], [0], [0], [1], [0, 0, 1, 1], [], []>} : vector<8x32xf32>, vector<32x128xf32>, vector<8x128xf32> -> vector<8x128xf32>
    %184 = arith.addf %182, %183 : vector<8x128xf32>
    %185 = arith.addf %184, %162 : vector<8x128xf32>
    %186 = arith.negf %185 : vector<8x128xf32>
    %187 = math.exp %186 : vector<8x128xf32>
    %cst_40 = arith.constant 1.000000e+00 : f32
    %188 = vector.broadcast %cst_40 : f32 to vector<8x128xf32>
    %189 = arith.addf %188, %187 : vector<8x128xf32>
    %190 = arith.divf %188, %189 : vector<8x128xf32>
    %191 = vector.extract_strided_slice %190 {offsets = [0, 0], sizes = [8, 32], strides = [1, 1]} : vector<8x128xf32> to vector<8x32xf32>
    %192 = vector.extract_strided_slice %190 {offsets = [0, 32], sizes = [8, 32], strides = [1, 1]} : vector<8x128xf32> to vector<8x32xf32>
    %193 = vector.extract_strided_slice %190 {offsets = [0, 96], sizes = [8, 32], strides = [1, 1]} : vector<8x128xf32> to vector<8x32xf32>
    %194 = vector.extract_strided_slice %185 {offsets = [0, 64], sizes = [8, 32], strides = [1, 1]} : vector<8x128xf32> to vector<8x32xf32>
    %195 = math.tanh %194 : vector<8x32xf32>
    %196 = arith.mulf %192, %179 : vector<8x32xf32>
    %197 = arith.mulf %191, %195 : vector<8x32xf32>
    %198 = arith.addf %196, %197 : vector<8x32xf32>
    %199 = math.tanh %198 : vector<8x32xf32>
    %200 = arith.mulf %193, %199 : vector<8x32xf32>
    %cst_41 = arith.constant dense<0.000000e+00> : vector<8x128xf32>
    %201 = tpu.matmul %64, %156, %cst_41 {dimension_numbers = #tpu.dot_dimension_numbers<[1], [0], [0], [1], [0, 0, 1, 1], [], []>} : vector<8x32xf32>, vector<32x128xf32>, vector<8x128xf32> -> vector<8x128xf32>
    %cst_42 = arith.constant dense<0.000000e+00> : vector<8x128xf32>
    %202 = tpu.matmul %200, %158, %cst_42 {dimension_numbers = #tpu.dot_dimension_numbers<[1], [0], [0], [1], [0, 0, 1, 1], [], []>} : vector<8x32xf32>, vector<32x128xf32>, vector<8x128xf32> -> vector<8x128xf32>
    %203 = arith.addf %201, %202 : vector<8x128xf32>
    %204 = arith.addf %203, %162 : vector<8x128xf32>
    %205 = arith.negf %204 : vector<8x128xf32>
    %206 = math.exp %205 : vector<8x128xf32>
    %cst_43 = arith.constant 1.000000e+00 : f32
    %207 = vector.broadcast %cst_43 : f32 to vector<8x128xf32>
    %208 = arith.addf %207, %206 : vector<8x128xf32>
    %209 = arith.divf %207, %208 : vector<8x128xf32>
    %210 = vector.extract_strided_slice %209 {offsets = [0, 0], sizes = [8, 32], strides = [1, 1]} : vector<8x128xf32> to vector<8x32xf32>
    %211 = vector.extract_strided_slice %209 {offsets = [0, 32], sizes = [8, 32], strides = [1, 1]} : vector<8x128xf32> to vector<8x32xf32>
    %212 = vector.extract_strided_slice %209 {offsets = [0, 96], sizes = [8, 32], strides = [1, 1]} : vector<8x128xf32> to vector<8x32xf32>
    %213 = vector.extract_strided_slice %204 {offsets = [0, 64], sizes = [8, 32], strides = [1, 1]} : vector<8x128xf32> to vector<8x32xf32>
    %214 = math.tanh %213 : vector<8x32xf32>
    %215 = arith.mulf %211, %198 : vector<8x32xf32>
    %216 = arith.mulf %210, %214 : vector<8x32xf32>
    %217 = arith.addf %215, %216 : vector<8x32xf32>
    %218 = math.tanh %217 : vector<8x32xf32>
    %219 = arith.mulf %212, %218 : vector<8x32xf32>
    %cst_44 = arith.constant dense<0.000000e+00> : vector<8x128xf32>
    %220 = tpu.matmul %82, %156, %cst_44 {dimension_numbers = #tpu.dot_dimension_numbers<[1], [0], [0], [1], [0, 0, 1, 1], [], []>} : vector<8x32xf32>, vector<32x128xf32>, vector<8x128xf32> -> vector<8x128xf32>
    %cst_45 = arith.constant dense<0.000000e+00> : vector<8x128xf32>
    %221 = tpu.matmul %219, %158, %cst_45 {dimension_numbers = #tpu.dot_dimension_numbers<[1], [0], [0], [1], [0, 0, 1, 1], [], []>} : vector<8x32xf32>, vector<32x128xf32>, vector<8x128xf32> -> vector<8x128xf32>
    %222 = arith.addf %220, %221 : vector<8x128xf32>
    %223 = arith.addf %222, %162 : vector<8x128xf32>
    %224 = arith.negf %223 : vector<8x128xf32>
    %225 = math.exp %224 : vector<8x128xf32>
    %cst_46 = arith.constant 1.000000e+00 : f32
    %226 = vector.broadcast %cst_46 : f32 to vector<8x128xf32>
    %227 = arith.addf %226, %225 : vector<8x128xf32>
    %228 = arith.divf %226, %227 : vector<8x128xf32>
    %229 = vector.extract_strided_slice %228 {offsets = [0, 0], sizes = [8, 32], strides = [1, 1]} : vector<8x128xf32> to vector<8x32xf32>
    %230 = vector.extract_strided_slice %228 {offsets = [0, 32], sizes = [8, 32], strides = [1, 1]} : vector<8x128xf32> to vector<8x32xf32>
    %231 = vector.extract_strided_slice %228 {offsets = [0, 96], sizes = [8, 32], strides = [1, 1]} : vector<8x128xf32> to vector<8x32xf32>
    %232 = vector.extract_strided_slice %223 {offsets = [0, 64], sizes = [8, 32], strides = [1, 1]} : vector<8x128xf32> to vector<8x32xf32>
    %233 = math.tanh %232 : vector<8x32xf32>
    %234 = arith.mulf %230, %217 : vector<8x32xf32>
    %235 = arith.mulf %229, %233 : vector<8x32xf32>
    %236 = arith.addf %234, %235 : vector<8x32xf32>
    %237 = math.tanh %236 : vector<8x32xf32>
    %238 = arith.mulf %231, %237 : vector<8x32xf32>
    %cst_47 = arith.constant dense<0.000000e+00> : vector<8x128xf32>
    %239 = tpu.matmul %100, %156, %cst_47 {dimension_numbers = #tpu.dot_dimension_numbers<[1], [0], [0], [1], [0, 0, 1, 1], [], []>} : vector<8x32xf32>, vector<32x128xf32>, vector<8x128xf32> -> vector<8x128xf32>
    %cst_48 = arith.constant dense<0.000000e+00> : vector<8x128xf32>
    %240 = tpu.matmul %238, %158, %cst_48 {dimension_numbers = #tpu.dot_dimension_numbers<[1], [0], [0], [1], [0, 0, 1, 1], [], []>} : vector<8x32xf32>, vector<32x128xf32>, vector<8x128xf32> -> vector<8x128xf32>
    %241 = arith.addf %239, %240 : vector<8x128xf32>
    %242 = arith.addf %241, %162 : vector<8x128xf32>
    %243 = arith.negf %242 : vector<8x128xf32>
    %244 = math.exp %243 : vector<8x128xf32>
    %cst_49 = arith.constant 1.000000e+00 : f32
    %245 = vector.broadcast %cst_49 : f32 to vector<8x128xf32>
    %246 = arith.addf %245, %244 : vector<8x128xf32>
    %247 = arith.divf %245, %246 : vector<8x128xf32>
    %248 = vector.extract_strided_slice %247 {offsets = [0, 0], sizes = [8, 32], strides = [1, 1]} : vector<8x128xf32> to vector<8x32xf32>
    %249 = vector.extract_strided_slice %247 {offsets = [0, 32], sizes = [8, 32], strides = [1, 1]} : vector<8x128xf32> to vector<8x32xf32>
    %250 = vector.extract_strided_slice %247 {offsets = [0, 96], sizes = [8, 32], strides = [1, 1]} : vector<8x128xf32> to vector<8x32xf32>
    %251 = vector.extract_strided_slice %242 {offsets = [0, 64], sizes = [8, 32], strides = [1, 1]} : vector<8x128xf32> to vector<8x32xf32>
    %252 = math.tanh %251 : vector<8x32xf32>
    %253 = arith.mulf %249, %236 : vector<8x32xf32>
    %254 = arith.mulf %248, %252 : vector<8x32xf32>
    %255 = arith.addf %253, %254 : vector<8x32xf32>
    %256 = math.tanh %255 : vector<8x32xf32>
    %257 = arith.mulf %250, %256 : vector<8x32xf32>
    %cst_50 = arith.constant dense<0.000000e+00> : vector<8x128xf32>
    %258 = tpu.matmul %118, %156, %cst_50 {dimension_numbers = #tpu.dot_dimension_numbers<[1], [0], [0], [1], [0, 0, 1, 1], [], []>} : vector<8x32xf32>, vector<32x128xf32>, vector<8x128xf32> -> vector<8x128xf32>
    %cst_51 = arith.constant dense<0.000000e+00> : vector<8x128xf32>
    %259 = tpu.matmul %257, %158, %cst_51 {dimension_numbers = #tpu.dot_dimension_numbers<[1], [0], [0], [1], [0, 0, 1, 1], [], []>} : vector<8x32xf32>, vector<32x128xf32>, vector<8x128xf32> -> vector<8x128xf32>
    %260 = arith.addf %258, %259 : vector<8x128xf32>
    %261 = arith.addf %260, %162 : vector<8x128xf32>
    %262 = arith.negf %261 : vector<8x128xf32>
    %263 = math.exp %262 : vector<8x128xf32>
    %cst_52 = arith.constant 1.000000e+00 : f32
    %264 = vector.broadcast %cst_52 : f32 to vector<8x128xf32>
    %265 = arith.addf %264, %263 : vector<8x128xf32>
    %266 = arith.divf %264, %265 : vector<8x128xf32>
    %267 = vector.extract_strided_slice %266 {offsets = [0, 0], sizes = [8, 32], strides = [1, 1]} : vector<8x128xf32> to vector<8x32xf32>
    %268 = vector.extract_strided_slice %266 {offsets = [0, 32], sizes = [8, 32], strides = [1, 1]} : vector<8x128xf32> to vector<8x32xf32>
    %269 = vector.extract_strided_slice %266 {offsets = [0, 96], sizes = [8, 32], strides = [1, 1]} : vector<8x128xf32> to vector<8x32xf32>
    %270 = vector.extract_strided_slice %261 {offsets = [0, 64], sizes = [8, 32], strides = [1, 1]} : vector<8x128xf32> to vector<8x32xf32>
    %271 = math.tanh %270 : vector<8x32xf32>
    %272 = arith.mulf %268, %255 : vector<8x32xf32>
    %273 = arith.mulf %267, %271 : vector<8x32xf32>
    %274 = arith.addf %272, %273 : vector<8x32xf32>
    %275 = math.tanh %274 : vector<8x32xf32>
    %276 = arith.mulf %269, %275 : vector<8x32xf32>
    %cst_53 = arith.constant dense<0.000000e+00> : vector<8x128xf32>
    %277 = tpu.matmul %136, %156, %cst_53 {dimension_numbers = #tpu.dot_dimension_numbers<[1], [0], [0], [1], [0, 0, 1, 1], [], []>} : vector<8x32xf32>, vector<32x128xf32>, vector<8x128xf32> -> vector<8x128xf32>
    %cst_54 = arith.constant dense<0.000000e+00> : vector<8x128xf32>
    %278 = tpu.matmul %276, %158, %cst_54 {dimension_numbers = #tpu.dot_dimension_numbers<[1], [0], [0], [1], [0, 0, 1, 1], [], []>} : vector<8x32xf32>, vector<32x128xf32>, vector<8x128xf32> -> vector<8x128xf32>
    %279 = arith.addf %277, %278 : vector<8x128xf32>
    %280 = arith.addf %279, %162 : vector<8x128xf32>
    %281 = arith.negf %280 : vector<8x128xf32>
    %282 = math.exp %281 : vector<8x128xf32>
    %cst_55 = arith.constant 1.000000e+00 : f32
    %283 = vector.broadcast %cst_55 : f32 to vector<8x128xf32>
    %284 = arith.addf %283, %282 : vector<8x128xf32>
    %285 = arith.divf %283, %284 : vector<8x128xf32>
    %286 = vector.extract_strided_slice %285 {offsets = [0, 0], sizes = [8, 32], strides = [1, 1]} : vector<8x128xf32> to vector<8x32xf32>
    %287 = vector.extract_strided_slice %285 {offsets = [0, 32], sizes = [8, 32], strides = [1, 1]} : vector<8x128xf32> to vector<8x32xf32>
    %288 = vector.extract_strided_slice %285 {offsets = [0, 96], sizes = [8, 32], strides = [1, 1]} : vector<8x128xf32> to vector<8x32xf32>
    %289 = vector.extract_strided_slice %280 {offsets = [0, 64], sizes = [8, 32], strides = [1, 1]} : vector<8x128xf32> to vector<8x32xf32>
    %290 = math.tanh %289 : vector<8x32xf32>
    %291 = arith.mulf %287, %274 : vector<8x32xf32>
    %292 = arith.mulf %286, %290 : vector<8x32xf32>
    %293 = arith.addf %291, %292 : vector<8x32xf32>
    %294 = math.tanh %293 : vector<8x32xf32>
    %295 = arith.mulf %288, %294 : vector<8x32xf32>
    %cst_56 = arith.constant dense<0.000000e+00> : vector<8x128xf32>
    %296 = tpu.matmul %154, %156, %cst_56 {dimension_numbers = #tpu.dot_dimension_numbers<[1], [0], [0], [1], [0, 0, 1, 1], [], []>} : vector<8x32xf32>, vector<32x128xf32>, vector<8x128xf32> -> vector<8x128xf32>
    %cst_57 = arith.constant dense<0.000000e+00> : vector<8x128xf32>
    %297 = tpu.matmul %295, %158, %cst_57 {dimension_numbers = #tpu.dot_dimension_numbers<[1], [0], [0], [1], [0, 0, 1, 1], [], []>} : vector<8x32xf32>, vector<32x128xf32>, vector<8x128xf32> -> vector<8x128xf32>
    %298 = arith.addf %296, %297 : vector<8x128xf32>
    %299 = arith.addf %298, %162 : vector<8x128xf32>
    %300 = arith.negf %299 : vector<8x128xf32>
    %301 = math.exp %300 : vector<8x128xf32>
    %cst_58 = arith.constant 1.000000e+00 : f32
    %302 = vector.broadcast %cst_58 : f32 to vector<8x128xf32>
    %303 = arith.addf %302, %301 : vector<8x128xf32>
    %304 = arith.divf %302, %303 : vector<8x128xf32>
    %305 = vector.extract_strided_slice %304 {offsets = [0, 0], sizes = [8, 32], strides = [1, 1]} : vector<8x128xf32> to vector<8x32xf32>
    %306 = vector.extract_strided_slice %304 {offsets = [0, 32], sizes = [8, 32], strides = [1, 1]} : vector<8x128xf32> to vector<8x32xf32>
    %307 = vector.extract_strided_slice %304 {offsets = [0, 96], sizes = [8, 32], strides = [1, 1]} : vector<8x128xf32> to vector<8x32xf32>
    %308 = vector.extract_strided_slice %299 {offsets = [0, 64], sizes = [8, 32], strides = [1, 1]} : vector<8x128xf32> to vector<8x32xf32>
    %309 = math.tanh %308 : vector<8x32xf32>
    %310 = arith.mulf %306, %293 : vector<8x32xf32>
    %311 = arith.mulf %305, %309 : vector<8x32xf32>
    %312 = arith.addf %310, %311 : vector<8x32xf32>
    %313 = math.tanh %312 : vector<8x32xf32>
    %314 = arith.mulf %307, %313 : vector<8x32xf32>
    %c2 = arith.constant 2 : index
    %c0_59 = arith.constant 0 : index
    %c0_60 = arith.constant 0 : index
    %315 = vector.load %arg1[%c2, %c0_59, %c0_60] : memref<3x32x128xf32, #tpu.memory_space<vmem>>, vector<1x32x128xf32>
    %316 = vector.shape_cast %315 : vector<1x32x128xf32> to vector<32x128xf32>
    %c2_61 = arith.constant 2 : index
    %c0_62 = arith.constant 0 : index
    %c0_63 = arith.constant 0 : index
    %317 = vector.load %arg2[%c2_61, %c0_62, %c0_63] : memref<3x32x128xf32, #tpu.memory_space<vmem>>, vector<1x32x128xf32>
    %318 = vector.shape_cast %317 : vector<1x32x128xf32> to vector<32x128xf32>
    %c2_64 = arith.constant 2 : index
    %c0_65 = arith.constant 0 : index
    %c0_66 = arith.constant 0 : index
    %319 = vector.load %arg3[%c2_64, %c0_65, %c0_66] : memref<3x1x128xf32, #tpu.memory_space<vmem>>, vector<1x1x128xf32>
    %320 = vector.shape_cast %319 : vector<1x1x128xf32> to vector<1x128xf32>
    %321 = vector.shape_cast %320 : vector<1x128xf32> to vector<1x128xf32>
    %322 = vector.broadcast %321 : vector<1x128xf32> to vector<8x128xf32>
    %cst_67 = arith.constant dense<0.000000e+00> : vector<8x128xf32>
    %323 = tpu.matmul %181, %316, %cst_67 {dimension_numbers = #tpu.dot_dimension_numbers<[1], [0], [0], [1], [0, 0, 1, 1], [], []>} : vector<8x32xf32>, vector<32x128xf32>, vector<8x128xf32> -> vector<8x128xf32>
    %cst_68 = arith.constant dense<0.000000e+00> : vector<8x128xf32>
    %324 = tpu.matmul %0, %318, %cst_68 {dimension_numbers = #tpu.dot_dimension_numbers<[1], [0], [0], [1], [0, 0, 1, 1], [], []>} : vector<8x32xf32>, vector<32x128xf32>, vector<8x128xf32> -> vector<8x128xf32>
    %325 = arith.addf %323, %324 : vector<8x128xf32>
    %326 = arith.addf %325, %322 : vector<8x128xf32>
    %327 = arith.negf %326 : vector<8x128xf32>
    %328 = math.exp %327 : vector<8x128xf32>
    %cst_69 = arith.constant 1.000000e+00 : f32
    %329 = vector.broadcast %cst_69 : f32 to vector<8x128xf32>
    %330 = arith.addf %329, %328 : vector<8x128xf32>
    %331 = arith.divf %329, %330 : vector<8x128xf32>
    %332 = vector.extract_strided_slice %331 {offsets = [0, 0], sizes = [8, 32], strides = [1, 1]} : vector<8x128xf32> to vector<8x32xf32>
    %333 = vector.extract_strided_slice %331 {offsets = [0, 32], sizes = [8, 32], strides = [1, 1]} : vector<8x128xf32> to vector<8x32xf32>
    %334 = vector.extract_strided_slice %331 {offsets = [0, 96], sizes = [8, 32], strides = [1, 1]} : vector<8x128xf32> to vector<8x32xf32>
    %335 = vector.extract_strided_slice %326 {offsets = [0, 64], sizes = [8, 32], strides = [1, 1]} : vector<8x128xf32> to vector<8x32xf32>
    %336 = math.tanh %335 : vector<8x32xf32>
    %337 = arith.mulf %333, %0 : vector<8x32xf32>
    %338 = arith.mulf %332, %336 : vector<8x32xf32>
    %339 = arith.addf %337, %338 : vector<8x32xf32>
    %340 = math.tanh %339 : vector<8x32xf32>
    %341 = arith.mulf %334, %340 : vector<8x32xf32>
    %cst_70 = arith.constant dense<0.000000e+00> : vector<8x128xf32>
    %342 = tpu.matmul %200, %316, %cst_70 {dimension_numbers = #tpu.dot_dimension_numbers<[1], [0], [0], [1], [0, 0, 1, 1], [], []>} : vector<8x32xf32>, vector<32x128xf32>, vector<8x128xf32> -> vector<8x128xf32>
    %cst_71 = arith.constant dense<0.000000e+00> : vector<8x128xf32>
    %343 = tpu.matmul %341, %318, %cst_71 {dimension_numbers = #tpu.dot_dimension_numbers<[1], [0], [0], [1], [0, 0, 1, 1], [], []>} : vector<8x32xf32>, vector<32x128xf32>, vector<8x128xf32> -> vector<8x128xf32>
    %344 = arith.addf %342, %343 : vector<8x128xf32>
    %345 = arith.addf %344, %322 : vector<8x128xf32>
    %346 = arith.negf %345 : vector<8x128xf32>
    %347 = math.exp %346 : vector<8x128xf32>
    %cst_72 = arith.constant 1.000000e+00 : f32
    %348 = vector.broadcast %cst_72 : f32 to vector<8x128xf32>
    %349 = arith.addf %348, %347 : vector<8x128xf32>
    %350 = arith.divf %348, %349 : vector<8x128xf32>
    %351 = vector.extract_strided_slice %350 {offsets = [0, 0], sizes = [8, 32], strides = [1, 1]} : vector<8x128xf32> to vector<8x32xf32>
    %352 = vector.extract_strided_slice %350 {offsets = [0, 32], sizes = [8, 32], strides = [1, 1]} : vector<8x128xf32> to vector<8x32xf32>
    %353 = vector.extract_strided_slice %350 {offsets = [0, 96], sizes = [8, 32], strides = [1, 1]} : vector<8x128xf32> to vector<8x32xf32>
    %354 = vector.extract_strided_slice %345 {offsets = [0, 64], sizes = [8, 32], strides = [1, 1]} : vector<8x128xf32> to vector<8x32xf32>
    %355 = math.tanh %354 : vector<8x32xf32>
    %356 = arith.mulf %352, %339 : vector<8x32xf32>
    %357 = arith.mulf %351, %355 : vector<8x32xf32>
    %358 = arith.addf %356, %357 : vector<8x32xf32>
    %359 = math.tanh %358 : vector<8x32xf32>
    %360 = arith.mulf %353, %359 : vector<8x32xf32>
    %cst_73 = arith.constant dense<0.000000e+00> : vector<8x128xf32>
    %361 = tpu.matmul %219, %316, %cst_73 {dimension_numbers = #tpu.dot_dimension_numbers<[1], [0], [0], [1], [0, 0, 1, 1], [], []>} : vector<8x32xf32>, vector<32x128xf32>, vector<8x128xf32> -> vector<8x128xf32>
    %cst_74 = arith.constant dense<0.000000e+00> : vector<8x128xf32>
    %362 = tpu.matmul %360, %318, %cst_74 {dimension_numbers = #tpu.dot_dimension_numbers<[1], [0], [0], [1], [0, 0, 1, 1], [], []>} : vector<8x32xf32>, vector<32x128xf32>, vector<8x128xf32> -> vector<8x128xf32>
    %363 = arith.addf %361, %362 : vector<8x128xf32>
    %364 = arith.addf %363, %322 : vector<8x128xf32>
    %365 = arith.negf %364 : vector<8x128xf32>
    %366 = math.exp %365 : vector<8x128xf32>
    %cst_75 = arith.constant 1.000000e+00 : f32
    %367 = vector.broadcast %cst_75 : f32 to vector<8x128xf32>
    %368 = arith.addf %367, %366 : vector<8x128xf32>
    %369 = arith.divf %367, %368 : vector<8x128xf32>
    %370 = vector.extract_strided_slice %369 {offsets = [0, 0], sizes = [8, 32], strides = [1, 1]} : vector<8x128xf32> to vector<8x32xf32>
    %371 = vector.extract_strided_slice %369 {offsets = [0, 32], sizes = [8, 32], strides = [1, 1]} : vector<8x128xf32> to vector<8x32xf32>
    %372 = vector.extract_strided_slice %369 {offsets = [0, 96], sizes = [8, 32], strides = [1, 1]} : vector<8x128xf32> to vector<8x32xf32>
    %373 = vector.extract_strided_slice %364 {offsets = [0, 64], sizes = [8, 32], strides = [1, 1]} : vector<8x128xf32> to vector<8x32xf32>
    %374 = math.tanh %373 : vector<8x32xf32>
    %375 = arith.mulf %371, %358 : vector<8x32xf32>
    %376 = arith.mulf %370, %374 : vector<8x32xf32>
    %377 = arith.addf %375, %376 : vector<8x32xf32>
    %378 = math.tanh %377 : vector<8x32xf32>
    %379 = arith.mulf %372, %378 : vector<8x32xf32>
    %cst_76 = arith.constant dense<0.000000e+00> : vector<8x128xf32>
    %380 = tpu.matmul %238, %316, %cst_76 {dimension_numbers = #tpu.dot_dimension_numbers<[1], [0], [0], [1], [0, 0, 1, 1], [], []>} : vector<8x32xf32>, vector<32x128xf32>, vector<8x128xf32> -> vector<8x128xf32>
    %cst_77 = arith.constant dense<0.000000e+00> : vector<8x128xf32>
    %381 = tpu.matmul %379, %318, %cst_77 {dimension_numbers = #tpu.dot_dimension_numbers<[1], [0], [0], [1], [0, 0, 1, 1], [], []>} : vector<8x32xf32>, vector<32x128xf32>, vector<8x128xf32> -> vector<8x128xf32>
    %382 = arith.addf %380, %381 : vector<8x128xf32>
    %383 = arith.addf %382, %322 : vector<8x128xf32>
    %384 = arith.negf %383 : vector<8x128xf32>
    %385 = math.exp %384 : vector<8x128xf32>
    %cst_78 = arith.constant 1.000000e+00 : f32
    %386 = vector.broadcast %cst_78 : f32 to vector<8x128xf32>
    %387 = arith.addf %386, %385 : vector<8x128xf32>
    %388 = arith.divf %386, %387 : vector<8x128xf32>
    %389 = vector.extract_strided_slice %388 {offsets = [0, 0], sizes = [8, 32], strides = [1, 1]} : vector<8x128xf32> to vector<8x32xf32>
    %390 = vector.extract_strided_slice %388 {offsets = [0, 32], sizes = [8, 32], strides = [1, 1]} : vector<8x128xf32> to vector<8x32xf32>
    %391 = vector.extract_strided_slice %388 {offsets = [0, 96], sizes = [8, 32], strides = [1, 1]} : vector<8x128xf32> to vector<8x32xf32>
    %392 = vector.extract_strided_slice %383 {offsets = [0, 64], sizes = [8, 32], strides = [1, 1]} : vector<8x128xf32> to vector<8x32xf32>
    %393 = math.tanh %392 : vector<8x32xf32>
    %394 = arith.mulf %390, %377 : vector<8x32xf32>
    %395 = arith.mulf %389, %393 : vector<8x32xf32>
    %396 = arith.addf %394, %395 : vector<8x32xf32>
    %397 = math.tanh %396 : vector<8x32xf32>
    %398 = arith.mulf %391, %397 : vector<8x32xf32>
    %cst_79 = arith.constant dense<0.000000e+00> : vector<8x128xf32>
    %399 = tpu.matmul %257, %316, %cst_79 {dimension_numbers = #tpu.dot_dimension_numbers<[1], [0], [0], [1], [0, 0, 1, 1], [], []>} : vector<8x32xf32>, vector<32x128xf32>, vector<8x128xf32> -> vector<8x128xf32>
    %cst_80 = arith.constant dense<0.000000e+00> : vector<8x128xf32>
    %400 = tpu.matmul %398, %318, %cst_80 {dimension_numbers = #tpu.dot_dimension_numbers<[1], [0], [0], [1], [0, 0, 1, 1], [], []>} : vector<8x32xf32>, vector<32x128xf32>, vector<8x128xf32> -> vector<8x128xf32>
    %401 = arith.addf %399, %400 : vector<8x128xf32>
    %402 = arith.addf %401, %322 : vector<8x128xf32>
    %403 = arith.negf %402 : vector<8x128xf32>
    %404 = math.exp %403 : vector<8x128xf32>
    %cst_81 = arith.constant 1.000000e+00 : f32
    %405 = vector.broadcast %cst_81 : f32 to vector<8x128xf32>
    %406 = arith.addf %405, %404 : vector<8x128xf32>
    %407 = arith.divf %405, %406 : vector<8x128xf32>
    %408 = vector.extract_strided_slice %407 {offsets = [0, 0], sizes = [8, 32], strides = [1, 1]} : vector<8x128xf32> to vector<8x32xf32>
    %409 = vector.extract_strided_slice %407 {offsets = [0, 32], sizes = [8, 32], strides = [1, 1]} : vector<8x128xf32> to vector<8x32xf32>
    %410 = vector.extract_strided_slice %407 {offsets = [0, 96], sizes = [8, 32], strides = [1, 1]} : vector<8x128xf32> to vector<8x32xf32>
    %411 = vector.extract_strided_slice %402 {offsets = [0, 64], sizes = [8, 32], strides = [1, 1]} : vector<8x128xf32> to vector<8x32xf32>
    %412 = math.tanh %411 : vector<8x32xf32>
    %413 = arith.mulf %409, %396 : vector<8x32xf32>
    %414 = arith.mulf %408, %412 : vector<8x32xf32>
    %415 = arith.addf %413, %414 : vector<8x32xf32>
    %416 = math.tanh %415 : vector<8x32xf32>
    %417 = arith.mulf %410, %416 : vector<8x32xf32>
    %cst_82 = arith.constant dense<0.000000e+00> : vector<8x128xf32>
    %418 = tpu.matmul %276, %316, %cst_82 {dimension_numbers = #tpu.dot_dimension_numbers<[1], [0], [0], [1], [0, 0, 1, 1], [], []>} : vector<8x32xf32>, vector<32x128xf32>, vector<8x128xf32> -> vector<8x128xf32>
    %cst_83 = arith.constant dense<0.000000e+00> : vector<8x128xf32>
    %419 = tpu.matmul %417, %318, %cst_83 {dimension_numbers = #tpu.dot_dimension_numbers<[1], [0], [0], [1], [0, 0, 1, 1], [], []>} : vector<8x32xf32>, vector<32x128xf32>, vector<8x128xf32> -> vector<8x128xf32>
    %420 = arith.addf %418, %419 : vector<8x128xf32>
    %421 = arith.addf %420, %322 : vector<8x128xf32>
    %422 = arith.negf %421 : vector<8x128xf32>
    %423 = math.exp %422 : vector<8x128xf32>
    %cst_84 = arith.constant 1.000000e+00 : f32
    %424 = vector.broadcast %cst_84 : f32 to vector<8x128xf32>
    %425 = arith.addf %424, %423 : vector<8x128xf32>
    %426 = arith.divf %424, %425 : vector<8x128xf32>
    %427 = vector.extract_strided_slice %426 {offsets = [0, 0], sizes = [8, 32], strides = [1, 1]} : vector<8x128xf32> to vector<8x32xf32>
    %428 = vector.extract_strided_slice %426 {offsets = [0, 32], sizes = [8, 32], strides = [1, 1]} : vector<8x128xf32> to vector<8x32xf32>
    %429 = vector.extract_strided_slice %426 {offsets = [0, 96], sizes = [8, 32], strides = [1, 1]} : vector<8x128xf32> to vector<8x32xf32>
    %430 = vector.extract_strided_slice %421 {offsets = [0, 64], sizes = [8, 32], strides = [1, 1]} : vector<8x128xf32> to vector<8x32xf32>
    %431 = math.tanh %430 : vector<8x32xf32>
    %432 = arith.mulf %428, %415 : vector<8x32xf32>
    %433 = arith.mulf %427, %431 : vector<8x32xf32>
    %434 = arith.addf %432, %433 : vector<8x32xf32>
    %435 = math.tanh %434 : vector<8x32xf32>
    %436 = arith.mulf %429, %435 : vector<8x32xf32>
    %cst_85 = arith.constant dense<0.000000e+00> : vector<8x128xf32>
    %437 = tpu.matmul %295, %316, %cst_85 {dimension_numbers = #tpu.dot_dimension_numbers<[1], [0], [0], [1], [0, 0, 1, 1], [], []>} : vector<8x32xf32>, vector<32x128xf32>, vector<8x128xf32> -> vector<8x128xf32>
    %cst_86 = arith.constant dense<0.000000e+00> : vector<8x128xf32>
    %438 = tpu.matmul %436, %318, %cst_86 {dimension_numbers = #tpu.dot_dimension_numbers<[1], [0], [0], [1], [0, 0, 1, 1], [], []>} : vector<8x32xf32>, vector<32x128xf32>, vector<8x128xf32> -> vector<8x128xf32>
    %439 = arith.addf %437, %438 : vector<8x128xf32>
    %440 = arith.addf %439, %322 : vector<8x128xf32>
    %441 = arith.negf %440 : vector<8x128xf32>
    %442 = math.exp %441 : vector<8x128xf32>
    %cst_87 = arith.constant 1.000000e+00 : f32
    %443 = vector.broadcast %cst_87 : f32 to vector<8x128xf32>
    %444 = arith.addf %443, %442 : vector<8x128xf32>
    %445 = arith.divf %443, %444 : vector<8x128xf32>
    %446 = vector.extract_strided_slice %445 {offsets = [0, 0], sizes = [8, 32], strides = [1, 1]} : vector<8x128xf32> to vector<8x32xf32>
    %447 = vector.extract_strided_slice %445 {offsets = [0, 32], sizes = [8, 32], strides = [1, 1]} : vector<8x128xf32> to vector<8x32xf32>
    %448 = vector.extract_strided_slice %445 {offsets = [0, 96], sizes = [8, 32], strides = [1, 1]} : vector<8x128xf32> to vector<8x32xf32>
    %449 = vector.extract_strided_slice %440 {offsets = [0, 64], sizes = [8, 32], strides = [1, 1]} : vector<8x128xf32> to vector<8x32xf32>
    %450 = math.tanh %449 : vector<8x32xf32>
    %451 = arith.mulf %447, %434 : vector<8x32xf32>
    %452 = arith.mulf %446, %450 : vector<8x32xf32>
    %453 = arith.addf %451, %452 : vector<8x32xf32>
    %454 = math.tanh %453 : vector<8x32xf32>
    %455 = arith.mulf %448, %454 : vector<8x32xf32>
    %cst_88 = arith.constant dense<0.000000e+00> : vector<8x128xf32>
    %456 = tpu.matmul %314, %316, %cst_88 {dimension_numbers = #tpu.dot_dimension_numbers<[1], [0], [0], [1], [0, 0, 1, 1], [], []>} : vector<8x32xf32>, vector<32x128xf32>, vector<8x128xf32> -> vector<8x128xf32>
    %cst_89 = arith.constant dense<0.000000e+00> : vector<8x128xf32>
    %457 = tpu.matmul %455, %318, %cst_89 {dimension_numbers = #tpu.dot_dimension_numbers<[1], [0], [0], [1], [0, 0, 1, 1], [], []>} : vector<8x32xf32>, vector<32x128xf32>, vector<8x128xf32> -> vector<8x128xf32>
    %458 = arith.addf %456, %457 : vector<8x128xf32>
    %459 = arith.addf %458, %322 : vector<8x128xf32>
    %460 = arith.negf %459 : vector<8x128xf32>
    %461 = math.exp %460 : vector<8x128xf32>
    %cst_90 = arith.constant 1.000000e+00 : f32
    %462 = vector.broadcast %cst_90 : f32 to vector<8x128xf32>
    %463 = arith.addf %462, %461 : vector<8x128xf32>
    %464 = arith.divf %462, %463 : vector<8x128xf32>
    %465 = vector.extract_strided_slice %464 {offsets = [0, 0], sizes = [8, 32], strides = [1, 1]} : vector<8x128xf32> to vector<8x32xf32>
    %466 = vector.extract_strided_slice %464 {offsets = [0, 32], sizes = [8, 32], strides = [1, 1]} : vector<8x128xf32> to vector<8x32xf32>
    %467 = vector.extract_strided_slice %464 {offsets = [0, 96], sizes = [8, 32], strides = [1, 1]} : vector<8x128xf32> to vector<8x32xf32>
    %468 = vector.extract_strided_slice %459 {offsets = [0, 64], sizes = [8, 32], strides = [1, 1]} : vector<8x128xf32> to vector<8x32xf32>
    %469 = math.tanh %468 : vector<8x32xf32>
    %470 = arith.mulf %466, %453 : vector<8x32xf32>
    %471 = arith.mulf %465, %469 : vector<8x32xf32>
    %472 = arith.addf %470, %471 : vector<8x32xf32>
    %473 = math.tanh %472 : vector<8x32xf32>
    %474 = arith.mulf %467, %473 : vector<8x32xf32>
    %c0_91 = arith.constant 0 : index
    %c0_92 = arith.constant 0 : index
    %475 = vector.load %arg4[%c0_91, %c0_92] : memref<32x128xf32, #tpu.memory_space<vmem>>, vector<32x128xf32>
    %cst_93 = arith.constant dense<0.000000e+00> : vector<8x128xf32>
    %476 = tpu.matmul %474, %475, %cst_93 {dimension_numbers = #tpu.dot_dimension_numbers<[1], [0], [0], [1], [0, 0, 1, 1], [], []>} : vector<8x32xf32>, vector<32x128xf32>, vector<8x128xf32> -> vector<8x128xf32>
    %c0_94 = arith.constant 0 : index
    %c0_95 = arith.constant 0 : index
    %477 = vector.load %arg5[%c0_94, %c0_95] : memref<1x128xf32, #tpu.memory_space<vmem>>, vector<1x128xf32>
    %478 = vector.broadcast %477 : vector<1x128xf32> to vector<8x128xf32>
    %479 = arith.addf %476, %478 : vector<8x128xf32>
    %c0_96 = arith.constant 0 : index
    %c0_97 = arith.constant 0 : index
    %480 = vector.load %arg6[%c0_96, %c0_97] : memref<8x128xf32, #tpu.memory_space<vmem>>, vector<8x128xf32>
    tpu.vector_store %arg6[%c0_96, %c0_97], %479 {strides = array<i32>} : memref<8x128xf32, #tpu.memory_space<vmem>>, vector<8x128xf32>,
    return
  }
}

</mosaic_0001>

<llo_original>
// kernel: lstm_forward.1
$region0: #{lstm_forward.1}
  #allocation0 [shape = 'u32[]', space=smem, size = 0x4, offset = 0x4, fixed_abs, tag = 'smem constant byte address 0x4 - core index']
  #allocation1 [shape = 'u32[144,128]{1,0:T(1,128)}', space=vmem, size = 0x12000, scoped, tag = 'internal scratch']
  %s0 = inlined_call_operand.vmem [shape: f32[64,32], index: 0, kind: input, shape index: {}]
  %s1 = inlined_call_operand.vmem [shape: f32[3,32,128], index: 1, kind: input, shape index: {}]
  %s2 = inlined_call_operand.vmem [shape: f32[3,32,128], index: 2, kind: input, shape index: {}]
  %s3 = inlined_call_operand.vmem [shape: f32[3,1,128], index: 3, kind: input, shape index: {}]
  %s4 = inlined_call_operand.vmem [shape: f32[32,128], index: 4, kind: input, shape index: {}]
  %s5 = inlined_call_operand.vmem [shape: f32[1,128], index: 5, kind: input, shape index: {}]
  %s6 = inlined_call_operand.vmem [shape: f32[8,128], index: 6, kind: output, shape index: {}]
  %s7 = sld [smem:[#allocation0]]
  $region34: #{lstm_forward.1} parent=0
    _
  %s9 = ssub.s32 1, %s7
  %s10 = scalar_select 0, %s9, %s7
  // Predicated region
  $region2: #{lstm_forward.1} parent=0 // pred_check
    _
  $region3: #{lstm_forward.1} parent=0 // pred_check_branch
    %12 = sbr.rel (0) target = $region5
  $region4: #{lstm_forward.1} parent=0 // pred_region
    _
  $region5: #{lstm_forward.1} parent=0 // pred_fallthru
    _
  // Predicated region
  $region6: #{lstm_forward.1} parent=0 // pred_check
    _
  $region7: #{lstm_forward.1} parent=0 // pred_check_branch
    %14 = sbr.rel (0) target = $region9
  $region8: #{lstm_forward.1} parent=0 // pred_region
    _
  $region9: #{lstm_forward.1} parent=0 // pred_fallthru
    _
  // Predicated region
  $region10: #{lstm_forward.1} parent=0 // pred_check
    _
  $region11: #{lstm_forward.1} parent=0 // pred_check_branch
    %16 = sbr.rel (0) target = $region13
  $region12: #{lstm_forward.1} parent=0 // pred_region
    _
  $region13: #{lstm_forward.1} parent=0 // pred_fallthru
    _
  // Predicated region
  $region14: #{lstm_forward.1} parent=0 // pred_check
    _
  $region15: #{lstm_forward.1} parent=0 // pred_check_branch
    %18 = sbr.rel (0) target = $region17
  $region16: #{lstm_forward.1} parent=0 // pred_region
    _
  $region17: #{lstm_forward.1} parent=0 // pred_fallthru
    _
  // Predicated region
  $region18: #{lstm_forward.1} parent=0 // pred_check
    _
  $region19: #{lstm_forward.1} parent=0 // pred_check_branch
    %20 = sbr.rel (0) target = $region21
  $region20: #{lstm_forward.1} parent=0 // pred_region
    _
  $region21: #{lstm_forward.1} parent=0 // pred_fallthru
    _
  // Predicated region
  $region22: #{lstm_forward.1} parent=0 // pred_check
    _
  $region23: #{lstm_forward.1} parent=0 // pred_check_branch
    %22 = sbr.rel (0) target = $region25
  $region24: #{lstm_forward.1} parent=0 // pred_region
    _
  $region25: #{lstm_forward.1} parent=0 // pred_fallthru
    _
  %v23 = vld [vmem:[%s0] sm:$0xff]
  %v24 = vld [vmem:[%s0 + $0x8] sm:$0xff]
  %v25 = vld [vmem:[%s0 + $0x10] sm:$0xff]
  %v26 = vld [vmem:[%s0 + $0x18] sm:$0xff]
  %v27 = vld [vmem:[%s0 + $0x20] sm:$0xff]
  %v28 = vld [vmem:[%s0 + $0x28] sm:$0xff]
  %v29 = vld [vmem:[%s0 + $0x30] sm:$0xff]
  %v30 = vld [vmem:[%s0 + $0x38] sm:$0xff]
  %v31 = vld [vmem:[%s1] sm:$0xff]
  %v32 = vld [vmem:[%s1 + $0x8] sm:$0xff]
  %v33 = vld [vmem:[%s1 + $0x10] sm:$0xff]
  %v34 = vld [vmem:[%s1 + $0x18] sm:$0xff]
  %v35 = vld [vmem:[%s3] sm:$0x1]
  %v37 = vlaneseq
  %v38 = vshrl.u32 %v37, 7
  %v39 = vsub.s32 0, %v38
  %v40 = vrot.slane %v35, %v39
  %vm42 = vcmask 261120
  %v44 = vsel %vm42, %v23, 0
  %v47 = vsel %vm42, %v24, 0
  %v50 = vsel %vm42, %v25, 0
  %v53 = vsel %vm42, %v26, 0
  %v56 = vsel %vm42, %v27, 0
  %v59 = vsel %vm42, %v28, 0
  %v62 = vsel %vm42, %v29, 0
  %v65 = vsel %vm42, %v30, 0
  %67 = vmatprep.subr.mxu0 0.0
  %68 = vmatpush1.msra.mxu0 %v31
  %69 = vmatprep.subr.mxu0 0.0
  %70 = vmatpush1.msra.mxu0 %v32
  %71 = vmatprep.subr.mxu0 0.0
  %72 = vmatpush1.msra.mxu0 %v33
  %73 = vmatprep.subr.mxu0 0.0
  %74 = vmatpush1.msra.mxu0 %v34
  %75 = vmatprep.subr.mxu0 0.0
  %76 = vmatpush1.msra.mxu0 0.0
  %77 = vmatprep.subr.mxu0 0.0
  %78 = vmatpush1.msra.mxu0 0.0
  %79 = vmatprep.subr.mxu0 0.0
  %80 = vmatpush1.msra.mxu0 0.0
  %81 = vmatprep.subr.mxu0 0.0
  %82 = vmatpush1.msra.mxu0 0.0
  %83 = vmatprep.subr.mxu0 0.0
  %84 = vmatpush1.msra.mxu0 0.0
  %85 = vmatprep.subr.mxu0 0.0
  %86 = vmatpush1.msra.mxu0 0.0
  %87 = vmatprep.subr.mxu0 0.0
  %88 = vmatpush1.msra.mxu0 0.0
  %89 = vmatprep.subr.mxu0 0.0
  %90 = vmatpush1.msra.mxu0 0.0
  %91 = vmatprep.subr.mxu0 0.0
  %92 = vmatpush1.msra.mxu0 0.0
  %93 = vmatprep.subr.mxu0 0.0
  %94 = vmatpush1.msra.mxu0 0.0
  %95 = vmatprep.subr.mxu0 0.0
  %96 = vmatpush1.msra.mxu0 0.0
  %97 = vmatprep.subr.mxu0 0.0
  %98 = vmatpush1.msra.mxu0 0.0
  %99 = vmatprep.subr.mxu0 0.0
  %100 = vmatpush1.msra.mxu0 0.0
  %101 = vmatprep.subr.mxu0 0.0
  %102 = vmatpush1.msra.mxu0 0.0
  %103 = vmatprep.subr.mxu0 0.0
  %104 = vmatpush1.msra.mxu0 0.0
  %105 = vmatprep.subr.mxu0 0.0
  %106 = vmatpush1.msra.mxu0 0.0
  %107 = vmatprep.subr.mxu0 0.0
  %108 = vmatpush1.msra.mxu0 0.0
  %109 = vmatprep.subr.mxu0 0.0
  %110 = vmatpush1.msra.mxu0 0.0
  %111 = vmatprep.subr.mxu0 0.0
  %112 = vmatpush1.msra.mxu0 0.0
  %113 = vmatprep.subr.mxu0 0.0
  %114 = vmatpush1.msra.mxu0 0.0
  %115 = vmatprep.subr.mxu0 0.0
  %116 = vmatpush1.msra.mxu0 0.0
  %117 = vmatprep.subr.mxu0 0.0
  %118 = vmatpush1.msra.mxu0 0.0
  %119 = vmatprep.subr.mxu0 0.0
  %120 = vmatpush1.msra.mxu0 0.0
  %121 = vmatprep.subr.mxu0 0.0
  %122 = vmatpush1.msra.mxu0 0.0
  %123 = vmatprep.subr.mxu0 0.0
  %124 = vmatpush1.msra.mxu0 0.0
  %125 = vmatprep.subr.mxu0 0.0
  %126 = vmatpush1.msra.mxu0 0.0
  %127 = vmatprep.subr.mxu0 0.0
  %128 = vmatpush1.msra.mxu0 0.0
  %129 = vmatprep.subr.mxu0 0.0
  %130 = vmatpush1.msra.mxu0 0.0
  %131 = vmatprep.mubr.f32.mxu0 0.0
  %132 = vmatmul.mubr.f32.gmra.mrb[0].mxu0 %v44
  %v133 = vpop.f32.mrb[0].mxu0
  %v134 = vadd.f32 %v40, %v133
  %v135 = vpop.f32.mrb[0].mxu0
  %136 = vmatprep.mubr.f32.mxu0 0.0
  %137 = vmatmul.mubr.f32.gmra.mrb[0].mxu0 %v47
  %v138 = vpop.f32.mrb[0].mxu0
  %v139 = vadd.f32 %v40, %v138
  %v140 = vpop.f32.mrb[0].mxu0
  %141 = vmatprep.mubr.f32.mxu0 0.0
  %142 = vmatmul.mubr.f32.gmra.mrb[0].mxu0 %v50
  %v143 = vpop.f32.mrb[0].mxu0
  %v144 = vadd.f32 %v40, %v143
  %v145 = vpop.f32.mrb[0].mxu0
  %146 = vmatprep.mubr.f32.mxu0 0.0
  %147 = vmatmul.mubr.f32.gmra.mrb[0].mxu0 %v53
  %v148 = vpop.f32.mrb[0].mxu0
  %v149 = vadd.f32 %v40, %v148
  %v150 = vpop.f32.mrb[0].mxu0
  %151 = vmatprep.mubr.f32.mxu0 0.0
  %152 = vmatmul.mubr.f32.gmra.mrb[0].mxu0 %v56
  %v153 = vpop.f32.mrb[0].mxu0
  %v154 = vadd.f32 %v40, %v153
  %v155 = vpop.f32.mrb[0].mxu0
  %156 = vmatprep.mubr.f32.mxu0 0.0
  %157 = vmatmul.mubr.f32.gmra.mrb[0].mxu0 %v59
  %v158 = vpop.f32.mrb[0].mxu0
  %v159 = vadd.f32 %v40, %v158
  %v160 = vpop.f32.mrb[0].mxu0
  %161 = vmatprep.mubr.f32.mxu0 0.0
  %162 = vmatmul.mubr.f32.gmra.mrb[0].mxu0 %v62
  %v163 = vpop.f32.mrb[0].mxu0
  %v164 = vadd.f32 %v40, %v163
  %v165 = vpop.f32.mrb[0].mxu0
  %166 = vmatprep.mubr.f32.mxu0 0.0
  %167 = vmatmul.mubr.f32.gmra.mrb[0].mxu0 %v65
  %v168 = vpop.f32.mrb[0].mxu0
  %v169 = vadd.f32 %v40, %v168
  %v170 = vpop.f32.mrb[0].mxu0
  %171 = vdwg.mxu0
  %v172 = vld [vmem:[%s2] sm:$0xff]
  %v173 = vld [vmem:[%s2 + $0x8] sm:$0xff]
  %v174 = vld [vmem:[%s2 + $0x10] sm:$0xff]
  %v175 = vld [vmem:[%s2 + $0x18] sm:$0xff]
  %v177 = vsel %vm42, 0.0, 0
  %179 = vmatprep.subr.mxu0 0.0
  %180 = vmatpush1.msra.mxu0 %v172
  %181 = vmatprep.subr.mxu0 0.0
  %182 = vmatpush1.msra.mxu0 %v173
  %183 = vmatprep.subr.mxu0 0.0
  %184 = vmatpush1.msra.mxu0 %v174
  %185 = vmatprep.subr.mxu0 0.0
  %186 = vmatpush1.msra.mxu0 %v175
  %187 = vmatprep.subr.mxu0 0.0
  %188 = vmatpush1.msra.mxu0 0.0
  %189 = vmatprep.subr.mxu0 0.0
  %190 = vmatpush1.msra.mxu0 0.0
  %191 = vmatprep.subr.mxu0 0.0
  %192 = vmatpush1.msra.mxu0 0.0
  %193 = vmatprep.subr.mxu0 0.0
  %194 = vmatpush1.msra.mxu0 0.0
  %195 = vmatprep.subr.mxu0 0.0
  %196 = vmatpush1.msra.mxu0 0.0
  %197 = vmatprep.subr.mxu0 0.0
  %198 = vmatpush1.msra.mxu0 0.0
  %199 = vmatprep.subr.mxu0 0.0
  %200 = vmatpush1.msra.mxu0 0.0
  %201 = vmatprep.subr.mxu0 0.0
  %202 = vmatpush1.msra.mxu0 0.0
  %203 = vmatprep.subr.mxu0 0.0
  %204 = vmatpush1.msra.mxu0 0.0
  %205 = vmatprep.subr.mxu0 0.0
  %206 = vmatpush1.msra.mxu0 0.0
  %207 = vmatprep.subr.mxu0 0.0
  %208 = vmatpush1.msra.mxu0 0.0
  %209 = vmatprep.subr.mxu0 0.0
  %210 = vmatpush1.msra.mxu0 0.0
  %211 = vmatprep.subr.mxu0 0.0
  %212 = vmatpush1.msra.mxu0 0.0
  %213 = vmatprep.subr.mxu0 0.0
  %214 = vmatpush1.msra.mxu0 0.0
  %215 = vmatprep.subr.mxu0 0.0
  %216 = vmatpush1.msra.mxu0 0.0
  %217 = vmatprep.subr.mxu0 0.0
  %218 = vmatpush1.msra.mxu0 0.0
  %219 = vmatprep.subr.mxu0 0.0
  %220 = vmatpush1.msra.mxu0 0.0
  %221 = vmatprep.subr.mxu0 0.0
  %222 = vmatpush1.msra.mxu0 0.0
  %223 = vmatprep.subr.mxu0 0.0
  %224 = vmatpush1.msra.mxu0 0.0
  %225 = vmatprep.subr.mxu0 0.0
  %226 = vmatpush1.msra.mxu0 0.0
  %227 = vmatprep.subr.mxu0 0.0
  %228 = vmatpush1.msra.mxu0 0.0
  %229 = vmatprep.subr.mxu0 0.0
  %230 = vmatpush1.msra.mxu0 0.0
  %231 = vmatprep.subr.mxu0 0.0
  %232 = vmatpush1.msra.mxu0 0.0
  %233 = vmatprep.subr.mxu0 0.0
  %234 = vmatpush1.msra.mxu0 0.0
  %235 = vmatprep.subr.mxu0 0.0
  %236 = vmatpush1.msra.mxu0 0.0
  %237 = vmatprep.subr.mxu0 0.0
  %238 = vmatpush1.msra.mxu0 0.0
  %239 = vmatprep.subr.mxu0 0.0
  %240 = vmatpush1.msra.mxu0 0.0
  %241 = vmatprep.subr.mxu0 0.0
  %242 = vmatpush1.msra.mxu0 0.0
  %243 = vmatprep.mubr.f32.mxu0 0.0
  %244 = vmatmul.mubr.f32.gmra.mrb[0].mxu0 %v177
  %v245 = vpop.f32.mrb[0].mxu0
  %v246 = vadd.f32 0.0, %v245
  %v247 = vpop.f32.mrb[0].mxu0
  %248 = vdwg.mxu0
  %v249 = vadd.f32 %v134, %v246
  %v250 = vxor.u32 %v249, 2147483648
  %v251 = vmul.f32 %v250, 1.442695
  %v252 = vpow.pop %v251
  %v253 = vadd.f32 %v252, 1.0
  %v254 = vrcp.pop %v253
  %v255 = vmul.f32 1.0, %v254
  %v256 = vtanh.pop %v249
  %v257 = vmul.f32 %v255, 0.0
  %259 = vrot.lane.b32.xlu0 %v256, 64
  %v260 = vpop.permute.xlu0 %259
  %v262 = vmul.f32 %v255, %v260
  %264 = vrot.lane.b32.xlu0 %v262, 32
  %v265 = vpop.permute.xlu0 %264
  %v267 = vadd.f32 %v257, %v265
  %v268 = vtanh.pop %v267
  %270 = vrot.lane.b32.xlu0 %v268, 64
  %v271 = vpop.permute.xlu0 %270
  %v273 = vmul.f32 %v255, %v271
  %275 = vrot.lane.b32.xlu0 %v273, 32
  %v276 = vpop.permute.xlu0 %275
  %v277 = vsel %vm42, %v276, 0
  %279 = vmatprep.subr.mxu0 0.0
  %280 = vmatpush1.msra.mxu0 %v172
  %281 = vmatprep.subr.mxu0 0.0
  %282 = vmatpush1.msra.mxu0 %v173
  %283 = vmatprep.subr.mxu0 0.0
  %284 = vmatpush1.msra.mxu0 %v174
  %285 = vmatprep.subr.mxu0 0.0
  %286 = vmatpush1.msra.mxu0 %v175
  %287 = vmatprep.subr.mxu0 0.0
  %288 = vmatpush1.msra.mxu0 0.0
  %289 = vmatprep.subr.mxu0 0.0
  %290 = vmatpush1.msra.mxu0 0.0
  %291 = vmatprep.subr.mxu0 0.0
  %292 = vmatpush1.msra.mxu0 0.0
  %293 = vmatprep.subr.mxu0 0.0
  %294 = vmatpush1.msra.mxu0 0.0
  %295 = vmatprep.subr.mxu0 0.0
  %296 = vmatpush1.msra.mxu0 0.0
  %297 = vmatprep.subr.mxu0 0.0
  %298 = vmatpush1.msra.mxu0 0.0
  %299 = vmatprep.subr.mxu0 0.0
  %300 = vmatpush1.msra.mxu0 0.0
  %301 = vmatprep.subr.mxu0 0.0
  %302 = vmatpush1.msra.mxu0 0.0
  %303 = vmatprep.subr.mxu0 0.0
  %304 = vmatpush1.msra.mxu0 0.0
  %305 = vmatprep.subr.mxu0 0.0
  %306 = vmatpush1.msra.mxu0 0.0
  %307 = vmatprep.subr.mxu0 0.0
  %308 = vmatpush1.msra.mxu0 0.0
  %309 = vmatprep.subr.mxu0 0.0
  %310 = vmatpush1.msra.mxu0 0.0
  %311 = vmatprep.subr.mxu0 0.0
  %312 = vmatpush1.msra.mxu0 0.0
  %313 = vmatprep.subr.mxu0 0.0
  %314 = vmatpush1.msra.mxu0 0.0
  %315 = vmatprep.subr.mxu0 0.0
  %316 = vmatpush1.msra.mxu0 0.0
  %317 = vmatprep.subr.mxu0 0.0
  %318 = vmatpush1.msra.mxu0 0.0
  %319 = vmatprep.subr.mxu0 0.0
  %320 = vmatpush1.msra.mxu0 0.0
  %321 = vmatprep.subr.mxu0 0.0
  %322 = vmatpush1.msra.mxu0 0.0
  %323 = vmatprep.subr.mxu0 0.0
  %324 = vmatpush1.msra.mxu0 0.0
  %325 = vmatprep.subr.mxu0 0.0
  %326 = vmatpush1.msra.mxu0 0.0
  %327 = vmatprep.subr.mxu0 0.0
  %328 = vmatpush1.msra.mxu0 0.0
  %329 = vmatprep.subr.mxu0 0.0
  %330 = vmatpush1.msra.mxu0 0.0
  %331 = vmatprep.subr.mxu0 0.0
  %332 = vmatpush1.msra.mxu0 0.0
  %333 = vmatprep.subr.mxu0 0.0
  %334 = vmatpush1.msra.mxu0 0.0
  %335 = vmatprep.subr.mxu0 0.0
  %336 = vmatpush1.msra.mxu0 0.0
  %337 = vmatprep.subr.mxu0 0.0
  %338 = vmatpush1.msra.mxu0 0.0
  %339 = vmatprep.subr.mxu0 0.0
  %340 = vmatpush1.msra.mxu0 0.0
  %341 = vmatprep.subr.mxu0 0.0
  %342 = vmatpush1.msra.mxu0 0.0
  %343 = vmatprep.mubr.f32.mxu0 0.0
  %344 = vmatmul.mubr.f32.gmra.mrb[0].mxu0 %v277
  %v345 = vpop.f32.mrb[0].mxu0
  %v346 = vadd.f32 0.0, %v345
  %v347 = vpop.f32.mrb[0].mxu0
  %348 = vdwg.mxu0
  %v349 = vadd.f32 %v139, %v346
  %v350 = vxor.u32 %v349, 2147483648
  %v351 = vmul.f32 %v350, 1.442695
  %v352 = vpow.pop %v351
  %v353 = vadd.f32 %v352, 1.0
  %v354 = vrcp.pop %v353
  %v355 = vmul.f32 1.0, %v354
  %v356 = vtanh.pop %v349
  %v357 = vmul.f32 %v355, %v267
  %359 = vrot.lane.b32.xlu0 %v356, 64
  %v360 = vpop.permute.xlu0 %359
  %v362 = vmul.f32 %v355, %v360
  %364 = vrot.lane.b32.xlu0 %v362, 32
  %v365 = vpop.permute.xlu0 %364
  %v367 = vadd.f32 %v357, %v365
  %v368 = vtanh.pop %v367
  %370 = vrot.lane.b32.xlu0 %v368, 64
  %v371 = vpop.permute.xlu0 %370
  %v373 = vmul.f32 %v355, %v371
  %375 = vrot.lane.b32.xlu0 %v373, 32
  %v376 = vpop.permute.xlu0 %375
  %v377 = vsel %vm42, %v376, 0
  %379 = vmatprep.subr.mxu0 0.0
  %380 = vmatpush1.msra.mxu0 %v172
  %381 = vmatprep.subr.mxu0 0.0
  %382 = vmatpush1.msra.mxu0 %v173
  %383 = vmatprep.subr.mxu0 0.0
  %384 = vmatpush1.msra.mxu0 %v174
  %385 = vmatprep.subr.mxu0 0.0
  %386 = vmatpush1.msra.mxu0 %v175
  %387 = vmatprep.subr.mxu0 0.0
  %388 = vmatpush1.msra.mxu0 0.0
  %389 = vmatprep.subr.mxu0 0.0
  %390 = vmatpush1.msra.mxu0 0.0
  %391 = vmatprep.subr.mxu0 0.0
  %392 = vmatpush1.msra.mxu0 0.0
  %393 = vmatprep.subr.mxu0 0.0
  %394 = vmatpush1.msra.mxu0 0.0
  %395 = vmatprep.subr.mxu0 0.0
  %396 = vmatpush1.msra.mxu0 0.0
  %397 = vmatprep.subr.mxu0 0.0
  %398 = vmatpush1.msra.mxu0 0.0
  %399 = vmatprep.subr.mxu0 0.0
  %400 = vmatpush1.msra.mxu0 0.0
  %401 = vmatprep.subr.mxu0 0.0
  %402 = vmatpush1.msra.mxu0 0.0
  %403 = vmatprep.subr.mxu0 0.0
  %404 = vmatpush1.msra.mxu0 0.0
  %405 = vmatprep.subr.mxu0 0.0
  %406 = vmatpush1.msra.mxu0 0.0
  %407 = vmatprep.subr.mxu0 0.0
  %408 = vmatpush1.msra.mxu0 0.0
  %409 = vmatprep.subr.mxu0 0.0
  %410 = vmatpush1.msra.mxu0 0.0
  %411 = vmatprep.subr.mxu0 0.0
  %412 = vmatpush1.msra.mxu0 0.0
  %413 = vmatprep.subr.mxu0 0.0
  %414 = vmatpush1.msra.mxu0 0.0
  %415 = vmatprep.subr.mxu0 0.0
  %416 = vmatpush1.msra.mxu0 0.0
  %417 = vmatprep.subr.mxu0 0.0
  %418 = vmatpush1.msra.mxu0 0.0
  %419 = vmatprep.subr.mxu0 0.0
  %420 = vmatpush1.msra.mxu0 0.0
  %421 = vmatprep.subr.mxu0 0.0
  %422 = vmatpush1.msra.mxu0 0.0
  %423 = vmatprep.subr.mxu0 0.0
  %424 = vmatpush1.msra.mxu0 0.0
  %425 = vmatprep.subr.mxu0 0.0
  %426 = vmatpush1.msra.mxu0 0.0
  %427 = vmatprep.subr.mxu0 0.0
  %428 = vmatpush1.msra.mxu0 0.0
  %429 = vmatprep.subr.mxu0 0.0
  %430 = vmatpush1.msra.mxu0 0.0
  %431 = vmatprep.subr.mxu0 0.0
  %432 = vmatpush1.msra.mxu0 0.0
  %433 = vmatprep.subr.mxu0 0.0
  %434 = vmatpush1.msra.mxu0 0.0
  %435 = vmatprep.subr.mxu0 0.0
  %436 = vmatpush1.msra.mxu0 0.0
  %437 = vmatprep.subr.mxu0 0.0
  %438 = vmatpush1.msra.mxu0 0.0
  %439 = vmatprep.subr.mxu0 0.0
  %440 = vmatpush1.msra.mxu0 0.0
  %441 = vmatprep.subr.mxu0 0.0
  %442 = vmatpush1.msra.mxu0 0.0
  %443 = vmatprep.mubr.f32.mxu0 0.0
  %444 = vmatmul.mubr.f32.gmra.mrb[0].mxu0 %v377
  %v445 = vpop.f32.mrb[0].mxu0
  %v446 = vadd.f32 0.0, %v445
  %v447 = vpop.f32.mrb[0].mxu0
  %448 = vdwg.mxu0
  %v449 = vadd.f32 %v144, %v446
  %v450 = vxor.u32 %v449, 2147483648
  %v451 = vmul.f32 %v450, 1.442695
  %v452 = vpow.pop %v451
  %v453 = vadd.f32 %v452, 1.0
  %v454 = vrcp.pop %v453
  %v455 = vmul.f32 1.0, %v454
  %v456 = vtanh.pop %v449
  %v457 = vmul.f32 %v455, %v367
  %459 = vrot.lane.b32.xlu0 %v456, 64
  %v460 = vpop.permute.xlu0 %459
  %v462 = vmul.f32 %v455, %v460
  %464 = vrot.lane.b32.xlu0 %v462, 32
  %v465 = vpop.permute.xlu0 %464
  %v467 = vadd.f32 %v457, %v465
  %v468 = vtanh.pop %v467
  %470 = vrot.lane.b32.xlu0 %v468, 64
  %v471 = vpop.permute.xlu0 %470
  %v473 = vmul.f32 %v455, %v471
  %475 = vrot.lane.b32.xlu0 %v473, 32
  %v476 = vpop.permute.xlu0 %475
  %v477 = vsel %vm42, %v476, 0
  %479 = vmatprep.subr.mxu0 0.0
  %480 = vmatpush1.msra.mxu0 %v172
  %481 = vmatprep.subr.mxu0 0.0
  %482 = vmatpush1.msra.mxu0 %v173
  %483 = vmatprep.subr.mxu0 0.0
  %484 = vmatpush1.msra.mxu0 %v174
  %485 = vmatprep.subr.mxu0 0.0
  %486 = vmatpush1.msra.mxu0 %v175
  %487 = vmatprep.subr.mxu0 0.0
  %488 = vmatpush1.msra.mxu0 0.0
  %489 = vmatprep.subr.mxu0 0.0
  %490 = vmatpush1.msra.mxu0 0.0
  %491 = vmatprep.subr.mxu0 0.0
  %492 = vmatpush1.msra.mxu0 0.0
  %493 = vmatprep.subr.mxu0 0.0
  %494 = vmatpush1.msra.mxu0 0.0
  %495 = vmatprep.subr.mxu0 0.0
  %496 = vmatpush1.msra.mxu0 0.0
  %497 = vmatprep.subr.mxu0 0.0
  %498 = vmatpush1.msra.mxu0 0.0
  %499 = vmatprep.subr.mxu0 0.0
  %500 = vmatpush1.msra.mxu0 0.0
  %501 = vmatprep.subr.mxu0 0.0
  %502 = vmatpush1.msra.mxu0 0.0
  %503 = vmatprep.subr.mxu0 0.0
  %504 = vmatpush1.msra.mxu0 0.0
  %505 = vmatprep.subr.mxu0 0.0
  %506 = vmatpush1.msra.mxu0 0.0
  %507 = vmatprep.subr.mxu0 0.0
  %508 = vmatpush1.msra.mxu0 0.0
  %509 = vmatprep.subr.mxu0 0.0
  %510 = vmatpush1.msra.mxu0 0.0
  %511 = vmatprep.subr.mxu0 0.0
  %512 = vmatpush1.msra.mxu0 0.0
  %513 = vmatprep.subr.mxu0 0.0
  %514 = vmatpush1.msra.mxu0 0.0
  %515 = vmatprep.subr.mxu0 0.0
  %516 = vmatpush1.msra.mxu0 0.0
  %517 = vmatprep.subr.mxu0 0.0
  %518 = vmatpush1.msra.mxu0 0.0
  %519 = vmatprep.subr.mxu0 0.0
  %520 = vmatpush1.msra.mxu0 0.0
  %521 = vmatprep.subr.mxu0 0.0
  %522 = vmatpush1.msra.mxu0 0.0
  %523 = vmatprep.subr.mxu0 0.0
  %524 = vmatpush1.msra.mxu0 0.0
  %525 = vmatprep.subr.mxu0 0.0
  %526 = vmatpush1.msra.mxu0 0.0
  %527 = vmatprep.subr.mxu0 0.0
  %528 = vmatpush1.msra.mxu0 0.0
  %529 = vmatprep.subr.mxu0 0.0
  %530 = vmatpush1.msra.mxu0 0.0
  %531 = vmatprep.subr.mxu0 0.0
  %532 = vmatpush1.msra.mxu0 0.0
  %533 = vmatprep.subr.mxu0 0.0
  %534 = vmatpush1.msra.mxu0 0.0
  %535 = vmatprep.subr.mxu0 0.0
  %536 = vmatpush1.msra.mxu0 0.0
  %537 = vmatprep.subr.mxu0 0.0
  %538 = vmatpush1.msra.mxu0 0.0
  %539 = vmatprep.subr.mxu0 0.0
  %540 = vmatpush1.msra.mxu0 0.0
  %541 = vmatprep.subr.mxu0 0.0
  %542 = vmatpush1.msra.mxu0 0.0
  %543 = vmatprep.mubr.f32.mxu0 0.0
  %544 = vmatmul.mubr.f32.gmra.mrb[0].mxu0 %v477
  %v545 = vpop.f32.mrb[0].mxu0
  %v546 = vadd.f32 0.0, %v545
  %v547 = vpop.f32.mrb[0].mxu0
  %548 = vdwg.mxu0
  %v549 = vadd.f32 %v149, %v546
  %v550 = vxor.u32 %v549, 2147483648
  %v551 = vmul.f32 %v550, 1.442695
  %v552 = vpow.pop %v551
  %v553 = vadd.f32 %v552, 1.0
  %v554 = vrcp.pop %v553
  %v555 = vmul.f32 1.0, %v554
  %v556 = vtanh.pop %v549
  %v557 = vmul.f32 %v555, %v467
  %559 = vrot.lane.b32.xlu0 %v556, 64
  %v560 = vpop.permute.xlu0 %559
  %v562 = vmul.f32 %v555, %v560
  %564 = vrot.lane.b32.xlu0 %v562, 32
  %v565 = vpop.permute.xlu0 %564
  %v567 = vadd.f32 %v557, %v565
  %v568 = vtanh.pop %v567
  %570 = vrot.lane.b32.xlu0 %v568, 64
  %v571 = vpop.permute.xlu0 %570
  %v573 = vmul.f32 %v555, %v571
  %575 = vrot.lane.b32.xlu0 %v573, 32
  %v576 = vpop.permute.xlu0 %575
  %v577 = vsel %vm42, %v576, 0
  %579 = vmatprep.subr.mxu0 0.0
  %580 = vmatpush1.msra.mxu0 %v172
  %581 = vmatprep.subr.mxu0 0.0
  %582 = vmatpush1.msra.mxu0 %v173
  %583 = vmatprep.subr.mxu0 0.0
  %584 = vmatpush1.msra.mxu0 %v174
  %585 = vmatprep.subr.mxu0 0.0
  %586 = vmatpush1.msra.mxu0 %v175
  %587 = vmatprep.subr.mxu0 0.0
  %588 = vmatpush1.msra.mxu0 0.0
  %589 = vmatprep.subr.mxu0 0.0
  %590 = vmatpush1.msra.mxu0 0.0
  %591 = vmatprep.subr.mxu0 0.0
  %592 = vmatpush1.msra.mxu0 0.0
  %593 = vmatprep.subr.mxu0 0.0
  %594 = vmatpush1.msra.mxu0 0.0
  %595 = vmatprep.subr.mxu0 0.0
  %596 = vmatpush1.msra.mxu0 0.0
  %597 = vmatprep.subr.mxu0 0.0
  %598 = vmatpush1.msra.mxu0 0.0
  %599 = vmatprep.subr.mxu0 0.0
  %600 = vmatpush1.msra.mxu0 0.0
  %601 = vmatprep.subr.mxu0 0.0
  %602 = vmatpush1.msra.mxu0 0.0
  %603 = vmatprep.subr.mxu0 0.0
  %604 = vmatpush1.msra.mxu0 0.0
  %605 = vmatprep.subr.mxu0 0.0
  %606 = vmatpush1.msra.mxu0 0.0
  %607 = vmatprep.subr.mxu0 0.0
  %608 = vmatpush1.msra.mxu0 0.0
  %609 = vmatprep.subr.mxu0 0.0
  %610 = vmatpush1.msra.mxu0 0.0
  %611 = vmatprep.subr.mxu0 0.0
  %612 = vmatpush1.msra.mxu0 0.0
  %613 = vmatprep.subr.mxu0 0.0
  %614 = vmatpush1.msra.mxu0 0.0
  %615 = vmatprep.subr.mxu0 0.0
  %616 = vmatpush1.msra.mxu0 0.0
  %617 = vmatprep.subr.mxu0 0.0
  %618 = vmatpush1.msra.mxu0 0.0
  %619 = vmatprep.subr.mxu0 0.0
  %620 = vmatpush1.msra.mxu0 0.0
  %621 = vmatprep.subr.mxu0 0.0
  %622 = vmatpush1.msra.mxu0 0.0
  %623 = vmatprep.subr.mxu0 0.0
  %624 = vmatpush1.msra.mxu0 0.0
  %625 = vmatprep.subr.mxu0 0.0
  %626 = vmatpush1.msra.mxu0 0.0
  %627 = vmatprep.subr.mxu0 0.0
  %628 = vmatpush1.msra.mxu0 0.0
  %629 = vmatprep.subr.mxu0 0.0
  %630 = vmatpush1.msra.mxu0 0.0
  %631 = vmatprep.subr.mxu0 0.0
  %632 = vmatpush1.msra.mxu0 0.0
  %633 = vmatprep.subr.mxu0 0.0
  %634 = vmatpush1.msra.mxu0 0.0
  %635 = vmatprep.subr.mxu0 0.0
  %636 = vmatpush1.msra.mxu0 0.0
  %637 = vmatprep.subr.mxu0 0.0
  %638 = vmatpush1.msra.mxu0 0.0
  %639 = vmatprep.subr.mxu0 0.0
  %640 = vmatpush1.msra.mxu0 0.0
  %641 = vmatprep.subr.mxu0 0.0
  %642 = vmatpush1.msra.mxu0 0.0
  %643 = vmatprep.mubr.f32.mxu0 0.0
  %644 = vmatmul.mubr.f32.gmra.mrb[0].mxu0 %v577
  %v645 = vpop.f32.mrb[0].mxu0
  %v646 = vadd.f32 0.0, %v645
  %v647 = vpop.f32.mrb[0].mxu0
  %648 = vdwg.mxu0
  %v649 = vadd.f32 %v154, %v646
  %v650 = vxor.u32 %v649, 2147483648
  %v651 = vmul.f32 %v650, 1.442695
  %v652 = vpow.pop %v651
  %v653 = vadd.f32 %v652, 1.0
  %v654 = vrcp.pop %v653
  %v655 = vmul.f32 1.0, %v654
  %v656 = vtanh.pop %v649
  %v657 = vmul.f32 %v655, %v567
  %659 = vrot.lane.b32.xlu0 %v656, 64
  %v660 = vpop.permute.xlu0 %659
  %v662 = vmul.f32 %v655, %v660
  %664 = vrot.lane.b32.xlu0 %v662, 32
  %v665 = vpop.permute.xlu0 %664
  %v667 = vadd.f32 %v657, %v665
  %v668 = vtanh.pop %v667
  %670 = vrot.lane.b32.xlu0 %v668, 64
  %v671 = vpop.permute.xlu0 %670
  %v673 = vmul.f32 %v655, %v671
  %675 = vrot.lane.b32.xlu0 %v673, 32
  %v676 = vpop.permute.xlu0 %675
  %v677 = vsel %vm42, %v676, 0
  %679 = vmatprep.subr.mxu0 0.0
  %680 = vmatpush1.msra.mxu0 %v172
  %681 = vmatprep.subr.mxu0 0.0
  %682 = vmatpush1.msra.mxu0 %v173
  %683 = vmatprep.subr.mxu0 0.0
  %684 = vmatpush1.msra.mxu0 %v174
  %685 = vmatprep.subr.mxu0 0.0
  %686 = vmatpush1.msra.mxu0 %v175
  %687 = vmatprep.subr.mxu0 0.0
  %688 = vmatpush1.msra.mxu0 0.0
  %689 = vmatprep.subr.mxu0 0.0
  %690 = vmatpush1.msra.mxu0 0.0
  %691 = vmatprep.subr.mxu0 0.0
  %692 = vmatpush1.msra.mxu0 0.0
  %693 = vmatprep.subr.mxu0 0.0
  %694 = vmatpush1.msra.mxu0 0.0
  %695 = vmatprep.subr.mxu0 0.0
  %696 = vmatpush1.msra.mxu0 0.0
  %697 = vmatprep.subr.mxu0 0.0
  %698 = vmatpush1.msra.mxu0 0.0
  %699 = vmatprep.subr.mxu0 0.0
  %700 = vmatpush1.msra.mxu0 0.0
  %701 = vmatprep.subr.mxu0 0.0
  %702 = vmatpush1.msra.mxu0 0.0
  %703 = vmatprep.subr.mxu0 0.0
  %704 = vmatpush1.msra.mxu0 0.0
  %705 = vmatprep.subr.mxu0 0.0
  %706 = vmatpush1.msra.mxu0 0.0
  %707 = vmatprep.subr.mxu0 0.0
  %708 = vmatpush1.msra.mxu0 0.0
  %709 = vmatprep.subr.mxu0 0.0
  %710 = vmatpush1.msra.mxu0 0.0
  %711 = vmatprep.subr.mxu0 0.0
  %712 = vmatpush1.msra.mxu0 0.0
  %713 = vmatprep.subr.mxu0 0.0
  %714 = vmatpush1.msra.mxu0 0.0
  %715 = vmatprep.subr.mxu0 0.0
  %716 = vmatpush1.msra.mxu0 0.0
  %717 = vmatprep.subr.mxu0 0.0
  %718 = vmatpush1.msra.mxu0 0.0
  %719 = vmatprep.subr.mxu0 0.0
  %720 = vmatpush1.msra.mxu0 0.0
  %721 = vmatprep.subr.mxu0 0.0
  %722 = vmatpush1.msra.mxu0 0.0
  %723 = vmatprep.subr.mxu0 0.0
  %724 = vmatpush1.msra.mxu0 0.0
  %725 = vmatprep.subr.mxu0 0.0
  %726 = vmatpush1.msra.mxu0 0.0
  %727 = vmatprep.subr.mxu0 0.0
  %728 = vmatpush1.msra.mxu0 0.0
  %729 = vmatprep.subr.mxu0 0.0
  %730 = vmatpush1.msra.mxu0 0.0
  %731 = vmatprep.subr.mxu0 0.0
  %732 = vmatpush1.msra.mxu0 0.0
  %733 = vmatprep.subr.mxu0 0.0
  %734 = vmatpush1.msra.mxu0 0.0
  %735 = vmatprep.subr.mxu0 0.0
  %736 = vmatpush1.msra.mxu0 0.0
  %737 = vmatprep.subr.mxu0 0.0
  %738 = vmatpush1.msra.mxu0 0.0
  %739 = vmatprep.subr.mxu0 0.0
  %740 = vmatpush1.msra.mxu0 0.0
  %741 = vmatprep.subr.mxu0 0.0
  %742 = vmatpush1.msra.mxu0 0.0
  %743 = vmatprep.mubr.f32.mxu0 0.0
  %744 = vmatmul.mubr.f32.gmra.mrb[0].mxu0 %v677
  %v745 = vpop.f32.mrb[0].mxu0
  %v746 = vadd.f32 0.0, %v745
  %v747 = vpop.f32.mrb[0].mxu0
  %748 = vdwg.mxu0
  %v749 = vadd.f32 %v159, %v746
  %v750 = vxor.u32 %v749, 2147483648
  %v751 = vmul.f32 %v750, 1.442695
  %v752 = vpow.pop %v751
  %v753 = vadd.f32 %v752, 1.0
  %v754 = vrcp.pop %v753
  %v755 = vmul.f32 1.0, %v754
  %v756 = vtanh.pop %v749
  %v757 = vmul.f32 %v755, %v667
  %759 = vrot.lane.b32.xlu0 %v756, 64
  %v760 = vpop.permute.xlu0 %759
  %v762 = vmul.f32 %v755, %v760
  %764 = vrot.lane.b32.xlu0 %v762, 32
  %v765 = vpop.permute.xlu0 %764
  %v767 = vadd.f32 %v757, %v765
  %v768 = vtanh.pop %v767
  %770 = vrot.lane.b32.xlu0 %v768, 64
  %v771 = vpop.permute.xlu0 %770
  %v773 = vmul.f32 %v755, %v771
  %775 = vrot.lane.b32.xlu0 %v773, 32
  %v776 = vpop.permute.xlu0 %775
  %v777 = vsel %vm42, %v776, 0
  %779 = vmatprep.subr.mxu0 0.0
  %780 = vmatpush1.msra.mxu0 %v172
  %781 = vmatprep.subr.mxu0 0.0
  %782 = vmatpush1.msra.mxu0 %v173
  %783 = vmatprep.subr.mxu0 0.0
  %784 = vmatpush1.msra.mxu0 %v174
  %785 = vmatprep.subr.mxu0 0.0
  %786 = vmatpush1.msra.mxu0 %v175
  %787 = vmatprep.subr.mxu0 0.0
  %788 = vmatpush1.msra.mxu0 0.0
  %789 = vmatprep.subr.mxu0 0.0
  %790 = vmatpush1.msra.mxu0 0.0
  %791 = vmatprep.subr.mxu0 0.0
  %792 = vmatpush1.msra.mxu0 0.0
  %793 = vmatprep.subr.mxu0 0.0
  %794 = vmatpush1.msra.mxu0 0.0
  %795 = vmatprep.subr.mxu0 0.0
  %796 = vmatpush1.msra.mxu0 0.0
  %797 = vmatprep.subr.mxu0 0.0
  %798 = vmatpush1.msra.mxu0 0.0
  %799 = vmatprep.subr.mxu0 0.0
  %800 = vmatpush1.msra.mxu0 0.0
  %801 = vmatprep.subr.mxu0 0.0
  %802 = vmatpush1.msra.mxu0 0.0
  %803 = vmatprep.subr.mxu0 0.0
  %804 = vmatpush1.msra.mxu0 0.0
  %805 = vmatprep.subr.mxu0 0.0
  %806 = vmatpush1.msra.mxu0 0.0
  %807 = vmatprep.subr.mxu0 0.0
  %808 = vmatpush1.msra.mxu0 0.0
  %809 = vmatprep.subr.mxu0 0.0
  %810 = vmatpush1.msra.mxu0 0.0
  %811 = vmatprep.subr.mxu0 0.0
  %812 = vmatpush1.msra.mxu0 0.0
  %813 = vmatprep.subr.mxu0 0.0
  %814 = vmatpush1.msra.mxu0 0.0
  %815 = vmatprep.subr.mxu0 0.0
  %816 = vmatpush1.msra.mxu0 0.0
  %817 = vmatprep.subr.mxu0 0.0
  %818 = vmatpush1.msra.mxu0 0.0
  %819 = vmatprep.subr.mxu0 0.0
  %820 = vmatpush1.msra.mxu0 0.0
  %821 = vmatprep.subr.mxu0 0.0
  %822 = vmatpush1.msra.mxu0 0.0
  %823 = vmatprep.subr.mxu0 0.0
  %824 = vmatpush1.msra.mxu0 0.0
  %825 = vmatprep.subr.mxu0 0.0
  %826 = vmatpush1.msra.mxu0 0.0
  %827 = vmatprep.subr.mxu0 0.0
  %828 = vmatpush1.msra.mxu0 0.0
  %829 = vmatprep.subr.mxu0 0.0
  %830 = vmatpush1.msra.mxu0 0.0
  %831 = vmatprep.subr.mxu0 0.0
  %832 = vmatpush1.msra.mxu0 0.0
  %833 = vmatprep.subr.mxu0 0.0
  %834 = vmatpush1.msra.mxu0 0.0
  %835 = vmatprep.subr.mxu0 0.0
  %836 = vmatpush1.msra.mxu0 0.0
  %837 = vmatprep.subr.mxu0 0.0
  %838 = vmatpush1.msra.mxu0 0.0
  %839 = vmatprep.subr.mxu0 0.0
  %840 = vmatpush1.msra.mxu0 0.0
  %841 = vmatprep.subr.mxu0 0.0
  %842 = vmatpush1.msra.mxu0 0.0
  %843 = vmatprep.mubr.f32.mxu0 0.0
  %844 = vmatmul.mubr.f32.gmra.mrb[0].mxu0 %v777
  %v845 = vpop.f32.mrb[0].mxu0
  %v846 = vadd.f32 0.0, %v845
  %v847 = vpop.f32.mrb[0].mxu0
  %848 = vdwg.mxu0
  %v849 = vadd.f32 %v164, %v846
  %v850 = vxor.u32 %v849, 2147483648
  %v851 = vmul.f32 %v850, 1.442695
  %v852 = vpow.pop %v851
  %v853 = vadd.f32 %v852, 1.0
  %v854 = vrcp.pop %v853
  %v855 = vmul.f32 1.0, %v854
  %v856 = vtanh.pop %v849
  %v857 = vmul.f32 %v855, %v767
  %859 = vrot.lane.b32.xlu0 %v856, 64
  %v860 = vpop.permute.xlu0 %859
  %v862 = vmul.f32 %v855, %v860
  %864 = vrot.lane.b32.xlu0 %v862, 32
  %v865 = vpop.permute.xlu0 %864
  %v867 = vadd.f32 %v857, %v865
  %v868 = vtanh.pop %v867
  %870 = vrot.lane.b32.xlu0 %v868, 64
  %v871 = vpop.permute.xlu0 %870
  %v873 = vmul.f32 %v855, %v871
  %875 = vrot.lane.b32.xlu0 %v873, 32
  %v876 = vpop.permute.xlu0 %875
  %v877 = vsel %vm42, %v876, 0
  %879 = vmatprep.subr.mxu0 0.0
  %880 = vmatpush1.msra.mxu0 %v172
  %881 = vmatprep.subr.mxu0 0.0
  %882 = vmatpush1.msra.mxu0 %v173
  %883 = vmatprep.subr.mxu0 0.0
  %884 = vmatpush1.msra.mxu0 %v174
  %885 = vmatprep.subr.mxu0 0.0
  %886 = vmatpush1.msra.mxu0 %v175
  %887 = vmatprep.subr.mxu0 0.0
  %888 = vmatpush1.msra.mxu0 0.0
  %889 = vmatprep.subr.mxu0 0.0
  %890 = vmatpush1.msra.mxu0 0.0
  %891 = vmatprep.subr.mxu0 0.0
  %892 = vmatpush1.msra.mxu0 0.0
  %893 = vmatprep.subr.mxu0 0.0
  %894 = vmatpush1.msra.mxu0 0.0
  %895 = vmatprep.subr.mxu0 0.0
  %896 = vmatpush1.msra.mxu0 0.0
  %897 = vmatprep.subr.mxu0 0.0
  %898 = vmatpush1.msra.mxu0 0.0
  %899 = vmatprep.subr.mxu0 0.0
  %900 = vmatpush1.msra.mxu0 0.0
  %901 = vmatprep.subr.mxu0 0.0
  %902 = vmatpush1.msra.mxu0 0.0
  %903 = vmatprep.subr.mxu0 0.0
  %904 = vmatpush1.msra.mxu0 0.0
  %905 = vmatprep.subr.mxu0 0.0
  %906 = vmatpush1.msra.mxu0 0.0
  %907 = vmatprep.subr.mxu0 0.0
  %908 = vmatpush1.msra.mxu0 0.0
  %909 = vmatprep.subr.mxu0 0.0
  %910 = vmatpush1.msra.mxu0 0.0
  %911 = vmatprep.subr.mxu0 0.0
  %912 = vmatpush1.msra.mxu0 0.0
  %913 = vmatprep.subr.mxu0 0.0
  %914 = vmatpush1.msra.mxu0 0.0
  %915 = vmatprep.subr.mxu0 0.0
  %916 = vmatpush1.msra.mxu0 0.0
  %917 = vmatprep.subr.mxu0 0.0
  %918 = vmatpush1.msra.mxu0 0.0
  %919 = vmatprep.subr.mxu0 0.0
  %920 = vmatpush1.msra.mxu0 0.0
  %921 = vmatprep.subr.mxu0 0.0
  %922 = vmatpush1.msra.mxu0 0.0
  %923 = vmatprep.subr.mxu0 0.0
  %924 = vmatpush1.msra.mxu0 0.0
  %925 = vmatprep.subr.mxu0 0.0
  %926 = vmatpush1.msra.mxu0 0.0
  %927 = vmatprep.subr.mxu0 0.0
  %928 = vmatpush1.msra.mxu0 0.0
  %929 = vmatprep.subr.mxu0 0.0
  %930 = vmatpush1.msra.mxu0 0.0
  %931 = vmatprep.subr.mxu0 0.0
  %932 = vmatpush1.msra.mxu0 0.0
  %933 = vmatprep.subr.mxu0 0.0
  %934 = vmatpush1.msra.mxu0 0.0
  %935 = vmatprep.subr.mxu0 0.0
  %936 = vmatpush1.msra.mxu0 0.0
  %937 = vmatprep.subr.mxu0 0.0
  %938 = vmatpush1.msra.mxu0 0.0
  %939 = vmatprep.subr.mxu0 0.0
  %940 = vmatpush1.msra.mxu0 0.0
  %941 = vmatprep.subr.mxu0 0.0
  %942 = vmatpush1.msra.mxu0 0.0
  %943 = vmatprep.mubr.f32.mxu0 0.0
  %944 = vmatmul.mubr.f32.gmra.mrb[0].mxu0 %v877
  %v945 = vpop.f32.mrb[0].mxu0
  %v946 = vadd.f32 0.0, %v945
  %v947 = vpop.f32.mrb[0].mxu0
  %948 = vdwg.mxu0
  %v949 = vadd.f32 %v169, %v946
  %v950 = vxor.u32 %v949, 2147483648
  %v951 = vmul.f32 %v950, 1.442695
  %v952 = vpow.pop %v951
  %v953 = vadd.f32 %v952, 1.0
  %v954 = vrcp.pop %v953
  %v955 = vmul.f32 1.0, %v954
  %v956 = vtanh.pop %v949
  %v957 = vmul.f32 %v955, %v867
  %959 = vrot.lane.b32.xlu0 %v956, 64
  %v960 = vpop.permute.xlu0 %959
  %v962 = vmul.f32 %v955, %v960
  %964 = vrot.lane.b32.xlu0 %v962, 32
  %v965 = vpop.permute.xlu0 %964
  %v967 = vadd.f32 %v957, %v965
  %v968 = vtanh.pop %v967
  %970 = vrot.lane.b32.xlu0 %v968, 64
  %v971 = vpop.permute.xlu0 %970
  %v973 = vmul.f32 %v955, %v971
  %s974 = scalar_lea.vmem %s1, 32
  %v975 = vld [vmem:[%s974] sm:$0xff]
  %v976 = vld [vmem:[%s974 + $0x8] sm:$0xff]
  %v977 = vld [vmem:[%s974 + $0x10] sm:$0xff]
  %v978 = vld [vmem:[%s974 + $0x18] sm:$0xff]
  %s979 = scalar_lea.vmem %s2, 32
  %v980 = vld [vmem:[%s979] sm:$0xff]
  %v981 = vld [vmem:[%s979 + $0x8] sm:$0xff]
  %v982 = vld [vmem:[%s979 + $0x10] sm:$0xff]
  %v983 = vld [vmem:[%s979 + $0x18] sm:$0xff]
  %s984 = scalar_lea.vmem %s3, 1
  %v985 = vld [vmem:[%s984] sm:$0x1]
  %v987 = vlaneseq
  %v988 = vshrl.u32 %v987, 7
  %v989 = vsub.s32 0, %v988
  %v990 = vrot.slane %v985, %v989
  %992 = vmatprep.subr.mxu0 0.0
  %993 = vmatpush1.msra.mxu0 %v980
  %994 = vmatprep.subr.mxu0 0.0
  %995 = vmatpush1.msra.mxu0 %v981
  %996 = vmatprep.subr.mxu0 0.0
  %997 = vmatpush1.msra.mxu0 %v982
  %998 = vmatprep.subr.mxu0 0.0
  %999 = vmatpush1.msra.mxu0 %v983
  %1000 = vmatprep.subr.mxu0 0.0
  %1001 = vmatpush1.msra.mxu0 0.0
  %1002 = vmatprep.subr.mxu0 0.0
  %1003 = vmatpush1.msra.mxu0 0.0
  %1004 = vmatprep.subr.mxu0 0.0
  %1005 = vmatpush1.msra.mxu0 0.0
  %1006 = vmatprep.subr.mxu0 0.0
  %1007 = vmatpush1.msra.mxu0 0.0
  %1008 = vmatprep.subr.mxu0 0.0
  %1009 = vmatpush1.msra.mxu0 0.0
  %1010 = vmatprep.subr.mxu0 0.0
  %1011 = vmatpush1.msra.mxu0 0.0
  %1012 = vmatprep.subr.mxu0 0.0
  %1013 = vmatpush1.msra.mxu0 0.0
  %1014 = vmatprep.subr.mxu0 0.0
  %1015 = vmatpush1.msra.mxu0 0.0
  %1016 = vmatprep.subr.mxu0 0.0
  %1017 = vmatpush1.msra.mxu0 0.0
  %1018 = vmatprep.subr.mxu0 0.0
  %1019 = vmatpush1.msra.mxu0 0.0
  %1020 = vmatprep.subr.mxu0 0.0
  %1021 = vmatpush1.msra.mxu0 0.0
  %1022 = vmatprep.subr.mxu0 0.0
  %1023 = vmatpush1.msra.mxu0 0.0
  %1024 = vmatprep.subr.mxu0 0.0
  %1025 = vmatpush1.msra.mxu0 0.0
  %1026 = vmatprep.subr.mxu0 0.0
  %1027 = vmatpush1.msra.mxu0 0.0
  %1028 = vmatprep.subr.mxu0 0.0
  %1029 = vmatpush1.msra.mxu0 0.0
  %1030 = vmatprep.subr.mxu0 0.0
  %1031 = vmatpush1.msra.mxu0 0.0
  %1032 = vmatprep.subr.mxu0 0.0
  %1033 = vmatpush1.msra.mxu0 0.0
  %1034 = vmatprep.subr.mxu0 0.0
  %1035 = vmatpush1.msra.mxu0 0.0
  %1036 = vmatprep.subr.mxu0 0.0
  %1037 = vmatpush1.msra.mxu0 0.0
  %1038 = vmatprep.subr.mxu0 0.0
  %1039 = vmatpush1.msra.mxu0 0.0
  %1040 = vmatprep.subr.mxu0 0.0
  %1041 = vmatpush1.msra.mxu0 0.0
  %1042 = vmatprep.subr.mxu0 0.0
  %1043 = vmatpush1.msra.mxu0 0.0
  %1044 = vmatprep.subr.mxu0 0.0
  %1045 = vmatpush1.msra.mxu0 0.0
  %1046 = vmatprep.subr.mxu0 0.0
  %1047 = vmatpush1.msra.mxu0 0.0
  %1048 = vmatprep.subr.mxu0 0.0
  %1049 = vmatpush1.msra.mxu0 0.0
  %1050 = vmatprep.subr.mxu0 0.0
  %1051 = vmatpush1.msra.mxu0 0.0
  %1052 = vmatprep.subr.mxu0 0.0
  %1053 = vmatpush1.msra.mxu0 0.0
  %1054 = vmatprep.subr.mxu0 0.0
  %1055 = vmatpush1.msra.mxu0 0.0
  %1056 = vmatprep.mubr.f32.mxu0 0.0
  %1057 = vmatmul.mubr.f32.gmra.mrb[0].mxu0 %v177
  %v1058 = vpop.f32.mrb[0].mxu0
  %v1059 = vadd.f32 0.0, %v1058
  %v1060 = vpop.f32.mrb[0].mxu0
  %1061 = vdwg.mxu0
  %1062 = vmatprep.subr.mxu0 0.0
  %1063 = vmatpush1.msra.mxu0 %v975
  %1064 = vmatprep.subr.mxu0 0.0
  %1065 = vmatpush1.msra.mxu0 %v976
  %1066 = vmatprep.subr.mxu0 0.0
  %1067 = vmatpush1.msra.mxu0 %v977
  %1068 = vmatprep.subr.mxu0 0.0
  %1069 = vmatpush1.msra.mxu0 %v978
  %1070 = vmatprep.subr.mxu0 0.0
  %1071 = vmatpush1.msra.mxu0 0.0
  %1072 = vmatprep.subr.mxu0 0.0
  %1073 = vmatpush1.msra.mxu0 0.0
  %1074 = vmatprep.subr.mxu0 0.0
  %1075 = vmatpush1.msra.mxu0 0.0
  %1076 = vmatprep.subr.mxu0 0.0
  %1077 = vmatpush1.msra.mxu0 0.0
  %1078 = vmatprep.subr.mxu0 0.0
  %1079 = vmatpush1.msra.mxu0 0.0
  %1080 = vmatprep.subr.mxu0 0.0
  %1081 = vmatpush1.msra.mxu0 0.0
  %1082 = vmatprep.subr.mxu0 0.0
  %1083 = vmatpush1.msra.mxu0 0.0
  %1084 = vmatprep.subr.mxu0 0.0
  %1085 = vmatpush1.msra.mxu0 0.0
  %1086 = vmatprep.subr.mxu0 0.0
  %1087 = vmatpush1.msra.mxu0 0.0
  %1088 = vmatprep.subr.mxu0 0.0
  %1089 = vmatpush1.msra.mxu0 0.0
  %1090 = vmatprep.subr.mxu0 0.0
  %1091 = vmatpush1.msra.mxu0 0.0
  %1092 = vmatprep.subr.mxu0 0.0
  %1093 = vmatpush1.msra.mxu0 0.0
  %1094 = vmatprep.subr.mxu0 0.0
  %1095 = vmatpush1.msra.mxu0 0.0
  %1096 = vmatprep.subr.mxu0 0.0
  %1097 = vmatpush1.msra.mxu0 0.0
  %1098 = vmatprep.subr.mxu0 0.0
  %1099 = vmatpush1.msra.mxu0 0.0
  %1100 = vmatprep.subr.mxu0 0.0
  %1101 = vmatpush1.msra.mxu0 0.0
  %1102 = vmatprep.subr.mxu0 0.0
  %1103 = vmatpush1.msra.mxu0 0.0
  %1104 = vmatprep.subr.mxu0 0.0
  %1105 = vmatpush1.msra.mxu0 0.0
  %1106 = vmatprep.subr.mxu0 0.0
  %1107 = vmatpush1.msra.mxu0 0.0
  %1108 = vmatprep.subr.mxu0 0.0
  %1109 = vmatpush1.msra.mxu0 0.0
  %1110 = vmatprep.subr.mxu0 0.0
  %1111 = vmatpush1.msra.mxu0 0.0
  %1112 = vmatprep.subr.mxu0 0.0
  %1113 = vmatpush1.msra.mxu0 0.0
  %1114 = vmatprep.subr.mxu0 0.0
  %1115 = vmatpush1.msra.mxu0 0.0
  %1116 = vmatprep.subr.mxu0 0.0
  %1117 = vmatpush1.msra.mxu0 0.0
  %1118 = vmatprep.subr.mxu0 0.0
  %1119 = vmatpush1.msra.mxu0 0.0
  %1120 = vmatprep.subr.mxu0 0.0
  %1121 = vmatpush1.msra.mxu0 0.0
  %1122 = vmatprep.subr.mxu0 0.0
  %1123 = vmatpush1.msra.mxu0 0.0
  %1124 = vmatprep.subr.mxu0 0.0
  %1125 = vmatpush1.msra.mxu0 0.0
  %1126 = vmatprep.mubr.f32.mxu0 0.0
  %1127 = vmatmul.mubr.f32.gmra.mrb[0].mxu0 %v277
  %v1128 = vpop.f32.mrb[0].mxu0
  %v1129 = vadd.f32 %v1059, %v1128
  %v1130 = vpop.f32.mrb[0].mxu0
  %1131 = vdwg.mxu0
  %v1132 = vadd.f32 %v1129, %v990
  %v1133 = vxor.u32 %v1132, 2147483648
  %v1134 = vmul.f32 %v1133, 1.442695
  %v1135 = vpow.pop %v1134
  %v1136 = vadd.f32 %v1135, 1.0
  %v1137 = vrcp.pop %v1136
  %v1138 = vmul.f32 1.0, %v1137
  %v1139 = vtanh.pop %v1132
  %v1140 = vmul.f32 %v1138, 0.0
  %1142 = vrot.lane.b32.xlu0 %v1139, 64
  %v1143 = vpop.permute.xlu0 %1142
  %v1145 = vmul.f32 %v1138, %v1143
  %1147 = vrot.lane.b32.xlu0 %v1145, 32
  %v1148 = vpop.permute.xlu0 %1147
  %v1150 = vadd.f32 %v1140, %v1148
  %v1151 = vtanh.pop %v1150
  %1153 = vrot.lane.b32.xlu0 %v1151, 64
  %v1154 = vpop.permute.xlu0 %1153
  %v1156 = vmul.f32 %v1138, %v1154
  %1158 = vrot.lane.b32.xlu0 %v1156, 32
  %v1159 = vpop.permute.xlu0 %1158
  %v1160 = vsel %vm42, %v1159, 0
  %1162 = vmatprep.subr.mxu0 0.0
  %1163 = vmatpush1.msra.mxu0 %v980
  %1164 = vmatprep.subr.mxu0 0.0
  %1165 = vmatpush1.msra.mxu0 %v981
  %1166 = vmatprep.subr.mxu0 0.0
  %1167 = vmatpush1.msra.mxu0 %v982
  %1168 = vmatprep.subr.mxu0 0.0
  %1169 = vmatpush1.msra.mxu0 %v983
  %1170 = vmatprep.subr.mxu0 0.0
  %1171 = vmatpush1.msra.mxu0 0.0
  %1172 = vmatprep.subr.mxu0 0.0
  %1173 = vmatpush1.msra.mxu0 0.0
  %1174 = vmatprep.subr.mxu0 0.0
  %1175 = vmatpush1.msra.mxu0 0.0
  %1176 = vmatprep.subr.mxu0 0.0
  %1177 = vmatpush1.msra.mxu0 0.0
  %1178 = vmatprep.subr.mxu0 0.0
  %1179 = vmatpush1.msra.mxu0 0.0
  %1180 = vmatprep.subr.mxu0 0.0
  %1181 = vmatpush1.msra.mxu0 0.0
  %1182 = vmatprep.subr.mxu0 0.0
  %1183 = vmatpush1.msra.mxu0 0.0
  %1184 = vmatprep.subr.mxu0 0.0
  %1185 = vmatpush1.msra.mxu0 0.0
  %1186 = vmatprep.subr.mxu0 0.0
  %1187 = vmatpush1.msra.mxu0 0.0
  %1188 = vmatprep.subr.mxu0 0.0
  %1189 = vmatpush1.msra.mxu0 0.0
  %1190 = vmatprep.subr.mxu0 0.0
  %1191 = vmatpush1.msra.mxu0 0.0
  %1192 = vmatprep.subr.mxu0 0.0
  %1193 = vmatpush1.msra.mxu0 0.0
  %1194 = vmatprep.subr.mxu0 0.0
  %1195 = vmatpush1.msra.mxu0 0.0
  %1196 = vmatprep.subr.mxu0 0.0
  %1197 = vmatpush1.msra.mxu0 0.0
  %1198 = vmatprep.subr.mxu0 0.0
  %1199 = vmatpush1.msra.mxu0 0.0
  %1200 = vmatprep.subr.mxu0 0.0
  %1201 = vmatpush1.msra.mxu0 0.0
  %1202 = vmatprep.subr.mxu0 0.0
  %1203 = vmatpush1.msra.mxu0 0.0
  %1204 = vmatprep.subr.mxu0 0.0
  %1205 = vmatpush1.msra.mxu0 0.0
  %1206 = vmatprep.subr.mxu0 0.0
  %1207 = vmatpush1.msra.mxu0 0.0
  %1208 = vmatprep.subr.mxu0 0.0
  %1209 = vmatpush1.msra.mxu0 0.0
  %1210 = vmatprep.subr.mxu0 0.0
  %1211 = vmatpush1.msra.mxu0 0.0
  %1212 = vmatprep.subr.mxu0 0.0
  %1213 = vmatpush1.msra.mxu0 0.0
  %1214 = vmatprep.subr.mxu0 0.0
  %1215 = vmatpush1.msra.mxu0 0.0
  %1216 = vmatprep.subr.mxu0 0.0
  %1217 = vmatpush1.msra.mxu0 0.0
  %1218 = vmatprep.subr.mxu0 0.0
  %1219 = vmatpush1.msra.mxu0 0.0
  %1220 = vmatprep.subr.mxu0 0.0
  %1221 = vmatpush1.msra.mxu0 0.0
  %1222 = vmatprep.subr.mxu0 0.0
  %1223 = vmatpush1.msra.mxu0 0.0
  %1224 = vmatprep.subr.mxu0 0.0
  %1225 = vmatpush1.msra.mxu0 0.0
  %1226 = vmatprep.mubr.f32.mxu0 0.0
  %1227 = vmatmul.mubr.f32.gmra.mrb[0].mxu0 %v1160
  %v1228 = vpop.f32.mrb[0].mxu0
  %v1229 = vadd.f32 0.0, %v1228
  %v1230 = vpop.f32.mrb[0].mxu0
  %1231 = vdwg.mxu0
  %1232 = vmatprep.subr.mxu0 0.0
  %1233 = vmatpush1.msra.mxu0 %v975
  %1234 = vmatprep.subr.mxu0 0.0
  %1235 = vmatpush1.msra.mxu0 %v976
  %1236 = vmatprep.subr.mxu0 0.0
  %1237 = vmatpush1.msra.mxu0 %v977
  %1238 = vmatprep.subr.mxu0 0.0
  %1239 = vmatpush1.msra.mxu0 %v978
  %1240 = vmatprep.subr.mxu0 0.0
  %1241 = vmatpush1.msra.mxu0 0.0
  %1242 = vmatprep.subr.mxu0 0.0
  %1243 = vmatpush1.msra.mxu0 0.0
  %1244 = vmatprep.subr.mxu0 0.0
  %1245 = vmatpush1.msra.mxu0 0.0
  %1246 = vmatprep.subr.mxu0 0.0
  %1247 = vmatpush1.msra.mxu0 0.0
  %1248 = vmatprep.subr.mxu0 0.0
  %1249 = vmatpush1.msra.mxu0 0.0
  %1250 = vmatprep.subr.mxu0 0.0
  %1251 = vmatpush1.msra.mxu0 0.0
  %1252 = vmatprep.subr.mxu0 0.0
  %1253 = vmatpush1.msra.mxu0 0.0
  %1254 = vmatprep.subr.mxu0 0.0
  %1255 = vmatpush1.msra.mxu0 0.0
  %1256 = vmatprep.subr.mxu0 0.0
  %1257 = vmatpush1.msra.mxu0 0.0
  %1258 = vmatprep.subr.mxu0 0.0
  %1259 = vmatpush1.msra.mxu0 0.0
  %1260 = vmatprep.subr.mxu0 0.0
  %1261 = vmatpush1.msra.mxu0 0.0
  %1262 = vmatprep.subr.mxu0 0.0
  %1263 = vmatpush1.msra.mxu0 0.0
  %1264 = vmatprep.subr.mxu0 0.0
  %1265 = vmatpush1.msra.mxu0 0.0
  %1266 = vmatprep.subr.mxu0 0.0
  %1267 = vmatpush1.msra.mxu0 0.0
  %1268 = vmatprep.subr.mxu0 0.0
  %1269 = vmatpush1.msra.mxu0 0.0
  %1270 = vmatprep.subr.mxu0 0.0
  %1271 = vmatpush1.msra.mxu0 0.0
  %1272 = vmatprep.subr.mxu0 0.0
  %1273 = vmatpush1.msra.mxu0 0.0
  %1274 = vmatprep.subr.mxu0 0.0
  %1275 = vmatpush1.msra.mxu0 0.0
  %1276 = vmatprep.subr.mxu0 0.0
  %1277 = vmatpush1.msra.mxu0 0.0
  %1278 = vmatprep.subr.mxu0 0.0
  %1279 = vmatpush1.msra.mxu0 0.0
  %1280 = vmatprep.subr.mxu0 0.0
  %1281 = vmatpush1.msra.mxu0 0.0
  %1282 = vmatprep.subr.mxu0 0.0
  %1283 = vmatpush1.msra.mxu0 0.0
  %1284 = vmatprep.subr.mxu0 0.0
  %1285 = vmatpush1.msra.mxu0 0.0
  %1286 = vmatprep.subr.mxu0 0.0
  %1287 = vmatpush1.msra.mxu0 0.0
  %1288 = vmatprep.subr.mxu0 0.0
  %1289 = vmatpush1.msra.mxu0 0.0
  %1290 = vmatprep.subr.mxu0 0.0
  %1291 = vmatpush1.msra.mxu0 0.0
  %1292 = vmatprep.subr.mxu0 0.0
  %1293 = vmatpush1.msra.mxu0 0.0
  %1294 = vmatprep.subr.mxu0 0.0
  %1295 = vmatpush1.msra.mxu0 0.0
  %1296 = vmatprep.mubr.f32.mxu0 0.0
  %1297 = vmatmul.mubr.f32.gmra.mrb[0].mxu0 %v377
  %v1298 = vpop.f32.mrb[0].mxu0
  %v1299 = vadd.f32 %v1229, %v1298
  %v1300 = vpop.f32.mrb[0].mxu0
  %1301 = vdwg.mxu0
  %v1302 = vadd.f32 %v1299, %v990
  %v1303 = vxor.u32 %v1302, 2147483648
  %v1304 = vmul.f32 %v1303, 1.442695
  %v1305 = vpow.pop %v1304
  %v1306 = vadd.f32 %v1305, 1.0
  %v1307 = vrcp.pop %v1306
  %v1308 = vmul.f32 1.0, %v1307
  %v1309 = vtanh.pop %v1302
  %v1310 = vmul.f32 %v1308, %v1150
  %1312 = vrot.lane.b32.xlu0 %v1309, 64
  %v1313 = vpop.permute.xlu0 %1312
  %v1315 = vmul.f32 %v1308, %v1313
  %1317 = vrot.lane.b32.xlu0 %v1315, 32
  %v1318 = vpop.permute.xlu0 %1317
  %v1320 = vadd.f32 %v1310, %v1318
  %v1321 = vtanh.pop %v1320
  %1323 = vrot.lane.b32.xlu0 %v1321, 64
  %v1324 = vpop.permute.xlu0 %1323
  %v1326 = vmul.f32 %v1308, %v1324
  %1328 = vrot.lane.b32.xlu0 %v1326, 32
  %v1329 = vpop.permute.xlu0 %1328
  %v1330 = vsel %vm42, %v1329, 0
  %1332 = vmatprep.subr.mxu0 0.0
  %1333 = vmatpush1.msra.mxu0 %v980
  %1334 = vmatprep.subr.mxu0 0.0
  %1335 = vmatpush1.msra.mxu0 %v981
  %1336 = vmatprep.subr.mxu0 0.0
  %1337 = vmatpush1.msra.mxu0 %v982
  %1338 = vmatprep.subr.mxu0 0.0
  %1339 = vmatpush1.msra.mxu0 %v983
  %1340 = vmatprep.subr.mxu0 0.0
  %1341 = vmatpush1.msra.mxu0 0.0
  %1342 = vmatprep.subr.mxu0 0.0
  %1343 = vmatpush1.msra.mxu0 0.0
  %1344 = vmatprep.subr.mxu0 0.0
  %1345 = vmatpush1.msra.mxu0 0.0
  %1346 = vmatprep.subr.mxu0 0.0
  %1347 = vmatpush1.msra.mxu0 0.0
  %1348 = vmatprep.subr.mxu0 0.0
  %1349 = vmatpush1.msra.mxu0 0.0
  %1350 = vmatprep.subr.mxu0 0.0
  %1351 = vmatpush1.msra.mxu0 0.0
  %1352 = vmatprep.subr.mxu0 0.0
  %1353 = vmatpush1.msra.mxu0 0.0
  %1354 = vmatprep.subr.mxu0 0.0
  %1355 = vmatpush1.msra.mxu0 0.0
  %1356 = vmatprep.subr.mxu0 0.0
  %1357 = vmatpush1.msra.mxu0 0.0
  %1358 = vmatprep.subr.mxu0 0.0
  %1359 = vmatpush1.msra.mxu0 0.0
  %1360 = vmatprep.subr.mxu0 0.0
  %1361 = vmatpush1.msra.mxu0 0.0
  %1362 = vmatprep.subr.mxu0 0.0
  %1363 = vmatpush1.msra.mxu0 0.0
  %1364 = vmatprep.subr.mxu0 0.0
  %1365 = vmatpush1.msra.mxu0 0.0
  %1366 = vmatprep.subr.mxu0 0.0
  %1367 = vmatpush1.msra.mxu0 0.0
  %1368 = vmatprep.subr.mxu0 0.0
  %1369 = vmatpush1.msra.mxu0 0.0
  %1370 = vmatprep.subr.mxu0 0.0
  %1371 = vmatpush1.msra.mxu0 0.0
  %1372 = vmatprep.subr.mxu0 0.0
  %1373 = vmatpush1.msra.mxu0 0.0
  %1374 = vmatprep.subr.mxu0 0.0
  %1375 = vmatpush1.msra.mxu0 0.0
  %1376 = vmatprep.subr.mxu0 0.0
  %1377 = vmatpush1.msra.mxu0 0.0
  %1378 = vmatprep.subr.mxu0 0.0
  %1379 = vmatpush1.msra.mxu0 0.0
  %1380 = vmatprep.subr.mxu0 0.0
  %1381 = vmatpush1.msra.mxu0 0.0
  %1382 = vmatprep.subr.mxu0 0.0
  %1383 = vmatpush1.msra.mxu0 0.0
  %1384 = vmatprep.subr.mxu0 0.0
  %1385 = vmatpush1.msra.mxu0 0.0
  %1386 = vmatprep.subr.mxu0 0.0
  %1387 = vmatpush1.msra.mxu0 0.0
  %1388 = vmatprep.subr.mxu0 0.0
  %1389 = vmatpush1.msra.mxu0 0.0
  %1390 = vmatprep.subr.mxu0 0.0
  %1391 = vmatpush1.msra.mxu0 0.0
  %1392 = vmatprep.subr.mxu0 0.0
  %1393 = vmatpush1.msra.mxu0 0.0
  %1394 = vmatprep.subr.mxu0 0.0
  %1395 = vmatpush1.msra.mxu0 0.0
  %1396 = vmatprep.mubr.f32.mxu0 0.0
  %1397 = vmatmul.mubr.f32.gmra.mrb[0].mxu0 %v1330
  %v1398 = vpop.f32.mrb[0].mxu0
  %v1399 = vadd.f32 0.0, %v1398
  %v1400 = vpop.f32.mrb[0].mxu0
  %1401 = vdwg.mxu0
  %1402 = vmatprep.subr.mxu0 0.0
  %1403 = vmatpush1.msra.mxu0 %v975
  %1404 = vmatprep.subr.mxu0 0.0
  %1405 = vmatpush1.msra.mxu0 %v976
  %1406 = vmatprep.subr.mxu0 0.0
  %1407 = vmatpush1.msra.mxu0 %v977
  %1408 = vmatprep.subr.mxu0 0.0
  %1409 = vmatpush1.msra.mxu0 %v978
  %1410 = vmatprep.subr.mxu0 0.0
  %1411 = vmatpush1.msra.mxu0 0.0
  %1412 = vmatprep.subr.mxu0 0.0
  %1413 = vmatpush1.msra.mxu0 0.0
  %1414 = vmatprep.subr.mxu0 0.0
  %1415 = vmatpush1.msra.mxu0 0.0
  %1416 = vmatprep.subr.mxu0 0.0
  %1417 = vmatpush1.msra.mxu0 0.0
  %1418 = vmatprep.subr.mxu0 0.0
  %1419 = vmatpush1.msra.mxu0 0.0
  %1420 = vmatprep.subr.mxu0 0.0
  %1421 = vmatpush1.msra.mxu0 0.0
  %1422 = vmatprep.subr.mxu0 0.0
  %1423 = vmatpush1.msra.mxu0 0.0
  %1424 = vmatprep.subr.mxu0 0.0
  %1425 = vmatpush1.msra.mxu0 0.0
  %1426 = vmatprep.subr.mxu0 0.0
  %1427 = vmatpush1.msra.mxu0 0.0
  %1428 = vmatprep.subr.mxu0 0.0
  %1429 = vmatpush1.msra.mxu0 0.0
  %1430 = vmatprep.subr.mxu0 0.0
  %1431 = vmatpush1.msra.mxu0 0.0
  %1432 = vmatprep.subr.mxu0 0.0
  %1433 = vmatpush1.msra.mxu0 0.0
  %1434 = vmatprep.subr.mxu0 0.0
  %1435 = vmatpush1.msra.mxu0 0.0
  %1436 = vmatprep.subr.mxu0 0.0
  %1437 = vmatpush1.msra.mxu0 0.0
  %1438 = vmatprep.subr.mxu0 0.0
  %1439 = vmatpush1.msra.mxu0 0.0
  %1440 = vmatprep.subr.mxu0 0.0
  %1441 = vmatpush1.msra.mxu0 0.0
  %1442 = vmatprep.subr.mxu0 0.0
  %1443 = vmatpush1.msra.mxu0 0.0
  %1444 = vmatprep.subr.mxu0 0.0
  %1445 = vmatpush1.msra.mxu0 0.0
  %1446 = vmatprep.subr.mxu0 0.0
  %1447 = vmatpush1.msra.mxu0 0.0
  %1448 = vmatprep.subr.mxu0 0.0
  %1449 = vmatpush1.msra.mxu0 0.0
  %1450 = vmatprep.subr.mxu0 0.0
  %1451 = vmatpush1.msra.mxu0 0.0
  %1452 = vmatprep.subr.mxu0 0.0
  %1453 = vmatpush1.msra.mxu0 0.0
  %1454 = vmatprep.subr.mxu0 0.0
  %1455 = vmatpush1.msra.mxu0 0.0
  %1456 = vmatprep.subr.mxu0 0.0
  %1457 = vmatpush1.msra.mxu0 0.0
  %1458 = vmatprep.subr.mxu0 0.0
  %1459 = vmatpush1.msra.mxu0 0.0
  %1460 = vmatprep.subr.mxu0 0.0
  %1461 = vmatpush1.msra.mxu0 0.0
  %1462 = vmatprep.subr.mxu0 0.0
  %1463 = vmatpush1.msra.mxu0 0.0
  %1464 = vmatprep.subr.mxu0 0.0
  %1465 = vmatpush1.msra.mxu0 0.0
  %1466 = vmatprep.mubr.f32.mxu0 0.0
  %1467 = vmatmul.mubr.f32.gmra.mrb[0].mxu0 %v477
  %v1468 = vpop.f32.mrb[0].mxu0
  %v1469 = vadd.f32 %v1399, %v1468
  %v1470 = vpop.f32.mrb[0].mxu0
  %1471 = vdwg.mxu0
  %v1472 = vadd.f32 %v1469, %v990
  %v1473 = vxor.u32 %v1472, 2147483648
  %v1474 = vmul.f32 %v1473, 1.442695
  %v1475 = vpow.pop %v1474
  %v1476 = vadd.f32 %v1475, 1.0
  %v1477 = vrcp.pop %v1476
  %v1478 = vmul.f32 1.0, %v1477
  %v1479 = vtanh.pop %v1472
  %v1480 = vmul.f32 %v1478, %v1320
  %1482 = vrot.lane.b32.xlu0 %v1479, 64
  %v1483 = vpop.permute.xlu0 %1482
  %v1485 = vmul.f32 %v1478, %v1483
  %1487 = vrot.lane.b32.xlu0 %v1485, 32
  %v1488 = vpop.permute.xlu0 %1487
  %v1490 = vadd.f32 %v1480, %v1488
  %v1491 = vtanh.pop %v1490
  %1493 = vrot.lane.b32.xlu0 %v1491, 64
  %v1494 = vpop.permute.xlu0 %1493
  %v1496 = vmul.f32 %v1478, %v1494
  %1498 = vrot.lane.b32.xlu0 %v1496, 32
  %v1499 = vpop.permute.xlu0 %1498
  %v1500 = vsel %vm42, %v1499, 0
  %1502 = vmatprep.subr.mxu0 0.0
  %1503 = vmatpush1.msra.mxu0 %v980
  %1504 = vmatprep.subr.mxu0 0.0
  %1505 = vmatpush1.msra.mxu0 %v981
  %1506 = vmatprep.subr.mxu0 0.0
  %1507 = vmatpush1.msra.mxu0 %v982
  %1508 = vmatprep.subr.mxu0 0.0
  %1509 = vmatpush1.msra.mxu0 %v983
  %1510 = vmatprep.subr.mxu0 0.0
  %1511 = vmatpush1.msra.mxu0 0.0
  %1512 = vmatprep.subr.mxu0 0.0
  %1513 = vmatpush1.msra.mxu0 0.0
  %1514 = vmatprep.subr.mxu0 0.0
  %1515 = vmatpush1.msra.mxu0 0.0
  %1516 = vmatprep.subr.mxu0 0.0
  %1517 = vmatpush1.msra.mxu0 0.0
  %1518 = vmatprep.subr.mxu0 0.0
  %1519 = vmatpush1.msra.mxu0 0.0
  %1520 = vmatprep.subr.mxu0 0.0
  %1521 = vmatpush1.msra.mxu0 0.0
  %1522 = vmatprep.subr.mxu0 0.0
  %1523 = vmatpush1.msra.mxu0 0.0
  %1524 = vmatprep.subr.mxu0 0.0
  %1525 = vmatpush1.msra.mxu0 0.0
  %1526 = vmatprep.subr.mxu0 0.0
  %1527 = vmatpush1.msra.mxu0 0.0
  %1528 = vmatprep.subr.mxu0 0.0
  %1529 = vmatpush1.msra.mxu0 0.0
  %1530 = vmatprep.subr.mxu0 0.0
  %1531 = vmatpush1.msra.mxu0 0.0
  %1532 = vmatprep.subr.mxu0 0.0
  %1533 = vmatpush1.msra.mxu0 0.0
  %1534 = vmatprep.subr.mxu0 0.0
  %1535 = vmatpush1.msra.mxu0 0.0
  %1536 = vmatprep.subr.mxu0 0.0
  %1537 = vmatpush1.msra.mxu0 0.0
  %1538 = vmatprep.subr.mxu0 0.0
  %1539 = vmatpush1.msra.mxu0 0.0
  %1540 = vmatprep.subr.mxu0 0.0
  %1541 = vmatpush1.msra.mxu0 0.0
  %1542 = vmatprep.subr.mxu0 0.0
  %1543 = vmatpush1.msra.mxu0 0.0
  %1544 = vmatprep.subr.mxu0 0.0
  %1545 = vmatpush1.msra.mxu0 0.0
  %1546 = vmatprep.subr.mxu0 0.0
  %1547 = vmatpush1.msra.mxu0 0.0
  %1548 = vmatprep.subr.mxu0 0.0
  %1549 = vmatpush1.msra.mxu0 0.0
  %1550 = vmatprep.subr.mxu0 0.0
  %1551 = vmatpush1.msra.mxu0 0.0
  %1552 = vmatprep.subr.mxu0 0.0
  %1553 = vmatpush1.msra.mxu0 0.0
  %1554 = vmatprep.subr.mxu0 0.0
  %1555 = vmatpush1.msra.mxu0 0.0
  %1556 = vmatprep.subr.mxu0 0.0
  %1557 = vmatpush1.msra.mxu0 0.0
  %1558 = vmatprep.subr.mxu0 0.0
  %1559 = vmatpush1.msra.mxu0 0.0
  %1560 = vmatprep.subr.mxu0 0.0
  %1561 = vmatpush1.msra.mxu0 0.0
  %1562 = vmatprep.subr.mxu0 0.0
  %1563 = vmatpush1.msra.mxu0 0.0
  %1564 = vmatprep.subr.mxu0 0.0
  %1565 = vmatpush1.msra.mxu0 0.0
  %1566 = vmatprep.mubr.f32.mxu0 0.0
  %1567 = vmatmul.mubr.f32.gmra.mrb[0].mxu0 %v1500
  %v1568 = vpop.f32.mrb[0].mxu0
  %v1569 = vadd.f32 0.0, %v1568
  %v1570 = vpop.f32.mrb[0].mxu0
  %1571 = vdwg.mxu0
  %1572 = vmatprep.subr.mxu0 0.0
  %1573 = vmatpush1.msra.mxu0 %v975
  %1574 = vmatprep.subr.mxu0 0.0
  %1575 = vmatpush1.msra.mxu0 %v976
  %1576 = vmatprep.subr.mxu0 0.0
  %1577 = vmatpush1.msra.mxu0 %v977
  %1578 = vmatprep.subr.mxu0 0.0
  %1579 = vmatpush1.msra.mxu0 %v978
  %1580 = vmatprep.subr.mxu0 0.0
  %1581 = vmatpush1.msra.mxu0 0.0
  %1582 = vmatprep.subr.mxu0 0.0
  %1583 = vmatpush1.msra.mxu0 0.0
  %1584 = vmatprep.subr.mxu0 0.0
  %1585 = vmatpush1.msra.mxu0 0.0
  %1586 = vmatprep.subr.mxu0 0.0
  %1587 = vmatpush1.msra.mxu0 0.0
  %1588 = vmatprep.subr.mxu0 0.0
  %1589 = vmatpush1.msra.mxu0 0.0
  %1590 = vmatprep.subr.mxu0 0.0
  %1591 = vmatpush1.msra.mxu0 0.0
  %1592 = vmatprep.subr.mxu0 0.0
  %1593 = vmatpush1.msra.mxu0 0.0
  %1594 = vmatprep.subr.mxu0 0.0
  %1595 = vmatpush1.msra.mxu0 0.0
  %1596 = vmatprep.subr.mxu0 0.0
  %1597 = vmatpush1.msra.mxu0 0.0
  %1598 = vmatprep.subr.mxu0 0.0
  %1599 = vmatpush1.msra.mxu0 0.0
  %1600 = vmatprep.subr.mxu0 0.0
  %1601 = vmatpush1.msra.mxu0 0.0
  %1602 = vmatprep.subr.mxu0 0.0
  %1603 = vmatpush1.msra.mxu0 0.0
  %1604 = vmatprep.subr.mxu0 0.0
  %1605 = vmatpush1.msra.mxu0 0.0
  %1606 = vmatprep.subr.mxu0 0.0
  %1607 = vmatpush1.msra.mxu0 0.0
  %1608 = vmatprep.subr.mxu0 0.0
  %1609 = vmatpush1.msra.mxu0 0.0
  %1610 = vmatprep.subr.mxu0 0.0
  %1611 = vmatpush1.msra.mxu0 0.0
  %1612 = vmatprep.subr.mxu0 0.0
  %1613 = vmatpush1.msra.mxu0 0.0
  %1614 = vmatprep.subr.mxu0 0.0
  %1615 = vmatpush1.msra.mxu0 0.0
  %1616 = vmatprep.subr.mxu0 0.0
  %1617 = vmatpush1.msra.mxu0 0.0
  %1618 = vmatprep.subr.mxu0 0.0
  %1619 = vmatpush1.msra.mxu0 0.0
  %1620 = vmatprep.subr.mxu0 0.0
  %1621 = vmatpush1.msra.mxu0 0.0
  %1622 = vmatprep.subr.mxu0 0.0
  %1623 = vmatpush1.msra.mxu0 0.0
  %1624 = vmatprep.subr.mxu0 0.0
  %1625 = vmatpush1.msra.mxu0 0.0
  %1626 = vmatprep.subr.mxu0 0.0
  %1627 = vmatpush1.msra.mxu0 0.0
  %1628 = vmatprep.subr.mxu0 0.0
  %1629 = vmatpush1.msra.mxu0 0.0
  %1630 = vmatprep.subr.mxu0 0.0
  %1631 = vmatpush1.msra.mxu0 0.0
  %1632 = vmatprep.subr.mxu0 0.0
  %1633 = vmatpush1.msra.mxu0 0.0
  %1634 = vmatprep.subr.mxu0 0.0
  %1635 = vmatpush1.msra.mxu0 0.0
  %1636 = vmatprep.mubr.f32.mxu0 0.0
  %1637 = vmatmul.mubr.f32.gmra.mrb[0].mxu0 %v577
  %v1638 = vpop.f32.mrb[0].mxu0
  %v1639 = vadd.f32 %v1569, %v1638
  %v1640 = vpop.f32.mrb[0].mxu0
  %1641 = vdwg.mxu0
  %v1642 = vadd.f32 %v1639, %v990
  %v1643 = vxor.u32 %v1642, 2147483648
  %v1644 = vmul.f32 %v1643, 1.442695
  %v1645 = vpow.pop %v1644
  %v1646 = vadd.f32 %v1645, 1.0
  %v1647 = vrcp.pop %v1646
  %v1648 = vmul.f32 1.0, %v1647
  %v1649 = vtanh.pop %v1642
  %v1650 = vmul.f32 %v1648, %v1490
  %1652 = vrot.lane.b32.xlu0 %v1649, 64
  %v1653 = vpop.permute.xlu0 %1652
  %v1655 = vmul.f32 %v1648, %v1653
  %1657 = vrot.lane.b32.xlu0 %v1655, 32
  %v1658 = vpop.permute.xlu0 %1657
  %v1660 = vadd.f32 %v1650, %v1658
  %v1661 = vtanh.pop %v1660
  %1663 = vrot.lane.b32.xlu0 %v1661, 64
  %v1664 = vpop.permute.xlu0 %1663
  %v1666 = vmul.f32 %v1648, %v1664
  %1668 = vrot.lane.b32.xlu0 %v1666, 32
  %v1669 = vpop.permute.xlu0 %1668
  %v1670 = vsel %vm42, %v1669, 0
  %1672 = vmatprep.subr.mxu0 0.0
  %1673 = vmatpush1.msra.mxu0 %v980
  %1674 = vmatprep.subr.mxu0 0.0
  %1675 = vmatpush1.msra.mxu0 %v981
  %1676 = vmatprep.subr.mxu0 0.0
  %1677 = vmatpush1.msra.mxu0 %v982
  %1678 = vmatprep.subr.mxu0 0.0
  %1679 = vmatpush1.msra.mxu0 %v983
  %1680 = vmatprep.subr.mxu0 0.0
  %1681 = vmatpush1.msra.mxu0 0.0
  %1682 = vmatprep.subr.mxu0 0.0
  %1683 = vmatpush1.msra.mxu0 0.0
  %1684 = vmatprep.subr.mxu0 0.0
  %1685 = vmatpush1.msra.mxu0 0.0
  %1686 = vmatprep.subr.mxu0 0.0
  %1687 = vmatpush1.msra.mxu0 0.0
  %1688 = vmatprep.subr.mxu0 0.0
  %1689 = vmatpush1.msra.mxu0 0.0
  %1690 = vmatprep.subr.mxu0 0.0
  %1691 = vmatpush1.msra.mxu0 0.0
  %1692 = vmatprep.subr.mxu0 0.0
  %1693 = vmatpush1.msra.mxu0 0.0
  %1694 = vmatprep.subr.mxu0 0.0
  %1695 = vmatpush1.msra.mxu0 0.0
  %1696 = vmatprep.subr.mxu0 0.0
  %1697 = vmatpush1.msra.mxu0 0.0
  %1698 = vmatprep.subr.mxu0 0.0
  %1699 = vmatpush1.msra.mxu0 0.0
  %1700 = vmatprep.subr.mxu0 0.0
  %1701 = vmatpush1.msra.mxu0 0.0
  %1702 = vmatprep.subr.mxu0 0.0
  %1703 = vmatpush1.msra.mxu0 0.0
  %1704 = vmatprep.subr.mxu0 0.0
  %1705 = vmatpush1.msra.mxu0 0.0
  %1706 = vmatprep.subr.mxu0 0.0
  %1707 = vmatpush1.msra.mxu0 0.0
  %1708 = vmatprep.subr.mxu0 0.0
  %1709 = vmatpush1.msra.mxu0 0.0
  %1710 = vmatprep.subr.mxu0 0.0
  %1711 = vmatpush1.msra.mxu0 0.0
  %1712 = vmatprep.subr.mxu0 0.0
  %1713 = vmatpush1.msra.mxu0 0.0
  %1714 = vmatprep.subr.mxu0 0.0
  %1715 = vmatpush1.msra.mxu0 0.0
  %1716 = vmatprep.subr.mxu0 0.0
  %1717 = vmatpush1.msra.mxu0 0.0
  %1718 = vmatprep.subr.mxu0 0.0
  %1719 = vmatpush1.msra.mxu0 0.0
  %1720 = vmatprep.subr.mxu0 0.0
  %1721 = vmatpush1.msra.mxu0 0.0
  %1722 = vmatprep.subr.mxu0 0.0
  %1723 = vmatpush1.msra.mxu0 0.0
  %1724 = vmatprep.subr.mxu0 0.0
  %1725 = vmatpush1.msra.mxu0 0.0
  %1726 = vmatprep.subr.mxu0 0.0
  %1727 = vmatpush1.msra.mxu0 0.0
  %1728 = vmatprep.subr.mxu0 0.0
  %1729 = vmatpush1.msra.mxu0 0.0
  %1730 = vmatprep.subr.mxu0 0.0
  %1731 = vmatpush1.msra.mxu0 0.0
  %1732 = vmatprep.subr.mxu0 0.0
  %1733 = vmatpush1.msra.mxu0 0.0
  %1734 = vmatprep.subr.mxu0 0.0
  %1735 = vmatpush1.msra.mxu0 0.0
  %1736 = vmatprep.mubr.f32.mxu0 0.0
  %1737 = vmatmul.mubr.f32.gmra.mrb[0].mxu0 %v1670
  %v1738 = vpop.f32.mrb[0].mxu0
  %v1739 = vadd.f32 0.0, %v1738
  %v1740 = vpop.f32.mrb[0].mxu0
  %1741 = vdwg.mxu0
  %1742 = vmatprep.subr.mxu0 0.0
  %1743 = vmatpush1.msra.mxu0 %v975
  %1744 = vmatprep.subr.mxu0 0.0
  %1745 = vmatpush1.msra.mxu0 %v976
  %1746 = vmatprep.subr.mxu0 0.0
  %1747 = vmatpush1.msra.mxu0 %v977
  %1748 = vmatprep.subr.mxu0 0.0
  %1749 = vmatpush1.msra.mxu0 %v978
  %1750 = vmatprep.subr.mxu0 0.0
  %1751 = vmatpush1.msra.mxu0 0.0
  %1752 = vmatprep.subr.mxu0 0.0
  %1753 = vmatpush1.msra.mxu0 0.0
  %1754 = vmatprep.subr.mxu0 0.0
  %1755 = vmatpush1.msra.mxu0 0.0
  %1756 = vmatprep.subr.mxu0 0.0
  %1757 = vmatpush1.msra.mxu0 0.0
  %1758 = vmatprep.subr.mxu0 0.0
  %1759 = vmatpush1.msra.mxu0 0.0
  %1760 = vmatprep.subr.mxu0 0.0
  %1761 = vmatpush1.msra.mxu0 0.0
  %1762 = vmatprep.subr.mxu0 0.0
  %1763 = vmatpush1.msra.mxu0 0.0
  %1764 = vmatprep.subr.mxu0 0.0
  %1765 = vmatpush1.msra.mxu0 0.0
  %1766 = vmatprep.subr.mxu0 0.0
  %1767 = vmatpush1.msra.mxu0 0.0
  %1768 = vmatprep.subr.mxu0 0.0
  %1769 = vmatpush1.msra.mxu0 0.0
  %1770 = vmatprep.subr.mxu0 0.0
  %1771 = vmatpush1.msra.mxu0 0.0
  %1772 = vmatprep.subr.mxu0 0.0
  %1773 = vmatpush1.msra.mxu0 0.0
  %1774 = vmatprep.subr.mxu0 0.0
  %1775 = vmatpush1.msra.mxu0 0.0
  %1776 = vmatprep.subr.mxu0 0.0
  %1777 = vmatpush1.msra.mxu0 0.0
  %1778 = vmatprep.subr.mxu0 0.0
  %1779 = vmatpush1.msra.mxu0 0.0
  %1780 = vmatprep.subr.mxu0 0.0
  %1781 = vmatpush1.msra.mxu0 0.0
  %1782 = vmatprep.subr.mxu0 0.0
  %1783 = vmatpush1.msra.mxu0 0.0
  %1784 = vmatprep.subr.mxu0 0.0
  %1785 = vmatpush1.msra.mxu0 0.0
  %1786 = vmatprep.subr.mxu0 0.0
  %1787 = vmatpush1.msra.mxu0 0.0
  %1788 = vmatprep.subr.mxu0 0.0
  %1789 = vmatpush1.msra.mxu0 0.0
  %1790 = vmatprep.subr.mxu0 0.0
  %1791 = vmatpush1.msra.mxu0 0.0
  %1792 = vmatprep.subr.mxu0 0.0
  %1793 = vmatpush1.msra.mxu0 0.0
  %1794 = vmatprep.subr.mxu0 0.0
  %1795 = vmatpush1.msra.mxu0 0.0
  %1796 = vmatprep.subr.mxu0 0.0
  %1797 = vmatpush1.msra.mxu0 0.0
  %1798 = vmatprep.subr.mxu0 0.0
  %1799 = vmatpush1.msra.mxu0 0.0
  %1800 = vmatprep.subr.mxu0 0.0
  %1801 = vmatpush1.msra.mxu0 0.0
  %1802 = vmatprep.subr.mxu0 0.0
  %1803 = vmatpush1.msra.mxu0 0.0
  %1804 = vmatprep.subr.mxu0 0.0
  %1805 = vmatpush1.msra.mxu0 0.0
  %1806 = vmatprep.mubr.f32.mxu0 0.0
  %1807 = vmatmul.mubr.f32.gmra.mrb[0].mxu0 %v677
  %v1808 = vpop.f32.mrb[0].mxu0
  %v1809 = vadd.f32 %v1739, %v1808
  %v1810 = vpop.f32.mrb[0].mxu0
  %1811 = vdwg.mxu0
  %v1812 = vadd.f32 %v1809, %v990
  %v1813 = vxor.u32 %v1812, 2147483648
  %v1814 = vmul.f32 %v1813, 1.442695
  %v1815 = vpow.pop %v1814
  %v1816 = vadd.f32 %v1815, 1.0
  %v1817 = vrcp.pop %v1816
  %v1818 = vmul.f32 1.0, %v1817
  %v1819 = vtanh.pop %v1812
  %v1820 = vmul.f32 %v1818, %v1660
  %1822 = vrot.lane.b32.xlu0 %v1819, 64
  %v1823 = vpop.permute.xlu0 %1822
  %v1825 = vmul.f32 %v1818, %v1823
  %1827 = vrot.lane.b32.xlu0 %v1825, 32
  %v1828 = vpop.permute.xlu0 %1827
  %v1830 = vadd.f32 %v1820, %v1828
  %v1831 = vtanh.pop %v1830
  %1833 = vrot.lane.b32.xlu0 %v1831, 64
  %v1834 = vpop.permute.xlu0 %1833
  %v1836 = vmul.f32 %v1818, %v1834
  %1838 = vrot.lane.b32.xlu0 %v1836, 32
  %v1839 = vpop.permute.xlu0 %1838
  %v1840 = vsel %vm42, %v1839, 0
  %1842 = vmatprep.subr.mxu0 0.0
  %1843 = vmatpush1.msra.mxu0 %v980
  %1844 = vmatprep.subr.mxu0 0.0
  %1845 = vmatpush1.msra.mxu0 %v981
  %1846 = vmatprep.subr.mxu0 0.0
  %1847 = vmatpush1.msra.mxu0 %v982
  %1848 = vmatprep.subr.mxu0 0.0
  %1849 = vmatpush1.msra.mxu0 %v983
  %1850 = vmatprep.subr.mxu0 0.0
  %1851 = vmatpush1.msra.mxu0 0.0
  %1852 = vmatprep.subr.mxu0 0.0
  %1853 = vmatpush1.msra.mxu0 0.0
  %1854 = vmatprep.subr.mxu0 0.0
  %1855 = vmatpush1.msra.mxu0 0.0
  %1856 = vmatprep.subr.mxu0 0.0
  %1857 = vmatpush1.msra.mxu0 0.0
  %1858 = vmatprep.subr.mxu0 0.0
  %1859 = vmatpush1.msra.mxu0 0.0
  %1860 = vmatprep.subr.mxu0 0.0
  %1861 = vmatpush1.msra.mxu0 0.0
  %1862 = vmatprep.subr.mxu0 0.0
  %1863 = vmatpush1.msra.mxu0 0.0
  %1864 = vmatprep.subr.mxu0 0.0
  %1865 = vmatpush1.msra.mxu0 0.0
  %1866 = vmatprep.subr.mxu0 0.0
  %1867 = vmatpush1.msra.mxu0 0.0
  %1868 = vmatprep.subr.mxu0 0.0
  %1869 = vmatpush1.msra.mxu0 0.0
  %1870 = vmatprep.subr.mxu0 0.0
  %1871 = vmatpush1.msra.mxu0 0.0
  %1872 = vmatprep.subr.mxu0 0.0
  %1873 = vmatpush1.msra.mxu0 0.0
  %1874 = vmatprep.subr.mxu0 0.0
  %1875 = vmatpush1.msra.mxu0 0.0
  %1876 = vmatprep.subr.mxu0 0.0
  %1877 = vmatpush1.msra.mxu0 0.0
  %1878 = vmatprep.subr.mxu0 0.0
  %1879 = vmatpush1.msra.mxu0 0.0
  %1880 = vmatprep.subr.mxu0 0.0
  %1881 = vmatpush1.msra.mxu0 0.0
  %1882 = vmatprep.subr.mxu0 0.0
  %1883 = vmatpush1.msra.mxu0 0.0
  %1884 = vmatprep.subr.mxu0 0.0
  %1885 = vmatpush1.msra.mxu0 0.0
  %1886 = vmatprep.subr.mxu0 0.0
  %1887 = vmatpush1.msra.mxu0 0.0
  %1888 = vmatprep.subr.mxu0 0.0
  %1889 = vmatpush1.msra.mxu0 0.0
  %1890 = vmatprep.subr.mxu0 0.0
  %1891 = vmatpush1.msra.mxu0 0.0
  %1892 = vmatprep.subr.mxu0 0.0
  %1893 = vmatpush1.msra.mxu0 0.0
  %1894 = vmatprep.subr.mxu0 0.0
  %1895 = vmatpush1.msra.mxu0 0.0
  %1896 = vmatprep.subr.mxu0 0.0
  %1897 = vmatpush1.msra.mxu0 0.0
  %1898 = vmatprep.subr.mxu0 0.0
  %1899 = vmatpush1.msra.mxu0 0.0
  %1900 = vmatprep.subr.mxu0 0.0
  %1901 = vmatpush1.msra.mxu0 0.0
  %1902 = vmatprep.subr.mxu0 0.0
  %1903 = vmatpush1.msra.mxu0 0.0
  %1904 = vmatprep.subr.mxu0 0.0
  %1905 = vmatpush1.msra.mxu0 0.0
  %1906 = vmatprep.mubr.f32.mxu0 0.0
  %1907 = vmatmul.mubr.f32.gmra.mrb[0].mxu0 %v1840
  %v1908 = vpop.f32.mrb[0].mxu0
  %v1909 = vadd.f32 0.0, %v1908
  %v1910 = vpop.f32.mrb[0].mxu0
  %1911 = vdwg.mxu0
  %1912 = vmatprep.subr.mxu0 0.0
  %1913 = vmatpush1.msra.mxu0 %v975
  %1914 = vmatprep.subr.mxu0 0.0
  %1915 = vmatpush1.msra.mxu0 %v976
  %1916 = vmatprep.subr.mxu0 0.0
  %1917 = vmatpush1.msra.mxu0 %v977
  %1918 = vmatprep.subr.mxu0 0.0
  %1919 = vmatpush1.msra.mxu0 %v978
  %1920 = vmatprep.subr.mxu0 0.0
  %1921 = vmatpush1.msra.mxu0 0.0
  %1922 = vmatprep.subr.mxu0 0.0
  %1923 = vmatpush1.msra.mxu0 0.0
  %1924 = vmatprep.subr.mxu0 0.0
  %1925 = vmatpush1.msra.mxu0 0.0
  %1926 = vmatprep.subr.mxu0 0.0
  %1927 = vmatpush1.msra.mxu0 0.0
  %1928 = vmatprep.subr.mxu0 0.0
  %1929 = vmatpush1.msra.mxu0 0.0
  %1930 = vmatprep.subr.mxu0 0.0
  %1931 = vmatpush1.msra.mxu0 0.0
  %1932 = vmatprep.subr.mxu0 0.0
  %1933 = vmatpush1.msra.mxu0 0.0
  %1934 = vmatprep.subr.mxu0 0.0
  %1935 = vmatpush1.msra.mxu0 0.0
  %1936 = vmatprep.subr.mxu0 0.0
  %1937 = vmatpush1.msra.mxu0 0.0
  %1938 = vmatprep.subr.mxu0 0.0
  %1939 = vmatpush1.msra.mxu0 0.0
  %1940 = vmatprep.subr.mxu0 0.0
  %1941 = vmatpush1.msra.mxu0 0.0
  %1942 = vmatprep.subr.mxu0 0.0
  %1943 = vmatpush1.msra.mxu0 0.0
  %1944 = vmatprep.subr.mxu0 0.0
  %1945 = vmatpush1.msra.mxu0 0.0
  %1946 = vmatprep.subr.mxu0 0.0
  %1947 = vmatpush1.msra.mxu0 0.0
  %1948 = vmatprep.subr.mxu0 0.0
  %1949 = vmatpush1.msra.mxu0 0.0
  %1950 = vmatprep.subr.mxu0 0.0
  %1951 = vmatpush1.msra.mxu0 0.0
  %1952 = vmatprep.subr.mxu0 0.0
  %1953 = vmatpush1.msra.mxu0 0.0
  %1954 = vmatprep.subr.mxu0 0.0
  %1955 = vmatpush1.msra.mxu0 0.0
  %1956 = vmatprep.subr.mxu0 0.0
  %1957 = vmatpush1.msra.mxu0 0.0
  %1958 = vmatprep.subr.mxu0 0.0
  %1959 = vmatpush1.msra.mxu0 0.0
  %1960 = vmatprep.subr.mxu0 0.0
  %1961 = vmatpush1.msra.mxu0 0.0
  %1962 = vmatprep.subr.mxu0 0.0
  %1963 = vmatpush1.msra.mxu0 0.0
  %1964 = vmatprep.subr.mxu0 0.0
  %1965 = vmatpush1.msra.mxu0 0.0
  %1966 = vmatprep.subr.mxu0 0.0
  %1967 = vmatpush1.msra.mxu0 0.0
  %1968 = vmatprep.subr.mxu0 0.0
  %1969 = vmatpush1.msra.mxu0 0.0
  %1970 = vmatprep.subr.mxu0 0.0
  %1971 = vmatpush1.msra.mxu0 0.0
  %1972 = vmatprep.subr.mxu0 0.0
  %1973 = vmatpush1.msra.mxu0 0.0
  %1974 = vmatprep.subr.mxu0 0.0
  %1975 = vmatpush1.msra.mxu0 0.0
  %1976 = vmatprep.mubr.f32.mxu0 0.0
  %1977 = vmatmul.mubr.f32.gmra.mrb[0].mxu0 %v777
  %v1978 = vpop.f32.mrb[0].mxu0
  %v1979 = vadd.f32 %v1909, %v1978
  %v1980 = vpop.f32.mrb[0].mxu0
  %1981 = vdwg.mxu0
  %v1982 = vadd.f32 %v1979, %v990
  %v1983 = vxor.u32 %v1982, 2147483648
  %v1984 = vmul.f32 %v1983, 1.442695
  %v1985 = vpow.pop %v1984
  %v1986 = vadd.f32 %v1985, 1.0
  %v1987 = vrcp.pop %v1986
  %v1988 = vmul.f32 1.0, %v1987
  %v1989 = vtanh.pop %v1982
  %v1990 = vmul.f32 %v1988, %v1830
  %1992 = vrot.lane.b32.xlu0 %v1989, 64
  %v1993 = vpop.permute.xlu0 %1992
  %v1995 = vmul.f32 %v1988, %v1993
  %1997 = vrot.lane.b32.xlu0 %v1995, 32
  %v1998 = vpop.permute.xlu0 %1997
  %v2000 = vadd.f32 %v1990, %v1998
  %v2001 = vtanh.pop %v2000
  %2003 = vrot.lane.b32.xlu0 %v2001, 64
  %v2004 = vpop.permute.xlu0 %2003
  %v2006 = vmul.f32 %v1988, %v2004
  %2008 = vrot.lane.b32.xlu0 %v2006, 32
  %v2009 = vpop.permute.xlu0 %2008
  %v2010 = vsel %vm42, %v2009, 0
  %2012 = vmatprep.subr.mxu0 0.0
  %2013 = vmatpush1.msra.mxu0 %v980
  %2014 = vmatprep.subr.mxu0 0.0
  %2015 = vmatpush1.msra.mxu0 %v981
  %2016 = vmatprep.subr.mxu0 0.0
  %2017 = vmatpush1.msra.mxu0 %v982
  %2018 = vmatprep.subr.mxu0 0.0
  %2019 = vmatpush1.msra.mxu0 %v983
  %2020 = vmatprep.subr.mxu0 0.0
  %2021 = vmatpush1.msra.mxu0 0.0
  %2022 = vmatprep.subr.mxu0 0.0
  %2023 = vmatpush1.msra.mxu0 0.0
  %2024 = vmatprep.subr.mxu0 0.0
  %2025 = vmatpush1.msra.mxu0 0.0
  %2026 = vmatprep.subr.mxu0 0.0
  %2027 = vmatpush1.msra.mxu0 0.0
  %2028 = vmatprep.subr.mxu0 0.0
  %2029 = vmatpush1.msra.mxu0 0.0
  %2030 = vmatprep.subr.mxu0 0.0
  %2031 = vmatpush1.msra.mxu0 0.0
  %2032 = vmatprep.subr.mxu0 0.0
  %2033 = vmatpush1.msra.mxu0 0.0
  %2034 = vmatprep.subr.mxu0 0.0
  %2035 = vmatpush1.msra.mxu0 0.0
  %2036 = vmatprep.subr.mxu0 0.0
  %2037 = vmatpush1.msra.mxu0 0.0
  %2038 = vmatprep.subr.mxu0 0.0
  %2039 = vmatpush1.msra.mxu0 0.0
  %2040 = vmatprep.subr.mxu0 0.0
  %2041 = vmatpush1.msra.mxu0 0.0
  %2042 = vmatprep.subr.mxu0 0.0
  %2043 = vmatpush1.msra.mxu0 0.0
  %2044 = vmatprep.subr.mxu0 0.0
  %2045 = vmatpush1.msra.mxu0 0.0
  %2046 = vmatprep.subr.mxu0 0.0
  %2047 = vmatpush1.msra.mxu0 0.0
  %2048 = vmatprep.subr.mxu0 0.0
  %2049 = vmatpush1.msra.mxu0 0.0
  %2050 = vmatprep.subr.mxu0 0.0
  %2051 = vmatpush1.msra.mxu0 0.0
  %2052 = vmatprep.subr.mxu0 0.0
  %2053 = vmatpush1.msra.mxu0 0.0
  %2054 = vmatprep.subr.mxu0 0.0
  %2055 = vmatpush1.msra.mxu0 0.0
  %2056 = vmatprep.subr.mxu0 0.0
  %2057 = vmatpush1.msra.mxu0 0.0
  %2058 = vmatprep.subr.mxu0 0.0
  %2059 = vmatpush1.msra.mxu0 0.0
  %2060 = vmatprep.subr.mxu0 0.0
  %2061 = vmatpush1.msra.mxu0 0.0
  %2062 = vmatprep.subr.mxu0 0.0
  %2063 = vmatpush1.msra.mxu0 0.0
  %2064 = vmatprep.subr.mxu0 0.0
  %2065 = vmatpush1.msra.mxu0 0.0
  %2066 = vmatprep.subr.mxu0 0.0
  %2067 = vmatpush1.msra.mxu0 0.0
  %2068 = vmatprep.subr.mxu0 0.0
  %2069 = vmatpush1.msra.mxu0 0.0
  %2070 = vmatprep.subr.mxu0 0.0
  %2071 = vmatpush1.msra.mxu0 0.0
  %2072 = vmatprep.subr.mxu0 0.0
  %2073 = vmatpush1.msra.mxu0 0.0
  %2074 = vmatprep.subr.mxu0 0.0
  %2075 = vmatpush1.msra.mxu0 0.0
  %2076 = vmatprep.mubr.f32.mxu0 0.0
  %2077 = vmatmul.mubr.f32.gmra.mrb[0].mxu0 %v2010
  %v2078 = vpop.f32.mrb[0].mxu0
  %v2079 = vadd.f32 0.0, %v2078
  %v2080 = vpop.f32.mrb[0].mxu0
  %2081 = vdwg.mxu0
  %2082 = vmatprep.subr.mxu0 0.0
  %2083 = vmatpush1.msra.mxu0 %v975
  %2084 = vmatprep.subr.mxu0 0.0
  %2085 = vmatpush1.msra.mxu0 %v976
  %2086 = vmatprep.subr.mxu0 0.0
  %2087 = vmatpush1.msra.mxu0 %v977
  %2088 = vmatprep.subr.mxu0 0.0
  %2089 = vmatpush1.msra.mxu0 %v978
  %2090 = vmatprep.subr.mxu0 0.0
  %2091 = vmatpush1.msra.mxu0 0.0
  %2092 = vmatprep.subr.mxu0 0.0
  %2093 = vmatpush1.msra.mxu0 0.0
  %2094 = vmatprep.subr.mxu0 0.0
  %2095 = vmatpush1.msra.mxu0 0.0
  %2096 = vmatprep.subr.mxu0 0.0
  %2097 = vmatpush1.msra.mxu0 0.0
  %2098 = vmatprep.subr.mxu0 0.0
  %2099 = vmatpush1.msra.mxu0 0.0
  %2100 = vmatprep.subr.mxu0 0.0
  %2101 = vmatpush1.msra.mxu0 0.0
  %2102 = vmatprep.subr.mxu0 0.0
  %2103 = vmatpush1.msra.mxu0 0.0
  %2104 = vmatprep.subr.mxu0 0.0
  %2105 = vmatpush1.msra.mxu0 0.0
  %2106 = vmatprep.subr.mxu0 0.0
  %2107 = vmatpush1.msra.mxu0 0.0
  %2108 = vmatprep.subr.mxu0 0.0
  %2109 = vmatpush1.msra.mxu0 0.0
  %2110 = vmatprep.subr.mxu0 0.0
  %2111 = vmatpush1.msra.mxu0 0.0
  %2112 = vmatprep.subr.mxu0 0.0
  %2113 = vmatpush1.msra.mxu0 0.0
  %2114 = vmatprep.subr.mxu0 0.0
  %2115 = vmatpush1.msra.mxu0 0.0
  %2116 = vmatprep.subr.mxu0 0.0
  %2117 = vmatpush1.msra.mxu0 0.0
  %2118 = vmatprep.subr.mxu0 0.0
  %2119 = vmatpush1.msra.mxu0 0.0
  %2120 = vmatprep.subr.mxu0 0.0
  %2121 = vmatpush1.msra.mxu0 0.0
  %2122 = vmatprep.subr.mxu0 0.0
  %2123 = vmatpush1.msra.mxu0 0.0
  %2124 = vmatprep.subr.mxu0 0.0
  %2125 = vmatpush1.msra.mxu0 0.0
  %2126 = vmatprep.subr.mxu0 0.0
  %2127 = vmatpush1.msra.mxu0 0.0
  %2128 = vmatprep.subr.mxu0 0.0
  %2129 = vmatpush1.msra.mxu0 0.0
  %2130 = vmatprep.subr.mxu0 0.0
  %2131 = vmatpush1.msra.mxu0 0.0
  %2132 = vmatprep.subr.mxu0 0.0
  %2133 = vmatpush1.msra.mxu0 0.0
  %2134 = vmatprep.subr.mxu0 0.0
  %2135 = vmatpush1.msra.mxu0 0.0
  %2136 = vmatprep.subr.mxu0 0.0
  %2137 = vmatpush1.msra.mxu0 0.0
  %2138 = vmatprep.subr.mxu0 0.0
  %2139 = vmatpush1.msra.mxu0 0.0
  %2140 = vmatprep.subr.mxu0 0.0
  %2141 = vmatpush1.msra.mxu0 0.0
  %2142 = vmatprep.subr.mxu0 0.0
  %2143 = vmatpush1.msra.mxu0 0.0
  %2144 = vmatprep.subr.mxu0 0.0
  %2145 = vmatpush1.msra.mxu0 0.0
  %2146 = vmatprep.mubr.f32.mxu0 0.0
  %2147 = vmatmul.mubr.f32.gmra.mrb[0].mxu0 %v877
  %v2148 = vpop.f32.mrb[0].mxu0
  %v2149 = vadd.f32 %v2079, %v2148
  %v2150 = vpop.f32.mrb[0].mxu0
  %2151 = vdwg.mxu0
  %v2152 = vadd.f32 %v2149, %v990
  %v2153 = vxor.u32 %v2152, 2147483648
  %v2154 = vmul.f32 %v2153, 1.442695
  %v2155 = vpow.pop %v2154
  %v2156 = vadd.f32 %v2155, 1.0
  %v2157 = vrcp.pop %v2156
  %v2158 = vmul.f32 1.0, %v2157
  %v2159 = vtanh.pop %v2152
  %v2160 = vmul.f32 %v2158, %v2000
  %2162 = vrot.lane.b32.xlu0 %v2159, 64
  %v2163 = vpop.permute.xlu0 %2162
  %v2165 = vmul.f32 %v2158, %v2163
  %2167 = vrot.lane.b32.xlu0 %v2165, 32
  %v2168 = vpop.permute.xlu0 %2167
  %v2170 = vadd.f32 %v2160, %v2168
  %v2171 = vtanh.pop %v2170
  %2173 = vrot.lane.b32.xlu0 %v2171, 64
  %v2174 = vpop.permute.xlu0 %2173
  %v2176 = vmul.f32 %v2158, %v2174
  %2178 = vrot.lane.b32.xlu0 %v2176, 32
  %v2179 = vpop.permute.xlu0 %2178
  %v2180 = vsel %vm42, %v2179, 0
  %2182 = vmatprep.subr.mxu0 0.0
  %2183 = vmatpush1.msra.mxu0 %v980
  %2184 = vmatprep.subr.mxu0 0.0
  %2185 = vmatpush1.msra.mxu0 %v981
  %2186 = vmatprep.subr.mxu0 0.0
  %2187 = vmatpush1.msra.mxu0 %v982
  %2188 = vmatprep.subr.mxu0 0.0
  %2189 = vmatpush1.msra.mxu0 %v983
  %2190 = vmatprep.subr.mxu0 0.0
  %2191 = vmatpush1.msra.mxu0 0.0
  %2192 = vmatprep.subr.mxu0 0.0
  %2193 = vmatpush1.msra.mxu0 0.0
  %2194 = vmatprep.subr.mxu0 0.0
  %2195 = vmatpush1.msra.mxu0 0.0
  %2196 = vmatprep.subr.mxu0 0.0
  %2197 = vmatpush1.msra.mxu0 0.0
  %2198 = vmatprep.subr.mxu0 0.0
  %2199 = vmatpush1.msra.mxu0 0.0
  %2200 = vmatprep.subr.mxu0 0.0
  %2201 = vmatpush1.msra.mxu0 0.0
  %2202 = vmatprep.subr.mxu0 0.0
  %2203 = vmatpush1.msra.mxu0 0.0
  %2204 = vmatprep.subr.mxu0 0.0
  %2205 = vmatpush1.msra.mxu0 0.0
  %2206 = vmatprep.subr.mxu0 0.0
  %2207 = vmatpush1.msra.mxu0 0.0
  %2208 = vmatprep.subr.mxu0 0.0
  %2209 = vmatpush1.msra.mxu0 0.0
  %2210 = vmatprep.subr.mxu0 0.0
  %2211 = vmatpush1.msra.mxu0 0.0
  %2212 = vmatprep.subr.mxu0 0.0
  %2213 = vmatpush1.msra.mxu0 0.0
  %2214 = vmatprep.subr.mxu0 0.0
  %2215 = vmatpush1.msra.mxu0 0.0
  %2216 = vmatprep.subr.mxu0 0.0
  %2217 = vmatpush1.msra.mxu0 0.0
  %2218 = vmatprep.subr.mxu0 0.0
  %2219 = vmatpush1.msra.mxu0 0.0
  %2220 = vmatprep.subr.mxu0 0.0
  %2221 = vmatpush1.msra.mxu0 0.0
  %2222 = vmatprep.subr.mxu0 0.0
  %2223 = vmatpush1.msra.mxu0 0.0
  %2224 = vmatprep.subr.mxu0 0.0
  %2225 = vmatpush1.msra.mxu0 0.0
  %2226 = vmatprep.subr.mxu0 0.0
  %2227 = vmatpush1.msra.mxu0 0.0
  %2228 = vmatprep.subr.mxu0 0.0
  %2229 = vmatpush1.msra.mxu0 0.0
  %2230 = vmatprep.subr.mxu0 0.0
  %2231 = vmatpush1.msra.mxu0 0.0
  %2232 = vmatprep.subr.mxu0 0.0
  %2233 = vmatpush1.msra.mxu0 0.0
  %2234 = vmatprep.subr.mxu0 0.0
  %2235 = vmatpush1.msra.mxu0 0.0
  %2236 = vmatprep.subr.mxu0 0.0
  %2237 = vmatpush1.msra.mxu0 0.0
  %2238 = vmatprep.subr.mxu0 0.0
  %2239 = vmatpush1.msra.mxu0 0.0
  %2240 = vmatprep.subr.mxu0 0.0
  %2241 = vmatpush1.msra.mxu0 0.0
  %2242 = vmatprep.subr.mxu0 0.0
  %2243 = vmatpush1.msra.mxu0 0.0
  %2244 = vmatprep.subr.mxu0 0.0
  %2245 = vmatpush1.msra.mxu0 0.0
  %2246 = vmatprep.mubr.f32.mxu0 0.0
  %2247 = vmatmul.mubr.f32.gmra.mrb[0].mxu0 %v2180
  %v2248 = vpop.f32.mrb[0].mxu0
  %v2249 = vadd.f32 0.0, %v2248
  %v2250 = vpop.f32.mrb[0].mxu0
  %2251 = vdwg.mxu0
  %2253 = vrot.lane.b32.xlu0 %v973, 32
  %v2254 = vpop.permute.xlu0 %2253
  %v2255 = vsel %vm42, %v2254, 0
  %2257 = vmatprep.subr.mxu0 0.0
  %2258 = vmatpush1.msra.mxu0 %v975
  %2259 = vmatprep.subr.mxu0 0.0
  %2260 = vmatpush1.msra.mxu0 %v976
  %2261 = vmatprep.subr.mxu0 0.0
  %2262 = vmatpush1.msra.mxu0 %v977
  %2263 = vmatprep.subr.mxu0 0.0
  %2264 = vmatpush1.msra.mxu0 %v978
  %2265 = vmatprep.subr.mxu0 0.0
  %2266 = vmatpush1.msra.mxu0 0.0
  %2267 = vmatprep.subr.mxu0 0.0
  %2268 = vmatpush1.msra.mxu0 0.0
  %2269 = vmatprep.subr.mxu0 0.0
  %2270 = vmatpush1.msra.mxu0 0.0
  %2271 = vmatprep.subr.mxu0 0.0
  %2272 = vmatpush1.msra.mxu0 0.0
  %2273 = vmatprep.subr.mxu0 0.0
  %2274 = vmatpush1.msra.mxu0 0.0
  %2275 = vmatprep.subr.mxu0 0.0
  %2276 = vmatpush1.msra.mxu0 0.0
  %2277 = vmatprep.subr.mxu0 0.0
  %2278 = vmatpush1.msra.mxu0 0.0
  %2279 = vmatprep.subr.mxu0 0.0
  %2280 = vmatpush1.msra.mxu0 0.0
  %2281 = vmatprep.subr.mxu0 0.0
  %2282 = vmatpush1.msra.mxu0 0.0
  %2283 = vmatprep.subr.mxu0 0.0
  %2284 = vmatpush1.msra.mxu0 0.0
  %2285 = vmatprep.subr.mxu0 0.0
  %2286 = vmatpush1.msra.mxu0 0.0
  %2287 = vmatprep.subr.mxu0 0.0
  %2288 = vmatpush1.msra.mxu0 0.0
  %2289 = vmatprep.subr.mxu0 0.0
  %2290 = vmatpush1.msra.mxu0 0.0
  %2291 = vmatprep.subr.mxu0 0.0
  %2292 = vmatpush1.msra.mxu0 0.0
  %2293 = vmatprep.subr.mxu0 0.0
  %2294 = vmatpush1.msra.mxu0 0.0
  %2295 = vmatprep.subr.mxu0 0.0
  %2296 = vmatpush1.msra.mxu0 0.0
  %2297 = vmatprep.subr.mxu0 0.0
  %2298 = vmatpush1.msra.mxu0 0.0
  %2299 = vmatprep.subr.mxu0 0.0
  %2300 = vmatpush1.msra.mxu0 0.0
  %2301 = vmatprep.subr.mxu0 0.0
  %2302 = vmatpush1.msra.mxu0 0.0
  %2303 = vmatprep.subr.mxu0 0.0
  %2304 = vmatpush1.msra.mxu0 0.0
  %2305 = vmatprep.subr.mxu0 0.0
  %2306 = vmatpush1.msra.mxu0 0.0
  %2307 = vmatprep.subr.mxu0 0.0
  %2308 = vmatpush1.msra.mxu0 0.0
  %2309 = vmatprep.subr.mxu0 0.0
  %2310 = vmatpush1.msra.mxu0 0.0
  %2311 = vmatprep.subr.mxu0 0.0
  %2312 = vmatpush1.msra.mxu0 0.0
  %2313 = vmatprep.subr.mxu0 0.0
  %2314 = vmatpush1.msra.mxu0 0.0
  %2315 = vmatprep.subr.mxu0 0.0
  %2316 = vmatpush1.msra.mxu0 0.0
  %2317 = vmatprep.subr.mxu0 0.0
  %2318 = vmatpush1.msra.mxu0 0.0
  %2319 = vmatprep.subr.mxu0 0.0
  %2320 = vmatpush1.msra.mxu0 0.0
  %2321 = vmatprep.mubr.f32.mxu0 0.0
  %2322 = vmatmul.mubr.f32.gmra.mrb[0].mxu0 %v2255
  %v2323 = vpop.f32.mrb[0].mxu0
  %v2324 = vadd.f32 %v2249, %v2323
  %v2325 = vpop.f32.mrb[0].mxu0
  %2326 = vdwg.mxu0
  %v2327 = vadd.f32 %v2324, %v990
  %v2328 = vxor.u32 %v2327, 2147483648
  %v2329 = vmul.f32 %v2328, 1.442695
  %v2330 = vpow.pop %v2329
  %v2331 = vadd.f32 %v2330, 1.0
  %v2332 = vrcp.pop %v2331
  %v2333 = vmul.f32 1.0, %v2332
  %v2334 = vtanh.pop %v2327
  %v2335 = vmul.f32 %v2333, %v2170
  %2337 = vrot.lane.b32.xlu0 %v2334, 64
  %v2338 = vpop.permute.xlu0 %2337
  %v2340 = vmul.f32 %v2333, %v2338
  %2342 = vrot.lane.b32.xlu0 %v2340, 32
  %v2343 = vpop.permute.xlu0 %2342
  %v2345 = vadd.f32 %v2335, %v2343
  %v2346 = vtanh.pop %v2345
  %2348 = vrot.lane.b32.xlu0 %v2346, 64
  %v2349 = vpop.permute.xlu0 %2348
  %v2351 = vmul.f32 %v2333, %v2349
  %s2352 = scalar_lea.vmem %s1, 64
  %v2353 = vld [vmem:[%s2352] sm:$0xff]
  %v2354 = vld [vmem:[%s2352 + $0x8] sm:$0xff]
  %v2355 = vld [vmem:[%s2352 + $0x10] sm:$0xff]
  %v2356 = vld [vmem:[%s2352 + $0x18] sm:$0xff]
  %s2357 = scalar_lea.vmem %s2, 64
  %v2358 = vld [vmem:[%s2357] sm:$0xff]
  %v2359 = vld [vmem:[%s2357 + $0x8] sm:$0xff]
  %v2360 = vld [vmem:[%s2357 + $0x10] sm:$0xff]
  %v2361 = vld [vmem:[%s2357 + $0x18] sm:$0xff]
  %s2362 = scalar_lea.vmem %s3, 2
  %v2363 = vld [vmem:[%s2362] sm:$0x1]
  %v2365 = vlaneseq
  %v2366 = vshrl.u32 %v2365, 7
  %v2367 = vsub.s32 0, %v2366
  %v2368 = vrot.slane %v2363, %v2367
  %2370 = vmatprep.subr.mxu0 0.0
  %2371 = vmatpush1.msra.mxu0 %v2358
  %2372 = vmatprep.subr.mxu0 0.0
  %2373 = vmatpush1.msra.mxu0 %v2359
  %2374 = vmatprep.subr.mxu0 0.0
  %2375 = vmatpush1.msra.mxu0 %v2360
  %2376 = vmatprep.subr.mxu0 0.0
  %2377 = vmatpush1.msra.mxu0 %v2361
  %2378 = vmatprep.subr.mxu0 0.0
  %2379 = vmatpush1.msra.mxu0 0.0
  %2380 = vmatprep.subr.mxu0 0.0
  %2381 = vmatpush1.msra.mxu0 0.0
  %2382 = vmatprep.subr.mxu0 0.0
  %2383 = vmatpush1.msra.mxu0 0.0
  %2384 = vmatprep.subr.mxu0 0.0
  %2385 = vmatpush1.msra.mxu0 0.0
  %2386 = vmatprep.subr.mxu0 0.0
  %2387 = vmatpush1.msra.mxu0 0.0
  %2388 = vmatprep.subr.mxu0 0.0
  %2389 = vmatpush1.msra.mxu0 0.0
  %2390 = vmatprep.subr.mxu0 0.0
  %2391 = vmatpush1.msra.mxu0 0.0
  %2392 = vmatprep.subr.mxu0 0.0
  %2393 = vmatpush1.msra.mxu0 0.0
  %2394 = vmatprep.subr.mxu0 0.0
  %2395 = vmatpush1.msra.mxu0 0.0
  %2396 = vmatprep.subr.mxu0 0.0
  %2397 = vmatpush1.msra.mxu0 0.0
  %2398 = vmatprep.subr.mxu0 0.0
  %2399 = vmatpush1.msra.mxu0 0.0
  %2400 = vmatprep.subr.mxu0 0.0
  %2401 = vmatpush1.msra.mxu0 0.0
  %2402 = vmatprep.subr.mxu0 0.0
  %2403 = vmatpush1.msra.mxu0 0.0
  %2404 = vmatprep.subr.mxu0 0.0
  %2405 = vmatpush1.msra.mxu0 0.0
  %2406 = vmatprep.subr.mxu0 0.0
  %2407 = vmatpush1.msra.mxu0 0.0
  %2408 = vmatprep.subr.mxu0 0.0
  %2409 = vmatpush1.msra.mxu0 0.0
  %2410 = vmatprep.subr.mxu0 0.0
  %2411 = vmatpush1.msra.mxu0 0.0
  %2412 = vmatprep.subr.mxu0 0.0
  %2413 = vmatpush1.msra.mxu0 0.0
  %2414 = vmatprep.subr.mxu0 0.0
  %2415 = vmatpush1.msra.mxu0 0.0
  %2416 = vmatprep.subr.mxu0 0.0
  %2417 = vmatpush1.msra.mxu0 0.0
  %2418 = vmatprep.subr.mxu0 0.0
  %2419 = vmatpush1.msra.mxu0 0.0
  %2420 = vmatprep.subr.mxu0 0.0
  %2421 = vmatpush1.msra.mxu0 0.0
  %2422 = vmatprep.subr.mxu0 0.0
  %2423 = vmatpush1.msra.mxu0 0.0
  %2424 = vmatprep.subr.mxu0 0.0
  %2425 = vmatpush1.msra.mxu0 0.0
  %2426 = vmatprep.subr.mxu0 0.0
  %2427 = vmatpush1.msra.mxu0 0.0
  %2428 = vmatprep.subr.mxu0 0.0
  %2429 = vmatpush1.msra.mxu0 0.0
  %2430 = vmatprep.subr.mxu0 0.0
  %2431 = vmatpush1.msra.mxu0 0.0
  %2432 = vmatprep.subr.mxu0 0.0
  %2433 = vmatpush1.msra.mxu0 0.0
  %2434 = vmatprep.mubr.f32.mxu0 0.0
  %2435 = vmatmul.mubr.f32.gmra.mrb[0].mxu0 %v177
  %v2436 = vpop.f32.mrb[0].mxu0
  %v2437 = vadd.f32 0.0, %v2436
  %v2438 = vpop.f32.mrb[0].mxu0
  %2439 = vdwg.mxu0
  %2440 = vmatprep.subr.mxu0 0.0
  %2441 = vmatpush1.msra.mxu0 %v2353
  %2442 = vmatprep.subr.mxu0 0.0
  %2443 = vmatpush1.msra.mxu0 %v2354
  %2444 = vmatprep.subr.mxu0 0.0
  %2445 = vmatpush1.msra.mxu0 %v2355
  %2446 = vmatprep.subr.mxu0 0.0
  %2447 = vmatpush1.msra.mxu0 %v2356
  %2448 = vmatprep.subr.mxu0 0.0
  %2449 = vmatpush1.msra.mxu0 0.0
  %2450 = vmatprep.subr.mxu0 0.0
  %2451 = vmatpush1.msra.mxu0 0.0
  %2452 = vmatprep.subr.mxu0 0.0
  %2453 = vmatpush1.msra.mxu0 0.0
  %2454 = vmatprep.subr.mxu0 0.0
  %2455 = vmatpush1.msra.mxu0 0.0
  %2456 = vmatprep.subr.mxu0 0.0
  %2457 = vmatpush1.msra.mxu0 0.0
  %2458 = vmatprep.subr.mxu0 0.0
  %2459 = vmatpush1.msra.mxu0 0.0
  %2460 = vmatprep.subr.mxu0 0.0
  %2461 = vmatpush1.msra.mxu0 0.0
  %2462 = vmatprep.subr.mxu0 0.0
  %2463 = vmatpush1.msra.mxu0 0.0
  %2464 = vmatprep.subr.mxu0 0.0
  %2465 = vmatpush1.msra.mxu0 0.0
  %2466 = vmatprep.subr.mxu0 0.0
  %2467 = vmatpush1.msra.mxu0 0.0
  %2468 = vmatprep.subr.mxu0 0.0
  %2469 = vmatpush1.msra.mxu0 0.0
  %2470 = vmatprep.subr.mxu0 0.0
  %2471 = vmatpush1.msra.mxu0 0.0
  %2472 = vmatprep.subr.mxu0 0.0
  %2473 = vmatpush1.msra.mxu0 0.0
  %2474 = vmatprep.subr.mxu0 0.0
  %2475 = vmatpush1.msra.mxu0 0.0
  %2476 = vmatprep.subr.mxu0 0.0
  %2477 = vmatpush1.msra.mxu0 0.0
  %2478 = vmatprep.subr.mxu0 0.0
  %2479 = vmatpush1.msra.mxu0 0.0
  %2480 = vmatprep.subr.mxu0 0.0
  %2481 = vmatpush1.msra.mxu0 0.0
  %2482 = vmatprep.subr.mxu0 0.0
  %2483 = vmatpush1.msra.mxu0 0.0
  %2484 = vmatprep.subr.mxu0 0.0
  %2485 = vmatpush1.msra.mxu0 0.0
  %2486 = vmatprep.subr.mxu0 0.0
  %2487 = vmatpush1.msra.mxu0 0.0
  %2488 = vmatprep.subr.mxu0 0.0
  %2489 = vmatpush1.msra.mxu0 0.0
  %2490 = vmatprep.subr.mxu0 0.0
  %2491 = vmatpush1.msra.mxu0 0.0
  %2492 = vmatprep.subr.mxu0 0.0
  %2493 = vmatpush1.msra.mxu0 0.0
  %2494 = vmatprep.subr.mxu0 0.0
  %2495 = vmatpush1.msra.mxu0 0.0
  %2496 = vmatprep.subr.mxu0 0.0
  %2497 = vmatpush1.msra.mxu0 0.0
  %2498 = vmatprep.subr.mxu0 0.0
  %2499 = vmatpush1.msra.mxu0 0.0
  %2500 = vmatprep.subr.mxu0 0.0
  %2501 = vmatpush1.msra.mxu0 0.0
  %2502 = vmatprep.subr.mxu0 0.0
  %2503 = vmatpush1.msra.mxu0 0.0
  %2504 = vmatprep.mubr.f32.mxu0 0.0
  %2505 = vmatmul.mubr.f32.gmra.mrb[0].mxu0 %v1160
  %v2506 = vpop.f32.mrb[0].mxu0
  %v2507 = vadd.f32 %v2437, %v2506
  %v2508 = vpop.f32.mrb[0].mxu0
  %2509 = vdwg.mxu0
  %v2510 = vadd.f32 %v2507, %v2368
  %v2511 = vxor.u32 %v2510, 2147483648
  %v2512 = vmul.f32 %v2511, 1.442695
  %v2513 = vpow.pop %v2512
  %v2514 = vadd.f32 %v2513, 1.0
  %v2515 = vrcp.pop %v2514
  %v2516 = vmul.f32 1.0, %v2515
  %v2517 = vtanh.pop %v2510
  %v2518 = vmul.f32 %v2516, 0.0
  %2520 = vrot.lane.b32.xlu0 %v2517, 64
  %v2521 = vpop.permute.xlu0 %2520
  %v2523 = vmul.f32 %v2516, %v2521
  %2525 = vrot.lane.b32.xlu0 %v2523, 32
  %v2526 = vpop.permute.xlu0 %2525
  %v2528 = vadd.f32 %v2518, %v2526
  %v2529 = vtanh.pop %v2528
  %2531 = vrot.lane.b32.xlu0 %v2529, 64
  %v2532 = vpop.permute.xlu0 %2531
  %v2534 = vmul.f32 %v2516, %v2532
  %2536 = vrot.lane.b32.xlu0 %v2534, 32
  %v2537 = vpop.permute.xlu0 %2536
  %v2538 = vsel %vm42, %v2537, 0
  %2540 = vmatprep.subr.mxu0 0.0
  %2541 = vmatpush1.msra.mxu0 %v2358
  %2542 = vmatprep.subr.mxu0 0.0
  %2543 = vmatpush1.msra.mxu0 %v2359
  %2544 = vmatprep.subr.mxu0 0.0
  %2545 = vmatpush1.msra.mxu0 %v2360
  %2546 = vmatprep.subr.mxu0 0.0
  %2547 = vmatpush1.msra.mxu0 %v2361
  %2548 = vmatprep.subr.mxu0 0.0
  %2549 = vmatpush1.msra.mxu0 0.0
  %2550 = vmatprep.subr.mxu0 0.0
  %2551 = vmatpush1.msra.mxu0 0.0
  %2552 = vmatprep.subr.mxu0 0.0
  %2553 = vmatpush1.msra.mxu0 0.0
  %2554 = vmatprep.subr.mxu0 0.0
  %2555 = vmatpush1.msra.mxu0 0.0
  %2556 = vmatprep.subr.mxu0 0.0
  %2557 = vmatpush1.msra.mxu0 0.0
  %2558 = vmatprep.subr.mxu0 0.0
  %2559 = vmatpush1.msra.mxu0 0.0
  %2560 = vmatprep.subr.mxu0 0.0
  %2561 = vmatpush1.msra.mxu0 0.0
  %2562 = vmatprep.subr.mxu0 0.0
  %2563 = vmatpush1.msra.mxu0 0.0
  %2564 = vmatprep.subr.mxu0 0.0
  %2565 = vmatpush1.msra.mxu0 0.0
  %2566 = vmatprep.subr.mxu0 0.0
  %2567 = vmatpush1.msra.mxu0 0.0
  %2568 = vmatprep.subr.mxu0 0.0
  %2569 = vmatpush1.msra.mxu0 0.0
  %2570 = vmatprep.subr.mxu0 0.0
  %2571 = vmatpush1.msra.mxu0 0.0
  %2572 = vmatprep.subr.mxu0 0.0
  %2573 = vmatpush1.msra.mxu0 0.0
  %2574 = vmatprep.subr.mxu0 0.0
  %2575 = vmatpush1.msra.mxu0 0.0
  %2576 = vmatprep.subr.mxu0 0.0
  %2577 = vmatpush1.msra.mxu0 0.0
  %2578 = vmatprep.subr.mxu0 0.0
  %2579 = vmatpush1.msra.mxu0 0.0
  %2580 = vmatprep.subr.mxu0 0.0
  %2581 = vmatpush1.msra.mxu0 0.0
  %2582 = vmatprep.subr.mxu0 0.0
  %2583 = vmatpush1.msra.mxu0 0.0
  %2584 = vmatprep.subr.mxu0 0.0
  %2585 = vmatpush1.msra.mxu0 0.0
  %2586 = vmatprep.subr.mxu0 0.0
  %2587 = vmatpush1.msra.mxu0 0.0
  %2588 = vmatprep.subr.mxu0 0.0
  %2589 = vmatpush1.msra.mxu0 0.0
  %2590 = vmatprep.subr.mxu0 0.0
  %2591 = vmatpush1.msra.mxu0 0.0
  %2592 = vmatprep.subr.mxu0 0.0
  %2593 = vmatpush1.msra.mxu0 0.0
  %2594 = vmatprep.subr.mxu0 0.0
  %2595 = vmatpush1.msra.mxu0 0.0
  %2596 = vmatprep.subr.mxu0 0.0
  %2597 = vmatpush1.msra.mxu0 0.0
  %2598 = vmatprep.subr.mxu0 0.0
  %2599 = vmatpush1.msra.mxu0 0.0
  %2600 = vmatprep.subr.mxu0 0.0
  %2601 = vmatpush1.msra.mxu0 0.0
  %2602 = vmatprep.subr.mxu0 0.0
  %2603 = vmatpush1.msra.mxu0 0.0
  %2604 = vmatprep.mubr.f32.mxu0 0.0
  %2605 = vmatmul.mubr.f32.gmra.mrb[0].mxu0 %v2538
  %v2606 = vpop.f32.mrb[0].mxu0
  %v2607 = vadd.f32 0.0, %v2606
  %v2608 = vpop.f32.mrb[0].mxu0
  %2609 = vdwg.mxu0
  %2610 = vmatprep.subr.mxu0 0.0
  %2611 = vmatpush1.msra.mxu0 %v2353
  %2612 = vmatprep.subr.mxu0 0.0
  %2613 = vmatpush1.msra.mxu0 %v2354
  %2614 = vmatprep.subr.mxu0 0.0
  %2615 = vmatpush1.msra.mxu0 %v2355
  %2616 = vmatprep.subr.mxu0 0.0
  %2617 = vmatpush1.msra.mxu0 %v2356
  %2618 = vmatprep.subr.mxu0 0.0
  %2619 = vmatpush1.msra.mxu0 0.0
  %2620 = vmatprep.subr.mxu0 0.0
  %2621 = vmatpush1.msra.mxu0 0.0
  %2622 = vmatprep.subr.mxu0 0.0
  %2623 = vmatpush1.msra.mxu0 0.0
  %2624 = vmatprep.subr.mxu0 0.0
  %2625 = vmatpush1.msra.mxu0 0.0
  %2626 = vmatprep.subr.mxu0 0.0
  %2627 = vmatpush1.msra.mxu0 0.0
  %2628 = vmatprep.subr.mxu0 0.0
  %2629 = vmatpush1.msra.mxu0 0.0
  %2630 = vmatprep.subr.mxu0 0.0
  %2631 = vmatpush1.msra.mxu0 0.0
  %2632 = vmatprep.subr.mxu0 0.0
  %2633 = vmatpush1.msra.mxu0 0.0
  %2634 = vmatprep.subr.mxu0 0.0
  %2635 = vmatpush1.msra.mxu0 0.0
  %2636 = vmatprep.subr.mxu0 0.0
  %2637 = vmatpush1.msra.mxu0 0.0
  %2638 = vmatprep.subr.mxu0 0.0
  %2639 = vmatpush1.msra.mxu0 0.0
  %2640 = vmatprep.subr.mxu0 0.0
  %2641 = vmatpush1.msra.mxu0 0.0
  %2642 = vmatprep.subr.mxu0 0.0
  %2643 = vmatpush1.msra.mxu0 0.0
  %2644 = vmatprep.subr.mxu0 0.0
  %2645 = vmatpush1.msra.mxu0 0.0
  %2646 = vmatprep.subr.mxu0 0.0
  %2647 = vmatpush1.msra.mxu0 0.0
  %2648 = vmatprep.subr.mxu0 0.0
  %2649 = vmatpush1.msra.mxu0 0.0
  %2650 = vmatprep.subr.mxu0 0.0
  %2651 = vmatpush1.msra.mxu0 0.0
  %2652 = vmatprep.subr.mxu0 0.0
  %2653 = vmatpush1.msra.mxu0 0.0
  %2654 = vmatprep.subr.mxu0 0.0
  %2655 = vmatpush1.msra.mxu0 0.0
  %2656 = vmatprep.subr.mxu0 0.0
  %2657 = vmatpush1.msra.mxu0 0.0
  %2658 = vmatprep.subr.mxu0 0.0
  %2659 = vmatpush1.msra.mxu0 0.0
  %2660 = vmatprep.subr.mxu0 0.0
  %2661 = vmatpush1.msra.mxu0 0.0
  %2662 = vmatprep.subr.mxu0 0.0
  %2663 = vmatpush1.msra.mxu0 0.0
  %2664 = vmatprep.subr.mxu0 0.0
  %2665 = vmatpush1.msra.mxu0 0.0
  %2666 = vmatprep.subr.mxu0 0.0
  %2667 = vmatpush1.msra.mxu0 0.0
  %2668 = vmatprep.subr.mxu0 0.0
  %2669 = vmatpush1.msra.mxu0 0.0
  %2670 = vmatprep.subr.mxu0 0.0
  %2671 = vmatpush1.msra.mxu0 0.0
  %2672 = vmatprep.subr.mxu0 0.0
  %2673 = vmatpush1.msra.mxu0 0.0
  %2674 = vmatprep.mubr.f32.mxu0 0.0
  %2675 = vmatmul.mubr.f32.gmra.mrb[0].mxu0 %v1330
  %v2676 = vpop.f32.mrb[0].mxu0
  %v2677 = vadd.f32 %v2607, %v2676
  %v2678 = vpop.f32.mrb[0].mxu0
  %2679 = vdwg.mxu0
  %v2680 = vadd.f32 %v2677, %v2368
  %v2681 = vxor.u32 %v2680, 2147483648
  %v2682 = vmul.f32 %v2681, 1.442695
  %v2683 = vpow.pop %v2682
  %v2684 = vadd.f32 %v2683, 1.0
  %v2685 = vrcp.pop %v2684
  %v2686 = vmul.f32 1.0, %v2685
  %v2687 = vtanh.pop %v2680
  %v2688 = vmul.f32 %v2686, %v2528
  %2690 = vrot.lane.b32.xlu0 %v2687, 64
  %v2691 = vpop.permute.xlu0 %2690
  %v2693 = vmul.f32 %v2686, %v2691
  %2695 = vrot.lane.b32.xlu0 %v2693, 32
  %v2696 = vpop.permute.xlu0 %2695
  %v2698 = vadd.f32 %v2688, %v2696
  %v2699 = vtanh.pop %v2698
  %2701 = vrot.lane.b32.xlu0 %v2699, 64
  %v2702 = vpop.permute.xlu0 %2701
  %v2704 = vmul.f32 %v2686, %v2702
  %2706 = vrot.lane.b32.xlu0 %v2704, 32
  %v2707 = vpop.permute.xlu0 %2706
  %v2708 = vsel %vm42, %v2707, 0
  %2710 = vmatprep.subr.mxu0 0.0
  %2711 = vmatpush1.msra.mxu0 %v2358
  %2712 = vmatprep.subr.mxu0 0.0
  %2713 = vmatpush1.msra.mxu0 %v2359
  %2714 = vmatprep.subr.mxu0 0.0
  %2715 = vmatpush1.msra.mxu0 %v2360
  %2716 = vmatprep.subr.mxu0 0.0
  %2717 = vmatpush1.msra.mxu0 %v2361
  %2718 = vmatprep.subr.mxu0 0.0
  %2719 = vmatpush1.msra.mxu0 0.0
  %2720 = vmatprep.subr.mxu0 0.0
  %2721 = vmatpush1.msra.mxu0 0.0
  %2722 = vmatprep.subr.mxu0 0.0
  %2723 = vmatpush1.msra.mxu0 0.0
  %2724 = vmatprep.subr.mxu0 0.0
  %2725 = vmatpush1.msra.mxu0 0.0
  %2726 = vmatprep.subr.mxu0 0.0
  %2727 = vmatpush1.msra.mxu0 0.0
  %2728 = vmatprep.subr.mxu0 0.0
  %2729 = vmatpush1.msra.mxu0 0.0
  %2730 = vmatprep.subr.mxu0 0.0
  %2731 = vmatpush1.msra.mxu0 0.0
  %2732 = vmatprep.subr.mxu0 0.0
  %2733 = vmatpush1.msra.mxu0 0.0
  %2734 = vmatprep.subr.mxu0 0.0
  %2735 = vmatpush1.msra.mxu0 0.0
  %2736 = vmatprep.subr.mxu0 0.0
  %2737 = vmatpush1.msra.mxu0 0.0
  %2738 = vmatprep.subr.mxu0 0.0
  %2739 = vmatpush1.msra.mxu0 0.0
  %2740 = vmatprep.subr.mxu0 0.0
  %2741 = vmatpush1.msra.mxu0 0.0
  %2742 = vmatprep.subr.mxu0 0.0
  %2743 = vmatpush1.msra.mxu0 0.0
  %2744 = vmatprep.subr.mxu0 0.0
  %2745 = vmatpush1.msra.mxu0 0.0
  %2746 = vmatprep.subr.mxu0 0.0
  %2747 = vmatpush1.msra.mxu0 0.0
  %2748 = vmatprep.subr.mxu0 0.0
  %2749 = vmatpush1.msra.mxu0 0.0
  %2750 = vmatprep.subr.mxu0 0.0
  %2751 = vmatpush1.msra.mxu0 0.0
  %2752 = vmatprep.subr.mxu0 0.0
  %2753 = vmatpush1.msra.mxu0 0.0
  %2754 = vmatprep.subr.mxu0 0.0
  %2755 = vmatpush1.msra.mxu0 0.0
  %2756 = vmatprep.subr.mxu0 0.0
  %2757 = vmatpush1.msra.mxu0 0.0
  %2758 = vmatprep.subr.mxu0 0.0
  %2759 = vmatpush1.msra.mxu0 0.0
  %2760 = vmatprep.subr.mxu0 0.0
  %2761 = vmatpush1.msra.mxu0 0.0
  %2762 = vmatprep.subr.mxu0 0.0
  %2763 = vmatpush1.msra.mxu0 0.0
  %2764 = vmatprep.subr.mxu0 0.0
  %2765 = vmatpush1.msra.mxu0 0.0
  %2766 = vmatprep.subr.mxu0 0.0
  %2767 = vmatpush1.msra.mxu0 0.0
  %2768 = vmatprep.subr.mxu0 0.0
  %2769 = vmatpush1.msra.mxu0 0.0
  %2770 = vmatprep.subr.mxu0 0.0
  %2771 = vmatpush1.msra.mxu0 0.0
  %2772 = vmatprep.subr.mxu0 0.0
  %2773 = vmatpush1.msra.mxu0 0.0
  %2774 = vmatprep.mubr.f32.mxu0 0.0
  %2775 = vmatmul.mubr.f32.gmra.mrb[0].mxu0 %v2708
  %v2776 = vpop.f32.mrb[0].mxu0
  %v2777 = vadd.f32 0.0, %v2776
  %v2778 = vpop.f32.mrb[0].mxu0
  %2779 = vdwg.mxu0
  %2780 = vmatprep.subr.mxu0 0.0
  %2781 = vmatpush1.msra.mxu0 %v2353
  %2782 = vmatprep.subr.mxu0 0.0
  %2783 = vmatpush1.msra.mxu0 %v2354
  %2784 = vmatprep.subr.mxu0 0.0
  %2785 = vmatpush1.msra.mxu0 %v2355
  %2786 = vmatprep.subr.mxu0 0.0
  %2787 = vmatpush1.msra.mxu0 %v2356
  %2788 = vmatprep.subr.mxu0 0.0
  %2789 = vmatpush1.msra.mxu0 0.0
  %2790 = vmatprep.subr.mxu0 0.0
  %2791 = vmatpush1.msra.mxu0 0.0
  %2792 = vmatprep.subr.mxu0 0.0
  %2793 = vmatpush1.msra.mxu0 0.0
  %2794 = vmatprep.subr.mxu0 0.0
  %2795 = vmatpush1.msra.mxu0 0.0
  %2796 = vmatprep.subr.mxu0 0.0
  %2797 = vmatpush1.msra.mxu0 0.0
  %2798 = vmatprep.subr.mxu0 0.0
  %2799 = vmatpush1.msra.mxu0 0.0
  %2800 = vmatprep.subr.mxu0 0.0
  %2801 = vmatpush1.msra.mxu0 0.0
  %2802 = vmatprep.subr.mxu0 0.0
  %2803 = vmatpush1.msra.mxu0 0.0
  %2804 = vmatprep.subr.mxu0 0.0
  %2805 = vmatpush1.msra.mxu0 0.0
  %2806 = vmatprep.subr.mxu0 0.0
  %2807 = vmatpush1.msra.mxu0 0.0
  %2808 = vmatprep.subr.mxu0 0.0
  %2809 = vmatpush1.msra.mxu0 0.0
  %2810 = vmatprep.subr.mxu0 0.0
  %2811 = vmatpush1.msra.mxu0 0.0
  %2812 = vmatprep.subr.mxu0 0.0
  %2813 = vmatpush1.msra.mxu0 0.0
  %2814 = vmatprep.subr.mxu0 0.0
  %2815 = vmatpush1.msra.mxu0 0.0
  %2816 = vmatprep.subr.mxu0 0.0
  %2817 = vmatpush1.msra.mxu0 0.0
  %2818 = vmatprep.subr.mxu0 0.0
  %2819 = vmatpush1.msra.mxu0 0.0
  %2820 = vmatprep.subr.mxu0 0.0
  %2821 = vmatpush1.msra.mxu0 0.0
  %2822 = vmatprep.subr.mxu0 0.0
  %2823 = vmatpush1.msra.mxu0 0.0
  %2824 = vmatprep.subr.mxu0 0.0
  %2825 = vmatpush1.msra.mxu0 0.0
  %2826 = vmatprep.subr.mxu0 0.0
  %2827 = vmatpush1.msra.mxu0 0.0
  %2828 = vmatprep.subr.mxu0 0.0
  %2829 = vmatpush1.msra.mxu0 0.0
  %2830 = vmatprep.subr.mxu0 0.0
  %2831 = vmatpush1.msra.mxu0 0.0
  %2832 = vmatprep.subr.mxu0 0.0
  %2833 = vmatpush1.msra.mxu0 0.0
  %2834 = vmatprep.subr.mxu0 0.0
  %2835 = vmatpush1.msra.mxu0 0.0
  %2836 = vmatprep.subr.mxu0 0.0
  %2837 = vmatpush1.msra.mxu0 0.0
  %2838 = vmatprep.subr.mxu0 0.0
  %2839 = vmatpush1.msra.mxu0 0.0
  %2840 = vmatprep.subr.mxu0 0.0
  %2841 = vmatpush1.msra.mxu0 0.0
  %2842 = vmatprep.subr.mxu0 0.0
  %2843 = vmatpush1.msra.mxu0 0.0
  %2844 = vmatprep.mubr.f32.mxu0 0.0
  %2845 = vmatmul.mubr.f32.gmra.mrb[0].mxu0 %v1500
  %v2846 = vpop.f32.mrb[0].mxu0
  %v2847 = vadd.f32 %v2777, %v2846
  %v2848 = vpop.f32.mrb[0].mxu0
  %2849 = vdwg.mxu0
  %v2850 = vadd.f32 %v2847, %v2368
  %v2851 = vxor.u32 %v2850, 2147483648
  %v2852 = vmul.f32 %v2851, 1.442695
  %v2853 = vpow.pop %v2852
  %v2854 = vadd.f32 %v2853, 1.0
  %v2855 = vrcp.pop %v2854
  %v2856 = vmul.f32 1.0, %v2855
  %v2857 = vtanh.pop %v2850
  %v2858 = vmul.f32 %v2856, %v2698
  %2860 = vrot.lane.b32.xlu0 %v2857, 64
  %v2861 = vpop.permute.xlu0 %2860
  %v2863 = vmul.f32 %v2856, %v2861
  %2865 = vrot.lane.b32.xlu0 %v2863, 32
  %v2866 = vpop.permute.xlu0 %2865
  %v2868 = vadd.f32 %v2858, %v2866
  %v2869 = vtanh.pop %v2868
  %2871 = vrot.lane.b32.xlu0 %v2869, 64
  %v2872 = vpop.permute.xlu0 %2871
  %v2874 = vmul.f32 %v2856, %v2872
  %2876 = vrot.lane.b32.xlu0 %v2874, 32
  %v2877 = vpop.permute.xlu0 %2876
  %v2878 = vsel %vm42, %v2877, 0
  %2880 = vmatprep.subr.mxu0 0.0
  %2881 = vmatpush1.msra.mxu0 %v2358
  %2882 = vmatprep.subr.mxu0 0.0
  %2883 = vmatpush1.msra.mxu0 %v2359
  %2884 = vmatprep.subr.mxu0 0.0
  %2885 = vmatpush1.msra.mxu0 %v2360
  %2886 = vmatprep.subr.mxu0 0.0
  %2887 = vmatpush1.msra.mxu0 %v2361
  %2888 = vmatprep.subr.mxu0 0.0
  %2889 = vmatpush1.msra.mxu0 0.0
  %2890 = vmatprep.subr.mxu0 0.0
  %2891 = vmatpush1.msra.mxu0 0.0
  %2892 = vmatprep.subr.mxu0 0.0
  %2893 = vmatpush1.msra.mxu0 0.0
  %2894 = vmatprep.subr.mxu0 0.0
  %2895 = vmatpush1.msra.mxu0 0.0
  %2896 = vmatprep.subr.mxu0 0.0
  %2897 = vmatpush1.msra.mxu0 0.0
  %2898 = vmatprep.subr.mxu0 0.0
  %2899 = vmatpush1.msra.mxu0 0.0
  %2900 = vmatprep.subr.mxu0 0.0
  %2901 = vmatpush1.msra.mxu0 0.0
  %2902 = vmatprep.subr.mxu0 0.0
  %2903 = vmatpush1.msra.mxu0 0.0
  %2904 = vmatprep.subr.mxu0 0.0
  %2905 = vmatpush1.msra.mxu0 0.0
  %2906 = vmatprep.subr.mxu0 0.0
  %2907 = vmatpush1.msra.mxu0 0.0
  %2908 = vmatprep.subr.mxu0 0.0
  %2909 = vmatpush1.msra.mxu0 0.0
  %2910 = vmatprep.subr.mxu0 0.0
  %2911 = vmatpush1.msra.mxu0 0.0
  %2912 = vmatprep.subr.mxu0 0.0
  %2913 = vmatpush1.msra.mxu0 0.0
  %2914 = vmatprep.subr.mxu0 0.0
  %2915 = vmatpush1.msra.mxu0 0.0
  %2916 = vmatprep.subr.mxu0 0.0
  %2917 = vmatpush1.msra.mxu0 0.0
  %2918 = vmatprep.subr.mxu0 0.0
  %2919 = vmatpush1.msra.mxu0 0.0
  %2920 = vmatprep.subr.mxu0 0.0
  %2921 = vmatpush1.msra.mxu0 0.0
  %2922 = vmatprep.subr.mxu0 0.0
  %2923 = vmatpush1.msra.mxu0 0.0
  %2924 = vmatprep.subr.mxu0 0.0
  %2925 = vmatpush1.msra.mxu0 0.0
  %2926 = vmatprep.subr.mxu0 0.0
  %2927 = vmatpush1.msra.mxu0 0.0
  %2928 = vmatprep.subr.mxu0 0.0
  %2929 = vmatpush1.msra.mxu0 0.0
  %2930 = vmatprep.subr.mxu0 0.0
  %2931 = vmatpush1.msra.mxu0 0.0
  %2932 = vmatprep.subr.mxu0 0.0
  %2933 = vmatpush1.msra.mxu0 0.0
  %2934 = vmatprep.subr.mxu0 0.0
  %2935 = vmatpush1.msra.mxu0 0.0
  %2936 = vmatprep.subr.mxu0 0.0
  %2937 = vmatpush1.msra.mxu0 0.0
  %2938 = vmatprep.subr.mxu0 0.0
  %2939 = vmatpush1.msra.mxu0 0.0
  %2940 = vmatprep.subr.mxu0 0.0
  %2941 = vmatpush1.msra.mxu0 0.0
  %2942 = vmatprep.subr.mxu0 0.0
  %2943 = vmatpush1.msra.mxu0 0.0
  %2944 = vmatprep.mubr.f32.mxu0 0.0
  %2945 = vmatmul.mubr.f32.gmra.mrb[0].mxu0 %v2878
  %v2946 = vpop.f32.mrb[0].mxu0
  %v2947 = vadd.f32 0.0, %v2946
  %v2948 = vpop.f32.mrb[0].mxu0
  %2949 = vdwg.mxu0
  %2950 = vmatprep.subr.mxu0 0.0
  %2951 = vmatpush1.msra.mxu0 %v2353
  %2952 = vmatprep.subr.mxu0 0.0
  %2953 = vmatpush1.msra.mxu0 %v2354
  %2954 = vmatprep.subr.mxu0 0.0
  %2955 = vmatpush1.msra.mxu0 %v2355
  %2956 = vmatprep.subr.mxu0 0.0
  %2957 = vmatpush1.msra.mxu0 %v2356
  %2958 = vmatprep.subr.mxu0 0.0
  %2959 = vmatpush1.msra.mxu0 0.0
  %2960 = vmatprep.subr.mxu0 0.0
  %2961 = vmatpush1.msra.mxu0 0.0
  %2962 = vmatprep.subr.mxu0 0.0
  %2963 = vmatpush1.msra.mxu0 0.0
  %2964 = vmatprep.subr.mxu0 0.0
  %2965 = vmatpush1.msra.mxu0 0.0
  %2966 = vmatprep.subr.mxu0 0.0
  %2967 = vmatpush1.msra.mxu0 0.0
  %2968 = vmatprep.subr.mxu0 0.0
  %2969 = vmatpush1.msra.mxu0 0.0
  %2970 = vmatprep.subr.mxu0 0.0
  %2971 = vmatpush1.msra.mxu0 0.0
  %2972 = vmatprep.subr.mxu0 0.0
  %2973 = vmatpush1.msra.mxu0 0.0
  %2974 = vmatprep.subr.mxu0 0.0
  %2975 = vmatpush1.msra.mxu0 0.0
  %2976 = vmatprep.subr.mxu0 0.0
  %2977 = vmatpush1.msra.mxu0 0.0
  %2978 = vmatprep.subr.mxu0 0.0
  %2979 = vmatpush1.msra.mxu0 0.0
  %2980 = vmatprep.subr.mxu0 0.0
  %2981 = vmatpush1.msra.mxu0 0.0
  %2982 = vmatprep.subr.mxu0 0.0
  %2983 = vmatpush1.msra.mxu0 0.0
  %2984 = vmatprep.subr.mxu0 0.0
  %2985 = vmatpush1.msra.mxu0 0.0
  %2986 = vmatprep.subr.mxu0 0.0
  %2987 = vmatpush1.msra.mxu0 0.0
  %2988 = vmatprep.subr.mxu0 0.0
  %2989 = vmatpush1.msra.mxu0 0.0
  %2990 = vmatprep.subr.mxu0 0.0
  %2991 = vmatpush1.msra.mxu0 0.0
  %2992 = vmatprep.subr.mxu0 0.0
  %2993 = vmatpush1.msra.mxu0 0.0
  %2994 = vmatprep.subr.mxu0 0.0
  %2995 = vmatpush1.msra.mxu0 0.0
  %2996 = vmatprep.subr.mxu0 0.0
  %2997 = vmatpush1.msra.mxu0 0.0
  %2998 = vmatprep.subr.mxu0 0.0
  %2999 = vmatpush1.msra.mxu0 0.0
  %3000 = vmatprep.subr.mxu0 0.0
  %3001 = vmatpush1.msra.mxu0 0.0
  %3002 = vmatprep.subr.mxu0 0.0
  %3003 = vmatpush1.msra.mxu0 0.0
  %3004 = vmatprep.subr.mxu0 0.0
  %3005 = vmatpush1.msra.mxu0 0.0
  %3006 = vmatprep.subr.mxu0 0.0
  %3007 = vmatpush1.msra.mxu0 0.0
  %3008 = vmatprep.subr.mxu0 0.0
  %3009 = vmatpush1.msra.mxu0 0.0
  %3010 = vmatprep.subr.mxu0 0.0
  %3011 = vmatpush1.msra.mxu0 0.0
  %3012 = vmatprep.subr.mxu0 0.0
  %3013 = vmatpush1.msra.mxu0 0.0
  %3014 = vmatprep.mubr.f32.mxu0 0.0
  %3015 = vmatmul.mubr.f32.gmra.mrb[0].mxu0 %v1670
  %v3016 = vpop.f32.mrb[0].mxu0
  %v3017 = vadd.f32 %v2947, %v3016
  %v3018 = vpop.f32.mrb[0].mxu0
  %3019 = vdwg.mxu0
  %v3020 = vadd.f32 %v3017, %v2368
  %v3021 = vxor.u32 %v3020, 2147483648
  %v3022 = vmul.f32 %v3021, 1.442695
  %v3023 = vpow.pop %v3022
  %v3024 = vadd.f32 %v3023, 1.0
  %v3025 = vrcp.pop %v3024
  %v3026 = vmul.f32 1.0, %v3025
  %v3027 = vtanh.pop %v3020
  %v3028 = vmul.f32 %v3026, %v2868
  %3030 = vrot.lane.b32.xlu0 %v3027, 64
  %v3031 = vpop.permute.xlu0 %3030
  %v3033 = vmul.f32 %v3026, %v3031
  %3035 = vrot.lane.b32.xlu0 %v3033, 32
  %v3036 = vpop.permute.xlu0 %3035
  %v3038 = vadd.f32 %v3028, %v3036
  %v3039 = vtanh.pop %v3038
  %3041 = vrot.lane.b32.xlu0 %v3039, 64
  %v3042 = vpop.permute.xlu0 %3041
  %v3044 = vmul.f32 %v3026, %v3042
  %3046 = vrot.lane.b32.xlu0 %v3044, 32
  %v3047 = vpop.permute.xlu0 %3046
  %v3048 = vsel %vm42, %v3047, 0
  %3050 = vmatprep.subr.mxu0 0.0
  %3051 = vmatpush1.msra.mxu0 %v2358
  %3052 = vmatprep.subr.mxu0 0.0
  %3053 = vmatpush1.msra.mxu0 %v2359
  %3054 = vmatprep.subr.mxu0 0.0
  %3055 = vmatpush1.msra.mxu0 %v2360
  %3056 = vmatprep.subr.mxu0 0.0
  %3057 = vmatpush1.msra.mxu0 %v2361
  %3058 = vmatprep.subr.mxu0 0.0
  %3059 = vmatpush1.msra.mxu0 0.0
  %3060 = vmatprep.subr.mxu0 0.0
  %3061 = vmatpush1.msra.mxu0 0.0
  %3062 = vmatprep.subr.mxu0 0.0
  %3063 = vmatpush1.msra.mxu0 0.0
  %3064 = vmatprep.subr.mxu0 0.0
  %3065 = vmatpush1.msra.mxu0 0.0
  %3066 = vmatprep.subr.mxu0 0.0
  %3067 = vmatpush1.msra.mxu0 0.0
  %3068 = vmatprep.subr.mxu0 0.0
  %3069 = vmatpush1.msra.mxu0 0.0
  %3070 = vmatprep.subr.mxu0 0.0
  %3071 = vmatpush1.msra.mxu0 0.0
  %3072 = vmatprep.subr.mxu0 0.0
  %3073 = vmatpush1.msra.mxu0 0.0
  %3074 = vmatprep.subr.mxu0 0.0
  %3075 = vmatpush1.msra.mxu0 0.0
  %3076 = vmatprep.subr.mxu0 0.0
  %3077 = vmatpush1.msra.mxu0 0.0
  %3078 = vmatprep.subr.mxu0 0.0
  %3079 = vmatpush1.msra.mxu0 0.0
  %3080 = vmatprep.subr.mxu0 0.0
  %3081 = vmatpush1.msra.mxu0 0.0
  %3082 = vmatprep.subr.mxu0 0.0
  %3083 = vmatpush1.msra.mxu0 0.0
  %3084 = vmatprep.subr.mxu0 0.0
  %3085 = vmatpush1.msra.mxu0 0.0
  %3086 = vmatprep.subr.mxu0 0.0
  %3087 = vmatpush1.msra.mxu0 0.0
  %3088 = vmatprep.subr.mxu0 0.0
  %3089 = vmatpush1.msra.mxu0 0.0
  %3090 = vmatprep.subr.mxu0 0.0
  %3091 = vmatpush1.msra.mxu0 0.0
  %3092 = vmatprep.subr.mxu0 0.0
  %3093 = vmatpush1.msra.mxu0 0.0
  %3094 = vmatprep.subr.mxu0 0.0
  %3095 = vmatpush1.msra.mxu0 0.0
  %3096 = vmatprep.subr.mxu0 0.0
  %3097 = vmatpush1.msra.mxu0 0.0
  %3098 = vmatprep.subr.mxu0 0.0
  %3099 = vmatpush1.msra.mxu0 0.0
  %3100 = vmatprep.subr.mxu0 0.0
  %3101 = vmatpush1.msra.mxu0 0.0
  %3102 = vmatprep.subr.mxu0 0.0
  %3103 = vmatpush1.msra.mxu0 0.0
  %3104 = vmatprep.subr.mxu0 0.0
  %3105 = vmatpush1.msra.mxu0 0.0
  %3106 = vmatprep.subr.mxu0 0.0
  %3107 = vmatpush1.msra.mxu0 0.0
  %3108 = vmatprep.subr.mxu0 0.0
  %3109 = vmatpush1.msra.mxu0 0.0
  %3110 = vmatprep.subr.mxu0 0.0
  %3111 = vmatpush1.msra.mxu0 0.0
  %3112 = vmatprep.subr.mxu0 0.0
  %3113 = vmatpush1.msra.mxu0 0.0
  %3114 = vmatprep.mubr.f32.mxu0 0.0
  %3115 = vmatmul.mubr.f32.gmra.mrb[0].mxu0 %v3048
  %v3116 = vpop.f32.mrb[0].mxu0
  %v3117 = vadd.f32 0.0, %v3116
  %v3118 = vpop.f32.mrb[0].mxu0
  %3119 = vdwg.mxu0
  %3120 = vmatprep.subr.mxu0 0.0
  %3121 = vmatpush1.msra.mxu0 %v2353
  %3122 = vmatprep.subr.mxu0 0.0
  %3123 = vmatpush1.msra.mxu0 %v2354
  %3124 = vmatprep.subr.mxu0 0.0
  %3125 = vmatpush1.msra.mxu0 %v2355
  %3126 = vmatprep.subr.mxu0 0.0
  %3127 = vmatpush1.msra.mxu0 %v2356
  %3128 = vmatprep.subr.mxu0 0.0
  %3129 = vmatpush1.msra.mxu0 0.0
  %3130 = vmatprep.subr.mxu0 0.0
  %3131 = vmatpush1.msra.mxu0 0.0
  %3132 = vmatprep.subr.mxu0 0.0
  %3133 = vmatpush1.msra.mxu0 0.0
  %3134 = vmatprep.subr.mxu0 0.0
  %3135 = vmatpush1.msra.mxu0 0.0
  %3136 = vmatprep.subr.mxu0 0.0
  %3137 = vmatpush1.msra.mxu0 0.0
  %3138 = vmatprep.subr.mxu0 0.0
  %3139 = vmatpush1.msra.mxu0 0.0
  %3140 = vmatprep.subr.mxu0 0.0
  %3141 = vmatpush1.msra.mxu0 0.0
  %3142 = vmatprep.subr.mxu0 0.0
  %3143 = vmatpush1.msra.mxu0 0.0
  %3144 = vmatprep.subr.mxu0 0.0
  %3145 = vmatpush1.msra.mxu0 0.0
  %3146 = vmatprep.subr.mxu0 0.0
  %3147 = vmatpush1.msra.mxu0 0.0
  %3148 = vmatprep.subr.mxu0 0.0
  %3149 = vmatpush1.msra.mxu0 0.0
  %3150 = vmatprep.subr.mxu0 0.0
  %3151 = vmatpush1.msra.mxu0 0.0
  %3152 = vmatprep.subr.mxu0 0.0
  %3153 = vmatpush1.msra.mxu0 0.0
  %3154 = vmatprep.subr.mxu0 0.0
  %3155 = vmatpush1.msra.mxu0 0.0
  %3156 = vmatprep.subr.mxu0 0.0
  %3157 = vmatpush1.msra.mxu0 0.0
  %3158 = vmatprep.subr.mxu0 0.0
  %3159 = vmatpush1.msra.mxu0 0.0
  %3160 = vmatprep.subr.mxu0 0.0
  %3161 = vmatpush1.msra.mxu0 0.0
  %3162 = vmatprep.subr.mxu0 0.0
  %3163 = vmatpush1.msra.mxu0 0.0
  %3164 = vmatprep.subr.mxu0 0.0
  %3165 = vmatpush1.msra.mxu0 0.0
  %3166 = vmatprep.subr.mxu0 0.0
  %3167 = vmatpush1.msra.mxu0 0.0
  %3168 = vmatprep.subr.mxu0 0.0
  %3169 = vmatpush1.msra.mxu0 0.0
  %3170 = vmatprep.subr.mxu0 0.0
  %3171 = vmatpush1.msra.mxu0 0.0
  %3172 = vmatprep.subr.mxu0 0.0
  %3173 = vmatpush1.msra.mxu0 0.0
  %3174 = vmatprep.subr.mxu0 0.0
  %3175 = vmatpush1.msra.mxu0 0.0
  %3176 = vmatprep.subr.mxu0 0.0
  %3177 = vmatpush1.msra.mxu0 0.0
  %3178 = vmatprep.subr.mxu0 0.0
  %3179 = vmatpush1.msra.mxu0 0.0
  %3180 = vmatprep.subr.mxu0 0.0
  %3181 = vmatpush1.msra.mxu0 0.0
  %3182 = vmatprep.subr.mxu0 0.0
  %3183 = vmatpush1.msra.mxu0 0.0
  %3184 = vmatprep.mubr.f32.mxu0 0.0
  %3185 = vmatmul.mubr.f32.gmra.mrb[0].mxu0 %v1840
  %v3186 = vpop.f32.mrb[0].mxu0
  %v3187 = vadd.f32 %v3117, %v3186
  %v3188 = vpop.f32.mrb[0].mxu0
  %3189 = vdwg.mxu0
  %v3190 = vadd.f32 %v3187, %v2368
  %v3191 = vxor.u32 %v3190, 2147483648
  %v3192 = vmul.f32 %v3191, 1.442695
  %v3193 = vpow.pop %v3192
  %v3194 = vadd.f32 %v3193, 1.0
  %v3195 = vrcp.pop %v3194
  %v3196 = vmul.f32 1.0, %v3195
  %v3197 = vtanh.pop %v3190
  %v3198 = vmul.f32 %v3196, %v3038
  %3200 = vrot.lane.b32.xlu0 %v3197, 64
  %v3201 = vpop.permute.xlu0 %3200
  %v3203 = vmul.f32 %v3196, %v3201
  %3205 = vrot.lane.b32.xlu0 %v3203, 32
  %v3206 = vpop.permute.xlu0 %3205
  %v3208 = vadd.f32 %v3198, %v3206
  %v3209 = vtanh.pop %v3208
  %3211 = vrot.lane.b32.xlu0 %v3209, 64
  %v3212 = vpop.permute.xlu0 %3211
  %v3214 = vmul.f32 %v3196, %v3212
  %3216 = vrot.lane.b32.xlu0 %v3214, 32
  %v3217 = vpop.permute.xlu0 %3216
  %v3218 = vsel %vm42, %v3217, 0
  %3220 = vmatprep.subr.mxu0 0.0
  %3221 = vmatpush1.msra.mxu0 %v2358
  %3222 = vmatprep.subr.mxu0 0.0
  %3223 = vmatpush1.msra.mxu0 %v2359
  %3224 = vmatprep.subr.mxu0 0.0
  %3225 = vmatpush1.msra.mxu0 %v2360
  %3226 = vmatprep.subr.mxu0 0.0
  %3227 = vmatpush1.msra.mxu0 %v2361
  %3228 = vmatprep.subr.mxu0 0.0
  %3229 = vmatpush1.msra.mxu0 0.0
  %3230 = vmatprep.subr.mxu0 0.0
  %3231 = vmatpush1.msra.mxu0 0.0
  %3232 = vmatprep.subr.mxu0 0.0
  %3233 = vmatpush1.msra.mxu0 0.0
  %3234 = vmatprep.subr.mxu0 0.0
  %3235 = vmatpush1.msra.mxu0 0.0
  %3236 = vmatprep.subr.mxu0 0.0
  %3237 = vmatpush1.msra.mxu0 0.0
  %3238 = vmatprep.subr.mxu0 0.0
  %3239 = vmatpush1.msra.mxu0 0.0
  %3240 = vmatprep.subr.mxu0 0.0
  %3241 = vmatpush1.msra.mxu0 0.0
  %3242 = vmatprep.subr.mxu0 0.0
  %3243 = vmatpush1.msra.mxu0 0.0
  %3244 = vmatprep.subr.mxu0 0.0
  %3245 = vmatpush1.msra.mxu0 0.0
  %3246 = vmatprep.subr.mxu0 0.0
  %3247 = vmatpush1.msra.mxu0 0.0
  %3248 = vmatprep.subr.mxu0 0.0
  %3249 = vmatpush1.msra.mxu0 0.0
  %3250 = vmatprep.subr.mxu0 0.0
  %3251 = vmatpush1.msra.mxu0 0.0
  %3252 = vmatprep.subr.mxu0 0.0
  %3253 = vmatpush1.msra.mxu0 0.0
  %3254 = vmatprep.subr.mxu0 0.0
  %3255 = vmatpush1.msra.mxu0 0.0
  %3256 = vmatprep.subr.mxu0 0.0
  %3257 = vmatpush1.msra.mxu0 0.0
  %3258 = vmatprep.subr.mxu0 0.0
  %3259 = vmatpush1.msra.mxu0 0.0
  %3260 = vmatprep.subr.mxu0 0.0
  %3261 = vmatpush1.msra.mxu0 0.0
  %3262 = vmatprep.subr.mxu0 0.0
  %3263 = vmatpush1.msra.mxu0 0.0
  %3264 = vmatprep.subr.mxu0 0.0
  %3265 = vmatpush1.msra.mxu0 0.0
  %3266 = vmatprep.subr.mxu0 0.0
  %3267 = vmatpush1.msra.mxu0 0.0
  %3268 = vmatprep.subr.mxu0 0.0
  %3269 = vmatpush1.msra.mxu0 0.0
  %3270 = vmatprep.subr.mxu0 0.0
  %3271 = vmatpush1.msra.mxu0 0.0
  %3272 = vmatprep.subr.mxu0 0.0
  %3273 = vmatpush1.msra.mxu0 0.0
  %3274 = vmatprep.subr.mxu0 0.0
  %3275 = vmatpush1.msra.mxu0 0.0
  %3276 = vmatprep.subr.mxu0 0.0
  %3277 = vmatpush1.msra.mxu0 0.0
  %3278 = vmatprep.subr.mxu0 0.0
  %3279 = vmatpush1.msra.mxu0 0.0
  %3280 = vmatprep.subr.mxu0 0.0
  %3281 = vmatpush1.msra.mxu0 0.0
  %3282 = vmatprep.subr.mxu0 0.0
  %3283 = vmatpush1.msra.mxu0 0.0
  %3284 = vmatprep.mubr.f32.mxu0 0.0
  %3285 = vmatmul.mubr.f32.gmra.mrb[0].mxu0 %v3218
  %v3286 = vpop.f32.mrb[0].mxu0
  %v3287 = vadd.f32 0.0, %v3286
  %v3288 = vpop.f32.mrb[0].mxu0
  %3289 = vdwg.mxu0
  %3290 = vmatprep.subr.mxu0 0.0
  %3291 = vmatpush1.msra.mxu0 %v2353
  %3292 = vmatprep.subr.mxu0 0.0
  %3293 = vmatpush1.msra.mxu0 %v2354
  %3294 = vmatprep.subr.mxu0 0.0
  %3295 = vmatpush1.msra.mxu0 %v2355
  %3296 = vmatprep.subr.mxu0 0.0
  %3297 = vmatpush1.msra.mxu0 %v2356
  %3298 = vmatprep.subr.mxu0 0.0
  %3299 = vmatpush1.msra.mxu0 0.0
  %3300 = vmatprep.subr.mxu0 0.0
  %3301 = vmatpush1.msra.mxu0 0.0
  %3302 = vmatprep.subr.mxu0 0.0
  %3303 = vmatpush1.msra.mxu0 0.0
  %3304 = vmatprep.subr.mxu0 0.0
  %3305 = vmatpush1.msra.mxu0 0.0
  %3306 = vmatprep.subr.mxu0 0.0
  %3307 = vmatpush1.msra.mxu0 0.0
  %3308 = vmatprep.subr.mxu0 0.0
  %3309 = vmatpush1.msra.mxu0 0.0
  %3310 = vmatprep.subr.mxu0 0.0
  %3311 = vmatpush1.msra.mxu0 0.0
  %3312 = vmatprep.subr.mxu0 0.0
  %3313 = vmatpush1.msra.mxu0 0.0
  %3314 = vmatprep.subr.mxu0 0.0
  %3315 = vmatpush1.msra.mxu0 0.0
  %3316 = vmatprep.subr.mxu0 0.0
  %3317 = vmatpush1.msra.mxu0 0.0
  %3318 = vmatprep.subr.mxu0 0.0
  %3319 = vmatpush1.msra.mxu0 0.0
  %3320 = vmatprep.subr.mxu0 0.0
  %3321 = vmatpush1.msra.mxu0 0.0
  %3322 = vmatprep.subr.mxu0 0.0
  %3323 = vmatpush1.msra.mxu0 0.0
  %3324 = vmatprep.subr.mxu0 0.0
  %3325 = vmatpush1.msra.mxu0 0.0
  %3326 = vmatprep.subr.mxu0 0.0
  %3327 = vmatpush1.msra.mxu0 0.0
  %3328 = vmatprep.subr.mxu0 0.0
  %3329 = vmatpush1.msra.mxu0 0.0
  %3330 = vmatprep.subr.mxu0 0.0
  %3331 = vmatpush1.msra.mxu0 0.0
  %3332 = vmatprep.subr.mxu0 0.0
  %3333 = vmatpush1.msra.mxu0 0.0
  %3334 = vmatprep.subr.mxu0 0.0
  %3335 = vmatpush1.msra.mxu0 0.0
  %3336 = vmatprep.subr.mxu0 0.0
  %3337 = vmatpush1.msra.mxu0 0.0
  %3338 = vmatprep.subr.mxu0 0.0
  %3339 = vmatpush1.msra.mxu0 0.0
  %3340 = vmatprep.subr.mxu0 0.0
  %3341 = vmatpush1.msra.mxu0 0.0
  %3342 = vmatprep.subr.mxu0 0.0
  %3343 = vmatpush1.msra.mxu0 0.0
  %3344 = vmatprep.subr.mxu0 0.0
  %3345 = vmatpush1.msra.mxu0 0.0
  %3346 = vmatprep.subr.mxu0 0.0
  %3347 = vmatpush1.msra.mxu0 0.0
  %3348 = vmatprep.subr.mxu0 0.0
  %3349 = vmatpush1.msra.mxu0 0.0
  %3350 = vmatprep.subr.mxu0 0.0
  %3351 = vmatpush1.msra.mxu0 0.0
  %3352 = vmatprep.subr.mxu0 0.0
  %3353 = vmatpush1.msra.mxu0 0.0
  %3354 = vmatprep.mubr.f32.mxu0 0.0
  %3355 = vmatmul.mubr.f32.gmra.mrb[0].mxu0 %v2010
  %v3356 = vpop.f32.mrb[0].mxu0
  %v3357 = vadd.f32 %v3287, %v3356
  %v3358 = vpop.f32.mrb[0].mxu0
  %3359 = vdwg.mxu0
  %v3360 = vadd.f32 %v3357, %v2368
  %v3361 = vxor.u32 %v3360, 2147483648
  %v3362 = vmul.f32 %v3361, 1.442695
  %v3363 = vpow.pop %v3362
  %v3364 = vadd.f32 %v3363, 1.0
  %v3365 = vrcp.pop %v3364
  %v3366 = vmul.f32 1.0, %v3365
  %v3367 = vtanh.pop %v3360
  %v3368 = vmul.f32 %v3366, %v3208
  %3370 = vrot.lane.b32.xlu0 %v3367, 64
  %v3371 = vpop.permute.xlu0 %3370
  %v3373 = vmul.f32 %v3366, %v3371
  %3375 = vrot.lane.b32.xlu0 %v3373, 32
  %v3376 = vpop.permute.xlu0 %3375
  %v3378 = vadd.f32 %v3368, %v3376
  %v3379 = vtanh.pop %v3378
  %3381 = vrot.lane.b32.xlu0 %v3379, 64
  %v3382 = vpop.permute.xlu0 %3381
  %v3384 = vmul.f32 %v3366, %v3382
  %3386 = vrot.lane.b32.xlu0 %v3384, 32
  %v3387 = vpop.permute.xlu0 %3386
  %v3388 = vsel %vm42, %v3387, 0
  %3390 = vmatprep.subr.mxu0 0.0
  %3391 = vmatpush1.msra.mxu0 %v2358
  %3392 = vmatprep.subr.mxu0 0.0
  %3393 = vmatpush1.msra.mxu0 %v2359
  %3394 = vmatprep.subr.mxu0 0.0
  %3395 = vmatpush1.msra.mxu0 %v2360
  %3396 = vmatprep.subr.mxu0 0.0
  %3397 = vmatpush1.msra.mxu0 %v2361
  %3398 = vmatprep.subr.mxu0 0.0
  %3399 = vmatpush1.msra.mxu0 0.0
  %3400 = vmatprep.subr.mxu0 0.0
  %3401 = vmatpush1.msra.mxu0 0.0
  %3402 = vmatprep.subr.mxu0 0.0
  %3403 = vmatpush1.msra.mxu0 0.0
  %3404 = vmatprep.subr.mxu0 0.0
  %3405 = vmatpush1.msra.mxu0 0.0
  %3406 = vmatprep.subr.mxu0 0.0
  %3407 = vmatpush1.msra.mxu0 0.0
  %3408 = vmatprep.subr.mxu0 0.0
  %3409 = vmatpush1.msra.mxu0 0.0
  %3410 = vmatprep.subr.mxu0 0.0
  %3411 = vmatpush1.msra.mxu0 0.0
  %3412 = vmatprep.subr.mxu0 0.0
  %3413 = vmatpush1.msra.mxu0 0.0
  %3414 = vmatprep.subr.mxu0 0.0
  %3415 = vmatpush1.msra.mxu0 0.0
  %3416 = vmatprep.subr.mxu0 0.0
  %3417 = vmatpush1.msra.mxu0 0.0
  %3418 = vmatprep.subr.mxu0 0.0
  %3419 = vmatpush1.msra.mxu0 0.0
  %3420 = vmatprep.subr.mxu0 0.0
  %3421 = vmatpush1.msra.mxu0 0.0
  %3422 = vmatprep.subr.mxu0 0.0
  %3423 = vmatpush1.msra.mxu0 0.0
  %3424 = vmatprep.subr.mxu0 0.0
  %3425 = vmatpush1.msra.mxu0 0.0
  %3426 = vmatprep.subr.mxu0 0.0
  %3427 = vmatpush1.msra.mxu0 0.0
  %3428 = vmatprep.subr.mxu0 0.0
  %3429 = vmatpush1.msra.mxu0 0.0
  %3430 = vmatprep.subr.mxu0 0.0
  %3431 = vmatpush1.msra.mxu0 0.0
  %3432 = vmatprep.subr.mxu0 0.0
  %3433 = vmatpush1.msra.mxu0 0.0
  %3434 = vmatprep.subr.mxu0 0.0
  %3435 = vmatpush1.msra.mxu0 0.0
  %3436 = vmatprep.subr.mxu0 0.0
  %3437 = vmatpush1.msra.mxu0 0.0
  %3438 = vmatprep.subr.mxu0 0.0
  %3439 = vmatpush1.msra.mxu0 0.0
  %3440 = vmatprep.subr.mxu0 0.0
  %3441 = vmatpush1.msra.mxu0 0.0
  %3442 = vmatprep.subr.mxu0 0.0
  %3443 = vmatpush1.msra.mxu0 0.0
  %3444 = vmatprep.subr.mxu0 0.0
  %3445 = vmatpush1.msra.mxu0 0.0
  %3446 = vmatprep.subr.mxu0 0.0
  %3447 = vmatpush1.msra.mxu0 0.0
  %3448 = vmatprep.subr.mxu0 0.0
  %3449 = vmatpush1.msra.mxu0 0.0
  %3450 = vmatprep.subr.mxu0 0.0
  %3451 = vmatpush1.msra.mxu0 0.0
  %3452 = vmatprep.subr.mxu0 0.0
  %3453 = vmatpush1.msra.mxu0 0.0
  %3454 = vmatprep.mubr.f32.mxu0 0.0
  %3455 = vmatmul.mubr.f32.gmra.mrb[0].mxu0 %v3388
  %v3456 = vpop.f32.mrb[0].mxu0
  %v3457 = vadd.f32 0.0, %v3456
  %v3458 = vpop.f32.mrb[0].mxu0
  %3459 = vdwg.mxu0
  %3460 = vmatprep.subr.mxu0 0.0
  %3461 = vmatpush1.msra.mxu0 %v2353
  %3462 = vmatprep.subr.mxu0 0.0
  %3463 = vmatpush1.msra.mxu0 %v2354
  %3464 = vmatprep.subr.mxu0 0.0
  %3465 = vmatpush1.msra.mxu0 %v2355
  %3466 = vmatprep.subr.mxu0 0.0
  %3467 = vmatpush1.msra.mxu0 %v2356
  %3468 = vmatprep.subr.mxu0 0.0
  %3469 = vmatpush1.msra.mxu0 0.0
  %3470 = vmatprep.subr.mxu0 0.0
  %3471 = vmatpush1.msra.mxu0 0.0
  %3472 = vmatprep.subr.mxu0 0.0
  %3473 = vmatpush1.msra.mxu0 0.0
  %3474 = vmatprep.subr.mxu0 0.0
  %3475 = vmatpush1.msra.mxu0 0.0
  %3476 = vmatprep.subr.mxu0 0.0
  %3477 = vmatpush1.msra.mxu0 0.0
  %3478 = vmatprep.subr.mxu0 0.0
  %3479 = vmatpush1.msra.mxu0 0.0
  %3480 = vmatprep.subr.mxu0 0.0
  %3481 = vmatpush1.msra.mxu0 0.0
  %3482 = vmatprep.subr.mxu0 0.0
  %3483 = vmatpush1.msra.mxu0 0.0
  %3484 = vmatprep.subr.mxu0 0.0
  %3485 = vmatpush1.msra.mxu0 0.0
  %3486 = vmatprep.subr.mxu0 0.0
  %3487 = vmatpush1.msra.mxu0 0.0
  %3488 = vmatprep.subr.mxu0 0.0
  %3489 = vmatpush1.msra.mxu0 0.0
  %3490 = vmatprep.subr.mxu0 0.0
  %3491 = vmatpush1.msra.mxu0 0.0
  %3492 = vmatprep.subr.mxu0 0.0
  %3493 = vmatpush1.msra.mxu0 0.0
  %3494 = vmatprep.subr.mxu0 0.0
  %3495 = vmatpush1.msra.mxu0 0.0
  %3496 = vmatprep.subr.mxu0 0.0
  %3497 = vmatpush1.msra.mxu0 0.0
  %3498 = vmatprep.subr.mxu0 0.0
  %3499 = vmatpush1.msra.mxu0 0.0
  %3500 = vmatprep.subr.mxu0 0.0
  %3501 = vmatpush1.msra.mxu0 0.0
  %3502 = vmatprep.subr.mxu0 0.0
  %3503 = vmatpush1.msra.mxu0 0.0
  %3504 = vmatprep.subr.mxu0 0.0
  %3505 = vmatpush1.msra.mxu0 0.0
  %3506 = vmatprep.subr.mxu0 0.0
  %3507 = vmatpush1.msra.mxu0 0.0
  %3508 = vmatprep.subr.mxu0 0.0
  %3509 = vmatpush1.msra.mxu0 0.0
  %3510 = vmatprep.subr.mxu0 0.0
  %3511 = vmatpush1.msra.mxu0 0.0
  %3512 = vmatprep.subr.mxu0 0.0
  %3513 = vmatpush1.msra.mxu0 0.0
  %3514 = vmatprep.subr.mxu0 0.0
  %3515 = vmatpush1.msra.mxu0 0.0
  %3516 = vmatprep.subr.mxu0 0.0
  %3517 = vmatpush1.msra.mxu0 0.0
  %3518 = vmatprep.subr.mxu0 0.0
  %3519 = vmatpush1.msra.mxu0 0.0
  %3520 = vmatprep.subr.mxu0 0.0
  %3521 = vmatpush1.msra.mxu0 0.0
  %3522 = vmatprep.subr.mxu0 0.0
  %3523 = vmatpush1.msra.mxu0 0.0
  %3524 = vmatprep.mubr.f32.mxu0 0.0
  %3525 = vmatmul.mubr.f32.gmra.mrb[0].mxu0 %v2180
  %v3526 = vpop.f32.mrb[0].mxu0
  %v3527 = vadd.f32 %v3457, %v3526
  %v3528 = vpop.f32.mrb[0].mxu0
  %3529 = vdwg.mxu0
  %v3530 = vadd.f32 %v3527, %v2368
  %v3531 = vxor.u32 %v3530, 2147483648
  %v3532 = vmul.f32 %v3531, 1.442695
  %v3533 = vpow.pop %v3532
  %v3534 = vadd.f32 %v3533, 1.0
  %v3535 = vrcp.pop %v3534
  %v3536 = vmul.f32 1.0, %v3535
  %v3537 = vtanh.pop %v3530
  %v3538 = vmul.f32 %v3536, %v3378
  %3540 = vrot.lane.b32.xlu0 %v3537, 64
  %v3541 = vpop.permute.xlu0 %3540
  %v3543 = vmul.f32 %v3536, %v3541
  %3545 = vrot.lane.b32.xlu0 %v3543, 32
  %v3546 = vpop.permute.xlu0 %3545
  %v3548 = vadd.f32 %v3538, %v3546
  %v3549 = vtanh.pop %v3548
  %3551 = vrot.lane.b32.xlu0 %v3549, 64
  %v3552 = vpop.permute.xlu0 %3551
  %v3554 = vmul.f32 %v3536, %v3552
  %3556 = vrot.lane.b32.xlu0 %v3554, 32
  %v3557 = vpop.permute.xlu0 %3556
  %v3558 = vsel %vm42, %v3557, 0
  %3560 = vmatprep.subr.mxu0 0.0
  %3561 = vmatpush1.msra.mxu0 %v2358
  %3562 = vmatprep.subr.mxu0 0.0
  %3563 = vmatpush1.msra.mxu0 %v2359
  %3564 = vmatprep.subr.mxu0 0.0
  %3565 = vmatpush1.msra.mxu0 %v2360
  %3566 = vmatprep.subr.mxu0 0.0
  %3567 = vmatpush1.msra.mxu0 %v2361
  %3568 = vmatprep.subr.mxu0 0.0
  %3569 = vmatpush1.msra.mxu0 0.0
  %3570 = vmatprep.subr.mxu0 0.0
  %3571 = vmatpush1.msra.mxu0 0.0
  %3572 = vmatprep.subr.mxu0 0.0
  %3573 = vmatpush1.msra.mxu0 0.0
  %3574 = vmatprep.subr.mxu0 0.0
  %3575 = vmatpush1.msra.mxu0 0.0
  %3576 = vmatprep.subr.mxu0 0.0
  %3577 = vmatpush1.msra.mxu0 0.0
  %3578 = vmatprep.subr.mxu0 0.0
  %3579 = vmatpush1.msra.mxu0 0.0
  %3580 = vmatprep.subr.mxu0 0.0
  %3581 = vmatpush1.msra.mxu0 0.0
  %3582 = vmatprep.subr.mxu0 0.0
  %3583 = vmatpush1.msra.mxu0 0.0
  %3584 = vmatprep.subr.mxu0 0.0
  %3585 = vmatpush1.msra.mxu0 0.0
  %3586 = vmatprep.subr.mxu0 0.0
  %3587 = vmatpush1.msra.mxu0 0.0
  %3588 = vmatprep.subr.mxu0 0.0
  %3589 = vmatpush1.msra.mxu0 0.0
  %3590 = vmatprep.subr.mxu0 0.0
  %3591 = vmatpush1.msra.mxu0 0.0
  %3592 = vmatprep.subr.mxu0 0.0
  %3593 = vmatpush1.msra.mxu0 0.0
  %3594 = vmatprep.subr.mxu0 0.0
  %3595 = vmatpush1.msra.mxu0 0.0
  %3596 = vmatprep.subr.mxu0 0.0
  %3597 = vmatpush1.msra.mxu0 0.0
  %3598 = vmatprep.subr.mxu0 0.0
  %3599 = vmatpush1.msra.mxu0 0.0
  %3600 = vmatprep.subr.mxu0 0.0
  %3601 = vmatpush1.msra.mxu0 0.0
  %3602 = vmatprep.subr.mxu0 0.0
  %3603 = vmatpush1.msra.mxu0 0.0
  %3604 = vmatprep.subr.mxu0 0.0
  %3605 = vmatpush1.msra.mxu0 0.0
  %3606 = vmatprep.subr.mxu0 0.0
  %3607 = vmatpush1.msra.mxu0 0.0
  %3608 = vmatprep.subr.mxu0 0.0
  %3609 = vmatpush1.msra.mxu0 0.0
  %3610 = vmatprep.subr.mxu0 0.0
  %3611 = vmatpush1.msra.mxu0 0.0
  %3612 = vmatprep.subr.mxu0 0.0
  %3613 = vmatpush1.msra.mxu0 0.0
  %3614 = vmatprep.subr.mxu0 0.0
  %3615 = vmatpush1.msra.mxu0 0.0
  %3616 = vmatprep.subr.mxu0 0.0
  %3617 = vmatpush1.msra.mxu0 0.0
  %3618 = vmatprep.subr.mxu0 0.0
  %3619 = vmatpush1.msra.mxu0 0.0
  %3620 = vmatprep.subr.mxu0 0.0
  %3621 = vmatpush1.msra.mxu0 0.0
  %3622 = vmatprep.subr.mxu0 0.0
  %3623 = vmatpush1.msra.mxu0 0.0
  %3624 = vmatprep.mubr.f32.mxu0 0.0
  %3625 = vmatmul.mubr.f32.gmra.mrb[0].mxu0 %v3558
  %v3626 = vpop.f32.mrb[0].mxu0
  %v3627 = vadd.f32 0.0, %v3626
  %v3628 = vpop.f32.mrb[0].mxu0
  %3629 = vdwg.mxu0
  %3631 = vrot.lane.b32.xlu0 %v2351, 32
  %v3632 = vpop.permute.xlu0 %3631
  %v3633 = vsel %vm42, %v3632, 0
  %3635 = vmatprep.subr.mxu0 0.0
  %3636 = vmatpush1.msra.mxu0 %v2353
  %3637 = vmatprep.subr.mxu0 0.0
  %3638 = vmatpush1.msra.mxu0 %v2354
  %3639 = vmatprep.subr.mxu0 0.0
  %3640 = vmatpush1.msra.mxu0 %v2355
  %3641 = vmatprep.subr.mxu0 0.0
  %3642 = vmatpush1.msra.mxu0 %v2356
  %3643 = vmatprep.subr.mxu0 0.0
  %3644 = vmatpush1.msra.mxu0 0.0
  %3645 = vmatprep.subr.mxu0 0.0
  %3646 = vmatpush1.msra.mxu0 0.0
  %3647 = vmatprep.subr.mxu0 0.0
  %3648 = vmatpush1.msra.mxu0 0.0
  %3649 = vmatprep.subr.mxu0 0.0
  %3650 = vmatpush1.msra.mxu0 0.0
  %3651 = vmatprep.subr.mxu0 0.0
  %3652 = vmatpush1.msra.mxu0 0.0
  %3653 = vmatprep.subr.mxu0 0.0
  %3654 = vmatpush1.msra.mxu0 0.0
  %3655 = vmatprep.subr.mxu0 0.0
  %3656 = vmatpush1.msra.mxu0 0.0
  %3657 = vmatprep.subr.mxu0 0.0
  %3658 = vmatpush1.msra.mxu0 0.0
  %3659 = vmatprep.subr.mxu0 0.0
  %3660 = vmatpush1.msra.mxu0 0.0
  %3661 = vmatprep.subr.mxu0 0.0
  %3662 = vmatpush1.msra.mxu0 0.0
  %3663 = vmatprep.subr.mxu0 0.0
  %3664 = vmatpush1.msra.mxu0 0.0
  %3665 = vmatprep.subr.mxu0 0.0
  %3666 = vmatpush1.msra.mxu0 0.0
  %3667 = vmatprep.subr.mxu0 0.0
  %3668 = vmatpush1.msra.mxu0 0.0
  %3669 = vmatprep.subr.mxu0 0.0
  %3670 = vmatpush1.msra.mxu0 0.0
  %3671 = vmatprep.subr.mxu0 0.0
  %3672 = vmatpush1.msra.mxu0 0.0
  %3673 = vmatprep.subr.mxu0 0.0
  %3674 = vmatpush1.msra.mxu0 0.0
  %3675 = vmatprep.subr.mxu0 0.0
  %3676 = vmatpush1.msra.mxu0 0.0
  %3677 = vmatprep.subr.mxu0 0.0
  %3678 = vmatpush1.msra.mxu0 0.0
  %3679 = vmatprep.subr.mxu0 0.0
  %3680 = vmatpush1.msra.mxu0 0.0
  %3681 = vmatprep.subr.mxu0 0.0
  %3682 = vmatpush1.msra.mxu0 0.0
  %3683 = vmatprep.subr.mxu0 0.0
  %3684 = vmatpush1.msra.mxu0 0.0
  %3685 = vmatprep.subr.mxu0 0.0
  %3686 = vmatpush1.msra.mxu0 0.0
  %3687 = vmatprep.subr.mxu0 0.0
  %3688 = vmatpush1.msra.mxu0 0.0
  %3689 = vmatprep.subr.mxu0 0.0
  %3690 = vmatpush1.msra.mxu0 0.0
  %3691 = vmatprep.subr.mxu0 0.0
  %3692 = vmatpush1.msra.mxu0 0.0
  %3693 = vmatprep.subr.mxu0 0.0
  %3694 = vmatpush1.msra.mxu0 0.0
  %3695 = vmatprep.subr.mxu0 0.0
  %3696 = vmatpush1.msra.mxu0 0.0
  %3697 = vmatprep.subr.mxu0 0.0
  %3698 = vmatpush1.msra.mxu0 0.0
  %3699 = vmatprep.mubr.f32.mxu0 0.0
  %3700 = vmatmul.mubr.f32.gmra.mrb[0].mxu0 %v3633
  %v3701 = vpop.f32.mrb[0].mxu0
  %v3702 = vadd.f32 %v3627, %v3701
  %v3703 = vpop.f32.mrb[0].mxu0
  %3704 = vdwg.mxu0
  %v3705 = vadd.f32 %v3702, %v2368
  %v3706 = vxor.u32 %v3705, 2147483648
  %v3707 = vmul.f32 %v3706, 1.442695
  %v3708 = vpow.pop %v3707
  %v3709 = vadd.f32 %v3708, 1.0
  %v3710 = vrcp.pop %v3709
  %v3711 = vmul.f32 1.0, %v3710
  %v3712 = vtanh.pop %v3705
  %v3713 = vmul.f32 %v3711, %v3548
  %3715 = vrot.lane.b32.xlu0 %v3712, 64
  %v3716 = vpop.permute.xlu0 %3715
  %v3718 = vmul.f32 %v3711, %v3716
  %3720 = vrot.lane.b32.xlu0 %v3718, 32
  %v3721 = vpop.permute.xlu0 %3720
  %v3723 = vadd.f32 %v3713, %v3721
  %v3724 = vtanh.pop %v3723
  %3726 = vrot.lane.b32.xlu0 %v3724, 64
  %v3727 = vpop.permute.xlu0 %3726
  %v3729 = vmul.f32 %v3711, %v3727
  %v3730 = vld [vmem:[%s4] sm:$0xff]
  %v3731 = vld [vmem:[%s4 + $0x8] sm:$0xff]
  %v3732 = vld [vmem:[%s4 + $0x10] sm:$0xff]
  %v3733 = vld [vmem:[%s4 + $0x18] sm:$0xff]
  %v3734 = vld [vmem:[%s5] sm:$0x1]
  %v3736 = vlaneseq
  %v3737 = vshrl.u32 %v3736, 7
  %v3738 = vsub.s32 0, %v3737
  %v3739 = vrot.slane %v3734, %v3738
  %3742 = vrot.lane.b32.xlu0 %v3729, 32
  %v3743 = vpop.permute.xlu0 %3742
  %v3744 = vsel %vm42, %v3743, 0
  %3746 = vmatprep.subr.mxu0 0.0
  %3747 = vmatpush1.msra.mxu0 %v3730
  %3748 = vmatprep.subr.mxu0 0.0
  %3749 = vmatpush1.msra.mxu0 %v3731
  %3750 = vmatprep.subr.mxu0 0.0
  %3751 = vmatpush1.msra.mxu0 %v3732
  %3752 = vmatprep.subr.mxu0 0.0
  %3753 = vmatpush1.msra.mxu0 %v3733
  %3754 = vmatprep.subr.mxu0 0.0
  %3755 = vmatpush1.msra.mxu0 0.0
  %3756 = vmatprep.subr.mxu0 0.0
  %3757 = vmatpush1.msra.mxu0 0.0
  %3758 = vmatprep.subr.mxu0 0.0
  %3759 = vmatpush1.msra.mxu0 0.0
  %3760 = vmatprep.subr.mxu0 0.0
  %3761 = vmatpush1.msra.mxu0 0.0
  %3762 = vmatprep.subr.mxu0 0.0
  %3763 = vmatpush1.msra.mxu0 0.0
  %3764 = vmatprep.subr.mxu0 0.0
  %3765 = vmatpush1.msra.mxu0 0.0
  %3766 = vmatprep.subr.mxu0 0.0
  %3767 = vmatpush1.msra.mxu0 0.0
  %3768 = vmatprep.subr.mxu0 0.0
  %3769 = vmatpush1.msra.mxu0 0.0
  %3770 = vmatprep.subr.mxu0 0.0
  %3771 = vmatpush1.msra.mxu0 0.0
  %3772 = vmatprep.subr.mxu0 0.0
  %3773 = vmatpush1.msra.mxu0 0.0
  %3774 = vmatprep.subr.mxu0 0.0
  %3775 = vmatpush1.msra.mxu0 0.0
  %3776 = vmatprep.subr.mxu0 0.0
  %3777 = vmatpush1.msra.mxu0 0.0
  %3778 = vmatprep.subr.mxu0 0.0
  %3779 = vmatpush1.msra.mxu0 0.0
  %3780 = vmatprep.subr.mxu0 0.0
  %3781 = vmatpush1.msra.mxu0 0.0
  %3782 = vmatprep.subr.mxu0 0.0
  %3783 = vmatpush1.msra.mxu0 0.0
  %3784 = vmatprep.subr.mxu0 0.0
  %3785 = vmatpush1.msra.mxu0 0.0
  %3786 = vmatprep.subr.mxu0 0.0
  %3787 = vmatpush1.msra.mxu0 0.0
  %3788 = vmatprep.subr.mxu0 0.0
  %3789 = vmatpush1.msra.mxu0 0.0
  %3790 = vmatprep.subr.mxu0 0.0
  %3791 = vmatpush1.msra.mxu0 0.0
  %3792 = vmatprep.subr.mxu0 0.0
  %3793 = vmatpush1.msra.mxu0 0.0
  %3794 = vmatprep.subr.mxu0 0.0
  %3795 = vmatpush1.msra.mxu0 0.0
  %3796 = vmatprep.subr.mxu0 0.0
  %3797 = vmatpush1.msra.mxu0 0.0
  %3798 = vmatprep.subr.mxu0 0.0
  %3799 = vmatpush1.msra.mxu0 0.0
  %3800 = vmatprep.subr.mxu0 0.0
  %3801 = vmatpush1.msra.mxu0 0.0
  %3802 = vmatprep.subr.mxu0 0.0
  %3803 = vmatpush1.msra.mxu0 0.0
  %3804 = vmatprep.subr.mxu0 0.0
  %3805 = vmatpush1.msra.mxu0 0.0
  %3806 = vmatprep.subr.mxu0 0.0
  %3807 = vmatpush1.msra.mxu0 0.0
  %3808 = vmatprep.subr.mxu0 0.0
  %3809 = vmatpush1.msra.mxu0 0.0
  %3810 = vmatprep.mubr.f32.mxu0 0.0
  %3811 = vmatmul.mubr.f32.gmra.mrb[0].mxu0 %v3744
  %v3812 = vpop.f32.mrb[0].mxu0
  %v3813 = vadd.f32 %v3739, %v3812
  %v3814 = vpop.f32.mrb[0].mxu0
  %3815 = vdwg.mxu0
  %3816 = vst [vmem:[%s6] sm:$0xff] %v3813
  // Predicated region
  $region26: #{lstm_forward.1} parent=0 // pred_check
    _
  $region27: #{lstm_forward.1} parent=0 // pred_check_branch
    %3818 = sbr.rel (0) target = $region29
  $region28: #{lstm_forward.1} parent=0 // pred_region
    _
  $region29: #{lstm_forward.1} parent=0 // pred_fallthru
    _
  // Predicated region
  $region30: #{lstm_forward.1} parent=0 // pred_check
    _
  $region31: #{lstm_forward.1} parent=0 // pred_check_branch
    %3820 = sbr.rel (0) target = $region33
  $region32: #{lstm_forward.1} parent=0 // pred_region
    _
  $region33: #{lstm_forward.1} parent=0 // pred_fallthru
    _

</llo_original>
